<compile_context>
chip_gen: v7x
topology: tpu7x:2x2x1
jax: 0.10.0
libtpu: 0.0.40
codegen_flags: <defaults>
</compile_context>

<pallas_src>
import functools
import math

import jax
import jax.numpy as jnp
from jax.experimental import pallas as pl
from jax.experimental.pallas import tpu as pltpu

# ---------------- model config (bert-tiny, small synthetic sizes) ----------------------
VOCAB = 64
HIDDEN = 128            # bert-tiny hidden size == LocalEncoder hidden_size default
NUM_LAYERS = 2
NUM_HEADS = 2
HEAD_DIM = HIDDEN // NUM_HEADS
INTERMEDIATE = 512
MAX_POS = 16
BATCH = 2
SEQ = 8
LN_EPS = 1e-12

HEAD_PAD = 128                              # each head's Q/K/V padded to a full lane tile
QKV_W = 3 * NUM_HEADS * HEAD_PAD            # 768 : fused padded QKV width (also pslab width)
NHP = NUM_HEADS * HEAD_PAD                  # 256 : padded, head-merged context width


# ---------------- fused encoder kernel (one grid step == whole / half batch) ------------

def _encoder_kernel(ids_ref, mask_ref, emb_ref, wa_ref, wb_ref, p_ref, o_ref,
                    *, seq_len, num_heads, num_layers):
    R = ids_ref.shape[1]                    # rows this step = (B / grid_steps) * S
    Bp = R // seq_len                       # batch elements handled this step
    H, I, P = HIDDEN, INTERMEDIATE, HEAD_PAD
    bf16, f32 = jnp.bfloat16, jnp.float32

    def layer_norm(v, g, b):                # f32 VPU/EUP math (v5e-safe)
        mu = jnp.mean(v, axis=-1, keepdims=True)
        var = jnp.mean((v - mu) ** 2, axis=-1, keepdims=True)
        return (v - mu) * jax.lax.rsqrt(var + LN_EPS) * g + b

    def gelu(v):
        # TODO(synk): HF BERT uses exact erf-GELU; tanh approximation is used here.
        return 0.5 * v * (1.0 + jnp.tanh(0.7978845608028654 * (v + 0.044715 * v * v * v)))

    # --- embeddings: one-hot token gather on the MXU, + pos/type, fused LN -------------
    ids = ids_ref[0]                                                        # [R, 1] int32
    onehot = jnp.where(
        jax.lax.broadcasted_iota(jnp.int32, (R, VOCAB), 1) == ids, 1.0, 0.0)
    x = jnp.dot(onehot, emb_ref[0:VOCAB, :], preferred_element_type=f32)    # [R, H]
    pos = emb_ref[VOCAB:VOCAB + seq_len, :]                                 # [S, H]
    x = (x + jnp.concatenate([pos] * Bp, axis=0)
         + emb_ref[VOCAB + MAX_POS:VOCAB + MAX_POS + 1, :])                 # + type row
    x = layer_norm(x,
                   emb_ref[VOCAB + MAX_POS + 1:VOCAB + MAX_POS + 2, :],
                   emb_ref[VOCAB + MAX_POS + 2:VOCAB + MAX_POS + 3, :])

    add_mask = mask_ref[0]                                                  # [nh*R, nh*R]

    for l in range(num_layers):             # 2 layers, statically unrolled
        # fused, head-padded Q|K|V projection (1/sqrt(d) pre-folded into Q columns)
        qkv = jnp.dot(x.astype(bf16), wa_ref[l, :, 0:QKV_W],
                      preferred_element_type=f32) + p_ref[l, 0:1, 0:QKV_W]  # [R, 768]
        qkv_bf = qkv.astype(bf16)

        def stack_heads(base):              # lane-aligned 128-wide slices, sublane concat
            return jnp.concatenate(
                [qkv_bf[:, (base + h) * P:(base + h + 1) * P] for h in range(num_heads)],
                axis=0)                                                     # [nh*R, 128]

        q_s = stack_heads(0)
        k_s = stack_heads(num_heads)
        v_s = stack_heads(2 * num_heads)

        # all heads + all batch elements in ONE score / PV matmul pair; cross-head,
        # cross-batch and padded-key attention are forbidden by the additive mask.
        s = jax.lax.dot_general(q_s, k_s, (((1,), (1,)), ((), ())),
                                preferred_element_type=f32) + add_mask      # [nh*R, nh*R]
        s = s - jnp.max(s, axis=-1, keepdims=True)
        pr = jnp.exp(s)
        pr = pr * pl.reciprocal(jnp.sum(pr, axis=-1, keepdims=True), approx=True)
        ctx = jnp.dot(pr.astype(bf16), v_s, preferred_element_type=f32)     # [nh*R, 128]

        # merge heads back along lanes (tile-aligned); head un-stack folded into padded Wo
        ctx_m = jnp.concatenate(
            [ctx[h * R:(h + 1) * R, :] for h in range(num_heads)], axis=1).astype(bf16)
        attn_out = jnp.dot(ctx_m, wb_ref[l, 0:NHP, :],
                           preferred_element_type=f32) + p_ref[l, 1:2, 0:H]
        x = layer_norm(x + attn_out, p_ref[l, 2:3, 0:H], p_ref[l, 3:4, 0:H])

        hmid = gelu(jnp.dot(x.astype(bf16), wa_ref[l, :, QKV_W:QKV_W + I],
                            preferred_element_type=f32) + p_ref[l, 4:5, 0:I])
        ffn = jnp.dot(hmid.astype(bf16), wb_ref[l, NHP:NHP + I, :],
                      preferred_element_type=f32) + p_ref[l, 5:6, 0:H]
        x = layer_norm(x + ffn, p_ref[l, 6:7, 0:H], p_ref[l, 7:8, 0:H])

    # CLS row (row 0) of each batch element handled by this grid step
    cls = jnp.concatenate([x[b * seq_len:b * seq_len + 1, :] for b in range(Bp)], axis=0)
    o_ref[0] = cls                                                          # [Bp, H]


# ---------------- parameters (deterministic synthetic init + kernel-side packing) -------

def init_params(key):
    keys = jax.random.split(key, 3 + NUM_LAYERS)

    def w(k, shape):
        return (0.02 * jax.random.normal(k, shape)).astype(jnp.float32)

    params = {
        "word_emb": w(keys[0], (VOCAB, HIDDEN)),
        "pos_emb": w(keys[1], (MAX_POS, HIDDEN)),
        "type_emb": w(keys[2], (2, HIDDEN)),
        "emb_ln_g": jnp.ones((HIDDEN,), jnp.float32),
        "emb_ln_b": jnp.zeros((HIDDEN,), jnp.float32),
        "layers": [],
    }
    for i in range(NUM_LAYERS):
        lk = jax.random.split(keys[3 + i], 6)
        params["layers"].append({
            "wq": w(lk[0], (HIDDEN, HIDDEN)), "bq": jnp.zeros((HIDDEN,), jnp.float32),
            "wk": w(lk[1], (HIDDEN, HIDDEN)), "bk": jnp.zeros((HIDDEN,), jnp.float32),
            "wv": w(lk[2], (HIDDEN, HIDDEN)), "bv": jnp.zeros((HIDDEN,), jnp.float32),
            "wo": w(lk[3], (HIDDEN, HIDDEN)), "bo": jnp.zeros((HIDDEN,), jnp.float32),
            "ln1_g": jnp.ones((HIDDEN,), jnp.float32), "ln1_b": jnp.zeros((HIDDEN,), jnp.float32),
            "w1": w(lk[4], (HIDDEN, INTERMEDIATE)), "b1": jnp.zeros((INTERMEDIATE,), jnp.float32),
            "w2": w(lk[5], (INTERMEDIATE, HIDDEN)), "b2": jnp.zeros((HIDDEN,), jnp.float32),
            "ln2_g": jnp.ones((HIDDEN,), jnp.float32), "ln2_b": jnp.zeros((HIDDEN,), jnp.float32),
        })
    return params


def prepare_params(p):
    """Pack everything into 4 arrays: emb slab, 2 bf16 weight slabs, 1 f32 bias/LN slab.

    Per-head Q/K/V columns (and the matching Wo rows) are zero-padded from 64 to 128
    lanes so every in-kernel slice / concat lands on a (8,128) tile boundary.
    1/sqrt(head_dim) is folded into the Q weights/bias.
    """
    scale = 1.0 / math.sqrt(HEAD_DIM)
    H, I, d, nh, P = HIDDEN, INTERMEDIATE, HEAD_DIM, NUM_HEADS, HEAD_PAD

    emb_slab = jnp.concatenate([
        p["word_emb"],                       # rows [0, VOCAB)
        p["pos_emb"],                        # rows [VOCAB, VOCAB+MAX_POS)
        p["type_emb"][0:1, :],               # token_type_ids == 0
        p["emb_ln_g"].reshape(1, H),
        p["emb_ln_b"].reshape(1, H),
    ], axis=0).astype(jnp.float32)

    def pad_cols_per_head(w, s=1.0):         # [H, H] -> [H, nh*P], head h at cols [h*P, h*P+d)
        return jnp.concatenate(
            [jnp.pad(w[:, h * d:(h + 1) * d] * s, ((0, 0), (0, P - d))) for h in range(nh)],
            axis=1)

    def pad_vec_per_head(b, s=1.0):          # [H] -> [nh*P]
        return jnp.concatenate(
            [jnp.pad(b[h * d:(h + 1) * d] * s, (0, P - d)) for h in range(nh)], axis=0)

    def row(v):                              # pad any bias/LN vector to slab width
        return jnp.pad(v, (0, QKV_W - v.shape[0])).reshape(1, QKV_W)

    wa, wb, ps = [], [], []
    for l in p["layers"]:
        wqkv_pad = jnp.concatenate([pad_cols_per_head(l["wq"], scale),
                                    pad_cols_per_head(l["wk"]),
                                    pad_cols_per_head(l["wv"])], axis=1)    # [H, 768]
        wa.append(jnp.concatenate([wqkv_pad, l["w1"]], axis=1))             # [H, 1280]

        wo_pad = jnp.concatenate(
            [jnp.pad(l["wo"][h * d:(h + 1) * d, :], ((0, P - d), (0, 0))) for h in range(nh)],
            axis=0)                                                         # [256, H]
        wb.append(jnp.concatenate([wo_pad, l["w2"]], axis=0))               # [768, H]

        bqkv_pad = jnp.concatenate([pad_vec_per_head(l["bq"], scale),
                                    pad_vec_per_head(l["bk"]),
                                    pad_vec_per_head(l["bv"])], axis=0)     # [768]
        ps.append(jnp.concatenate([
            row(bqkv_pad), row(l["bo"]), row(l["ln1_g"]), row(l["ln1_b"]),
            row(l["b1"]), row(l["b2"]), row(l["ln2_g"]), row(l["ln2_b"]),
        ], axis=0))                                                         # [8, 768]

    return {
        "emb_slab": emb_slab,                                   # [VOCAB+MAX_POS+3, H] f32
        "wA": jnp.stack(wa).astype(jnp.bfloat16),               # [L, H, 768+I]       bf16
        "wB": jnp.stack(wb).astype(jnp.bfloat16),               # [L, 256+I, H]       bf16
        "pslab": jnp.stack(ps).astype(jnp.float32),             # [L, 8, 768]         f32
    }


# ---------------- LocalEncoder forward (single fused pallas_call) -----------------------

def _grid_steps_for_device(batch):
    """v7x has 2 TensorCores per chip: keep a 2-way 'parallel' grid there; on
    single-TC v5e/v6e collapse to one step (a serial grid is pure overhead)."""
    try:
        kind = jax.devices()[0].device_kind.lower()
    except Exception:
        return 1
    if ("v7" in kind or "tpu7" in kind) and batch % 2 == 0:
        return 2
    return 1


@functools.partial(jax.jit, static_argnames=("grid_steps",))
def local_encoder_forward(ep, input_ids, attention_mask, grid_steps=1):
    B, S = input_ids.shape
    G = grid_steps
    assert B % G == 0
    Bp = B // G                      # batch elements per grid step
    R = Bp * S                       # flattened rows per grid step
    RH = NUM_HEADS * R               # head-stacked rows
    H, L = HIDDEN, NUM_LAYERS

    ids = input_ids.astype(jnp.int32).reshape(G, R, 1)

    # additive mask over head-stacked rows: forbid cross-head, cross-batch and
    # attention to padded key positions (block-diagonal structure + key padding).
    rows = jnp.arange(RH)
    head_i = rows // R
    bloc_i = (rows % R) // S
    seq_i = (rows % R) % S
    allowed = (head_i[:, None] == head_i[None, :]) & (bloc_i[:, None] == bloc_i[None, :])
    am = attention_mask.astype(jnp.float32).reshape(G, Bp, S)
    key_valid = am[:, bloc_i, seq_i] > 0.5                                  # [G, RH]
    add_mask = jnp.where(allowed[None, :, :] & key_valid[:, None, :],
                         0.0, -1e9).astype(jnp.float32)                     # [G, RH, RH]

    kernel = functools.partial(_encoder_kernel, seq_len=S,
                               num_heads=NUM_HEADS, num_layers=L)

    in_specs = [
        pl.BlockSpec((1, R, 1), lambda g: (g, 0, 0)),        # token ids (per step)
        pl.BlockSpec((1, RH, RH), lambda g: (g, 0, 0)),      # additive attention mask
        pl.BlockSpec(ep["emb_slab"].shape, lambda g: (0, 0)),    # embedding slab
        pl.BlockSpec(ep["wA"].shape, lambda g: (0, 0, 0)),       # wqkv|w1 bf16 slab
        pl.BlockSpec(ep["wB"].shape, lambda g: (0, 0, 0)),       # wo|w2   bf16 slab
        pl.BlockSpec(ep["pslab"].shape, lambda g: (0, 0, 0)),    # bias/LN f32 slab
    ]

    cls = pl.pallas_call(
        kernel,
        out_shape=jax.ShapeDtypeStruct((G, Bp, H), jnp.float32),
        grid=(G,),
        in_specs=in_specs,
        out_specs=pl.BlockSpec((1, Bp, H), lambda g: (g, 0, 0)),
        compiler_params=pltpu.CompilerParams(dimension_semantics=("parallel",)),
    )(ids, add_mask, ep["emb_slab"], ep["wA"], ep["wB"], ep["pslab"])
    return cls.reshape(B, H)                                  # h_i: [B, HIDDEN]


# ---------------- pure-JAX reference (same packed params, f32 math) ----------------------

def reference_forward(ep, input_ids, attention_mask):
    B, S = input_ids.shape
    H, d, nh, P, I = HIDDEN, HEAD_DIM, NUM_HEADS, HEAD_PAD, INTERMEDIATE

    def layer_norm(v, g, b):
        mu = jnp.mean(v, axis=-1, keepdims=True)
        var = jnp.mean((v - mu) ** 2, axis=-1, keepdims=True)
        return (v - mu) * jax.lax.rsqrt(var + LN_EPS) * g + b

    def gelu(v):
        return 0.5 * v * (1.0 + jnp.tanh(0.7978845608028654 * (v + 0.044715 * v ** 3)))

    emb = ep["emb_slab"]
    word, pos = emb[:VOCAB], emb[VOCAB:VOCAB + MAX_POS]
    type_row = emb[VOCAB + MAX_POS]
    eg, eb = emb[VOCAB + MAX_POS + 1], emb[VOCAB + MAX_POS + 2]

    x = word[input_ids] + pos[None, :S, :] + type_row[None, None, :]
    x = layer_norm(x, eg, eb)                                               # [B,S,H]
    key_mask = ((1.0 - attention_mask.astype(jnp.float32)) * -1e9)[:, None, :]

    wA = ep["wA"].astype(jnp.float32)
    wB = ep["wB"].astype(jnp.float32)
    ps = ep["pslab"]
    for l in range(NUM_LAYERS):
        wqkv, w1 = wA[l, :, :QKV_W], wA[l, :, QKV_W:QKV_W + I]
        wo_pad, w2 = wB[l, :NHP, :], wB[l, NHP:NHP + I, :]
        bqkv, bo = ps[l, 0, :QKV_W], ps[l, 1, :H]
        ln1g, ln1b = ps[l, 2, :H], ps[l, 3, :H]
        b1, b2 = ps[l, 4, :I], ps[l, 5, :H]
        ln2g, ln2b = ps[l, 6, :H], ps[l, 7, :H]

        qkv = x @ wqkv + bqkv                                               # [B,S,768]
        attn_out = jnp.zeros((B, S, H), jnp.float32) + bo
        for h in range(nh):
            q = qkv[..., h * P:h * P + d]
            k = qkv[..., (nh + h) * P:(nh + h) * P + d]
            v = qkv[..., (2 * nh + h) * P:(2 * nh + h) * P + d]
            s = jnp.einsum("bqd,bkd->bqk", q, k) + key_mask
            pr = jax.nn.softmax(s, axis=-1)
            attn_out = attn_out + jnp.einsum("bqk,bkd->bqd", pr, v) @ wo_pad[h * P:h * P + d, :]
        x = layer_norm(x + attn_out, ln1g, ln1b)

        hmid = gelu(x @ w1 + b1)
        x = layer_norm(x + hmid @ w2 + b2, ln2g, ln2b)
    return x[:, 0, :]


# ---------------- main -------------------------------------------------------------------

if __name__ == "__main__":
    key = jax.random.PRNGKey(0)
    pkey, ikey = jax.random.split(key)
    params = init_params(pkey)
    enc_params = prepare_params(params)

    input_ids = jax.random.randint(ikey, (BATCH, SEQ), 0, VOCAB, dtype=jnp.int32)
    # exercise key-padding: last token of batch element 1 is masked out
    attention_mask = jnp.ones((BATCH, SEQ), dtype=jnp.int32).at[1, SEQ - 1].set(0)

    G = _grid_steps_for_device(BATCH)
    h_i = local_encoder_forward(enc_params, input_ids, attention_mask, grid_steps=G)
    jax.block_until_ready(h_i)
    assert h_i.shape == (BATCH, HIDDEN)

    ref = reference_forward(enc_params, input_ids, attention_mask)
    max_err = float(jnp.max(jnp.abs(h_i - ref)))
    assert jnp.allclose(h_i, ref, atol=5e-2, rtol=5e-2), max_err

    print("KERNEL_OK")
</pallas_src>

<mosaic_0001>
module attributes {stable_mosaic.version = 11 : i64} {
  func.func @_encoder_kernel(%arg0: i32, %arg1: memref<1x16x1xi32, #tpu.memory_space<vmem>>, %arg2: memref<1x32x32xf32, #tpu.memory_space<vmem>>, %arg3: memref<83x128xf32, #tpu.memory_space<vmem>>, %arg4: memref<2x128x1280xbf16, #tpu.memory_space<vmem>>, %arg5: memref<2x768x128xbf16, #tpu.memory_space<vmem>>, %arg6: memref<2x8x768xf32, #tpu.memory_space<vmem>>, %arg7: memref<1x2x128xf32, #tpu.memory_space<vmem>>) attributes {dimension_semantics = [#tpu.dimension_semantics<parallel>], iteration_bounds = array<i64: 1>, scalar_prefetch = 0 : i64, scratch_operands = 0 : i64, tpu.core_type = #tpu.core_type<tc>, window_params = [{transform_indices = @transform_0, window_bounds = array<i64: 1, 16, 1>}, {transform_indices = @transform_1, window_bounds = array<i64: 1, 32, 32>}, {pipeline_mode = #tpu.pipeline_mode<synchronous>, transform_indices = @transform_2, window_bounds = array<i64: 83, 128>}, {pipeline_mode = #tpu.pipeline_mode<synchronous>, transform_indices = @transform_3, window_bounds = array<i64: 2, 128, 1280>}, {pipeline_mode = #tpu.pipeline_mode<synchronous>, transform_indices = @transform_4, window_bounds = array<i64: 2, 768, 128>}, {pipeline_mode = #tpu.pipeline_mode<synchronous>, transform_indices = @transform_5, window_bounds = array<i64: 2, 8, 768>}, {transform_indices = @transform_6, window_bounds = array<i64: 1, 2, 128>}]} {
    %c0 = arith.constant 0 : index
    %c0_0 = arith.constant 0 : index
    %c0_1 = arith.constant 0 : index
    %0 = vector.load %arg1[%c0, %c0_0, %c0_1] : memref<1x16x1xi32, #tpu.memory_space<vmem>>, vector<1x16x1xi32>
    %1 = vector.shape_cast %0 : vector<1x16x1xi32> to vector<16x1xi32>
    %2 = tpu.iota {dimensions = array<i32: 1>} : vector<16x64xi32>
    %3 = vector.broadcast %1 : vector<16x1xi32> to vector<16x64xi32>
    %4 = arith.cmpi eq, %2, %3 : vector<16x64xi32>
    %cst = arith.constant 1.000000e+00 : f32
    %cst_2 = arith.constant 0.000000e+00 : f32
    %5 = vector.broadcast %cst : f32 to vector<16x64xf32>
    %6 = vector.broadcast %cst_2 : f32 to vector<16x64xf32>
    %7 = arith.select %4, %5, %6 : vector<16x64xi1>, vector<16x64xf32>
    %c0_3 = arith.constant 0 : index
    %c0_4 = arith.constant 0 : index
    %8 = vector.load %arg3[%c0_3, %c0_4] : memref<83x128xf32, #tpu.memory_space<vmem>>, vector<64x128xf32>
    %cst_5 = arith.constant dense<0.000000e+00> : vector<16x128xf32>
    %9 = tpu.matmul %7, %8, %cst_5 {dimension_numbers = #tpu.dot_dimension_numbers<[1], [0], [0], [1], [0, 0, 1, 1], [], []>} : vector<16x64xf32>, vector<64x128xf32>, vector<16x128xf32> -> vector<16x128xf32>
    %c64 = arith.constant 64 : index
    %c0_6 = arith.constant 0 : index
    %10 = vector.load %arg3[%c64, %c0_6] : memref<83x128xf32, #tpu.memory_space<vmem>>, vector<8x128xf32>
    %11 = tpu.concatenate %10, %10 in 0 : vector<8x128xf32>, vector<8x128xf32> -> vector<16x128xf32>
    %12 = arith.addf %9, %11 : vector<16x128xf32>
    %c80 = arith.constant 80 : index
    %c0_7 = arith.constant 0 : index
    %13 = vector.load %arg3[%c80, %c0_7] : memref<83x128xf32, #tpu.memory_space<vmem>>, vector<1x128xf32>
    %14 = vector.broadcast %13 : vector<1x128xf32> to vector<16x128xf32>
    %15 = arith.addf %12, %14 : vector<16x128xf32>
    %c81 = arith.constant 81 : index
    %c0_8 = arith.constant 0 : index
    %16 = vector.load %arg3[%c81, %c0_8] : memref<83x128xf32, #tpu.memory_space<vmem>>, vector<1x128xf32>
    %c82 = arith.constant 82 : index
    %c0_9 = arith.constant 0 : index
    %17 = vector.load %arg3[%c82, %c0_9] : memref<83x128xf32, #tpu.memory_space<vmem>>, vector<1x128xf32>
    %cst_10 = arith.constant dense<0.000000e+00> : vector<16xf32>
    %18 = vector.multi_reduction <add>, %15, %cst_10 [1] : vector<16x128xf32> to vector<16xf32>
    %19 = vector.shape_cast %18 : vector<16xf32> to vector<16x1xf32>
    %cst_11 = arith.constant 1.280000e+02 : f32
    %20 = vector.broadcast %cst_11 : f32 to vector<16x1xf32>
    %21 = arith.divf %19, %20 : vector<16x1xf32>
    %22 = vector.broadcast %21 : vector<16x1xf32> to vector<16x128xf32>
    %23 = arith.subf %15, %22 : vector<16x128xf32>
    %24 = arith.mulf %23, %23 : vector<16x128xf32>
    %cst_12 = arith.constant dense<0.000000e+00> : vector<16xf32>
    %25 = vector.multi_reduction <add>, %24, %cst_12 [1] : vector<16x128xf32> to vector<16xf32>
    %26 = vector.shape_cast %25 : vector<16xf32> to vector<16x1xf32>
    %cst_13 = arith.constant 1.280000e+02 : f32
    %27 = vector.broadcast %cst_13 : f32 to vector<16x1xf32>
    %28 = arith.divf %26, %27 : vector<16x1xf32>
    %29 = vector.broadcast %21 : vector<16x1xf32> to vector<16x128xf32>
    %30 = arith.subf %15, %29 : vector<16x128xf32>
    %cst_14 = arith.constant 9.99999996E-13 : f32
    %31 = vector.broadcast %cst_14 : f32 to vector<16x1xf32>
    %32 = arith.addf %28, %31 : vector<16x1xf32>
    %33 = math.rsqrt %32 : vector<16x1xf32>
    %34 = vector.broadcast %33 : vector<16x1xf32> to vector<16x128xf32>
    %35 = arith.mulf %30, %34 : vector<16x128xf32>
    %36 = vector.broadcast %16 : vector<1x128xf32> to vector<16x128xf32>
    %37 = arith.mulf %35, %36 : vector<16x128xf32>
    %38 = vector.broadcast %17 : vector<1x128xf32> to vector<16x128xf32>
    %39 = arith.addf %37, %38 : vector<16x128xf32>
    %c0_15 = arith.constant 0 : index
    %c0_16 = arith.constant 0 : index
    %c0_17 = arith.constant 0 : index
    %40 = vector.load %arg2[%c0_15, %c0_16, %c0_17] : memref<1x32x32xf32, #tpu.memory_space<vmem>>, vector<1x32x32xf32>
    %41 = vector.shape_cast %40 : vector<1x32x32xf32> to vector<32x32xf32>
    %42 = arith.truncf %39 : vector<16x128xf32> to vector<16x128xbf16>
    %c0_18 = arith.constant 0 : index
    %c0_19 = arith.constant 0 : index
    %c0_20 = arith.constant 0 : index
    %43 = vector.load %arg4[%c0_18, %c0_19, %c0_20] : memref<2x128x1280xbf16, #tpu.memory_space<vmem>>, vector<1x128x768xbf16>
    %44 = vector.shape_cast %43 : vector<1x128x768xbf16> to vector<128x768xbf16>
    %cst_21 = arith.constant dense<0.000000e+00> : vector<16x768xf32>
    %45 = tpu.matmul %42, %44, %cst_21 {dimension_numbers = #tpu.dot_dimension_numbers<[1], [0], [0], [1], [0, 0, 1, 1], [], []>} : vector<16x128xbf16>, vector<128x768xbf16>, vector<16x768xf32> -> vector<16x768xf32>
    %c0_22 = arith.constant 0 : index
    %c0_23 = arith.constant 0 : index
    %c0_24 = arith.constant 0 : index
    %46 = vector.load %arg6[%c0_22, %c0_23, %c0_24] : memref<2x8x768xf32, #tpu.memory_space<vmem>>, vector<1x1x768xf32>
    %47 = vector.shape_cast %46 : vector<1x1x768xf32> to vector<1x768xf32>
    %48 = vector.broadcast %47 : vector<1x768xf32> to vector<16x768xf32>
    %49 = arith.addf %45, %48 : vector<16x768xf32>
    %50 = arith.truncf %49 : vector<16x768xf32> to vector<16x768xbf16>
    %51 = vector.extract_strided_slice %50 {offsets = [0, 0], sizes = [16, 128], strides = [1, 1]} : vector<16x768xbf16> to vector<16x128xbf16>
    %52 = vector.extract_strided_slice %50 {offsets = [0, 128], sizes = [16, 128], strides = [1, 1]} : vector<16x768xbf16> to vector<16x128xbf16>
    %53 = tpu.concatenate %51, %52 in 0 : vector<16x128xbf16>, vector<16x128xbf16> -> vector<32x128xbf16>
    %54 = vector.extract_strided_slice %50 {offsets = [0, 256], sizes = [16, 128], strides = [1, 1]} : vector<16x768xbf16> to vector<16x128xbf16>
    %55 = vector.extract_strided_slice %50 {offsets = [0, 384], sizes = [16, 128], strides = [1, 1]} : vector<16x768xbf16> to vector<16x128xbf16>
    %56 = tpu.concatenate %54, %55 in 0 : vector<16x128xbf16>, vector<16x128xbf16> -> vector<32x128xbf16>
    %57 = vector.extract_strided_slice %50 {offsets = [0, 512], sizes = [16, 128], strides = [1, 1]} : vector<16x768xbf16> to vector<16x128xbf16>
    %58 = vector.extract_strided_slice %50 {offsets = [0, 640], sizes = [16, 128], strides = [1, 1]} : vector<16x768xbf16> to vector<16x128xbf16>
    %59 = tpu.concatenate %57, %58 in 0 : vector<16x128xbf16>, vector<16x128xbf16> -> vector<32x128xbf16>
    %cst_25 = arith.constant dense<0.000000e+00> : vector<32x32xf32>
    %60 = tpu.matmul %53, %56, %cst_25 {dimension_numbers = #tpu.dot_dimension_numbers<[1], [1], [0], [0], [0, 0, 1, 0], [], []>} : vector<32x128xbf16>, vector<32x128xbf16>, vector<32x32xf32> -> vector<32x32xf32>
    %61 = arith.addf %60, %41 : vector<32x32xf32>
    %cst_26 = arith.constant dense<0xFF800000> : vector<32xf32>
    %62 = vector.multi_reduction <maximumf>, %61, %cst_26 [1] : vector<32x32xf32> to vector<32xf32>
    %63 = vector.shape_cast %62 : vector<32xf32> to vector<32x1xf32>
    %64 = vector.broadcast %63 : vector<32x1xf32> to vector<32x32xf32>
    %65 = arith.subf %61, %64 : vector<32x32xf32>
    %66 = math.exp %65 : vector<32x32xf32>
    %cst_27 = arith.constant dense<0.000000e+00> : vector<32xf32>
    %67 = vector.multi_reduction <add>, %66, %cst_27 [1] : vector<32x32xf32> to vector<32xf32>
    %68 = vector.shape_cast %67 : vector<32xf32> to vector<32x1xf32>
    %69 = tpu.reciprocal %68 {approx = true} : vector<32x1xf32> -> vector<32x1xf32>
    %70 = vector.broadcast %69 : vector<32x1xf32> to vector<32x32xf32>
    %71 = arith.mulf %66, %70 : vector<32x32xf32>
    %72 = arith.truncf %71 : vector<32x32xf32> to vector<32x32xbf16>
    %cst_28 = arith.constant dense<0.000000e+00> : vector<32x128xf32>
    %73 = tpu.matmul %72, %59, %cst_28 {dimension_numbers = #tpu.dot_dimension_numbers<[1], [0], [0], [1], [0, 0, 1, 1], [], []>} : vector<32x32xbf16>, vector<32x128xbf16>, vector<32x128xf32> -> vector<32x128xf32>
    %74 = vector.extract_strided_slice %73 {offsets = [0, 0], sizes = [16, 128], strides = [1, 1]} : vector<32x128xf32> to vector<16x128xf32>
    %75 = vector.extract_strided_slice %73 {offsets = [16, 0], sizes = [16, 128], strides = [1, 1]} : vector<32x128xf32> to vector<16x128xf32>
    %76 = tpu.concatenate %74, %75 in 1 : vector<16x128xf32>, vector<16x128xf32> -> vector<16x256xf32>
    %77 = arith.truncf %76 : vector<16x256xf32> to vector<16x256xbf16>
    %c0_29 = arith.constant 0 : index
    %c0_30 = arith.constant 0 : index
    %c0_31 = arith.constant 0 : index
    %78 = vector.load %arg5[%c0_29, %c0_30, %c0_31] : memref<2x768x128xbf16, #tpu.memory_space<vmem>>, vector<1x256x128xbf16>
    %79 = vector.shape_cast %78 : vector<1x256x128xbf16> to vector<256x128xbf16>
    %cst_32 = arith.constant dense<0.000000e+00> : vector<16x128xf32>
    %80 = tpu.matmul %77, %79, %cst_32 {dimension_numbers = #tpu.dot_dimension_numbers<[1], [0], [0], [1], [0, 0, 1, 1], [], []>} : vector<16x256xbf16>, vector<256x128xbf16>, vector<16x128xf32> -> vector<16x128xf32>
    %c0_33 = arith.constant 0 : index
    %c1 = arith.constant 1 : index
    %c0_34 = arith.constant 0 : index
    %81 = vector.load %arg6[%c0_33, %c1, %c0_34] : memref<2x8x768xf32, #tpu.memory_space<vmem>>, vector<1x1x128xf32>
    %82 = vector.shape_cast %81 : vector<1x1x128xf32> to vector<1x128xf32>
    %83 = vector.broadcast %82 : vector<1x128xf32> to vector<16x128xf32>
    %84 = arith.addf %80, %83 : vector<16x128xf32>
    %85 = arith.addf %39, %84 : vector<16x128xf32>
    %c0_35 = arith.constant 0 : index
    %c2 = arith.constant 2 : index
    %c0_36 = arith.constant 0 : index
    %86 = vector.load %arg6[%c0_35, %c2, %c0_36] : memref<2x8x768xf32, #tpu.memory_space<vmem>>, vector<1x1x128xf32>
    %87 = vector.shape_cast %86 : vector<1x1x128xf32> to vector<1x128xf32>
    %c0_37 = arith.constant 0 : index
    %c3 = arith.constant 3 : index
    %c0_38 = arith.constant 0 : index
    %88 = vector.load %arg6[%c0_37, %c3, %c0_38] : memref<2x8x768xf32, #tpu.memory_space<vmem>>, vector<1x1x128xf32>
    %89 = vector.shape_cast %88 : vector<1x1x128xf32> to vector<1x128xf32>
    %cst_39 = arith.constant dense<0.000000e+00> : vector<16xf32>
    %90 = vector.multi_reduction <add>, %85, %cst_39 [1] : vector<16x128xf32> to vector<16xf32>
    %91 = vector.shape_cast %90 : vector<16xf32> to vector<16x1xf32>
    %cst_40 = arith.constant 1.280000e+02 : f32
    %92 = vector.broadcast %cst_40 : f32 to vector<16x1xf32>
    %93 = arith.divf %91, %92 : vector<16x1xf32>
    %94 = vector.broadcast %93 : vector<16x1xf32> to vector<16x128xf32>
    %95 = arith.subf %85, %94 : vector<16x128xf32>
    %96 = arith.mulf %95, %95 : vector<16x128xf32>
    %cst_41 = arith.constant dense<0.000000e+00> : vector<16xf32>
    %97 = vector.multi_reduction <add>, %96, %cst_41 [1] : vector<16x128xf32> to vector<16xf32>
    %98 = vector.shape_cast %97 : vector<16xf32> to vector<16x1xf32>
    %cst_42 = arith.constant 1.280000e+02 : f32
    %99 = vector.broadcast %cst_42 : f32 to vector<16x1xf32>
    %100 = arith.divf %98, %99 : vector<16x1xf32>
    %101 = vector.broadcast %93 : vector<16x1xf32> to vector<16x128xf32>
    %102 = arith.subf %85, %101 : vector<16x128xf32>
    %cst_43 = arith.constant 9.99999996E-13 : f32
    %103 = vector.broadcast %cst_43 : f32 to vector<16x1xf32>
    %104 = arith.addf %100, %103 : vector<16x1xf32>
    %105 = math.rsqrt %104 : vector<16x1xf32>
    %106 = vector.broadcast %105 : vector<16x1xf32> to vector<16x128xf32>
    %107 = arith.mulf %102, %106 : vector<16x128xf32>
    %108 = vector.broadcast %87 : vector<1x128xf32> to vector<16x128xf32>
    %109 = arith.mulf %107, %108 : vector<16x128xf32>
    %110 = vector.broadcast %89 : vector<1x128xf32> to vector<16x128xf32>
    %111 = arith.addf %109, %110 : vector<16x128xf32>
    %112 = arith.truncf %111 : vector<16x128xf32> to vector<16x128xbf16>
    %c0_44 = arith.constant 0 : index
    %c0_45 = arith.constant 0 : index
    %c768 = arith.constant 768 : index
    %113 = vector.load %arg4[%c0_44, %c0_45, %c768] : memref<2x128x1280xbf16, #tpu.memory_space<vmem>>, vector<1x128x512xbf16>
    %114 = vector.shape_cast %113 : vector<1x128x512xbf16> to vector<128x512xbf16>
    %cst_46 = arith.constant dense<0.000000e+00> : vector<16x512xf32>
    %115 = tpu.matmul %112, %114, %cst_46 {dimension_numbers = #tpu.dot_dimension_numbers<[1], [0], [0], [1], [0, 0, 1, 1], [], []>} : vector<16x128xbf16>, vector<128x512xbf16>, vector<16x512xf32> -> vector<16x512xf32>
    %c0_47 = arith.constant 0 : index
    %c4 = arith.constant 4 : index
    %c0_48 = arith.constant 0 : index
    %116 = vector.load %arg6[%c0_47, %c4, %c0_48] : memref<2x8x768xf32, #tpu.memory_space<vmem>>, vector<1x1x512xf32>
    %117 = vector.shape_cast %116 : vector<1x1x512xf32> to vector<1x512xf32>
    %118 = vector.broadcast %117 : vector<1x512xf32> to vector<16x512xf32>
    %119 = arith.addf %115, %118 : vector<16x512xf32>
    %cst_49 = arith.constant 5.000000e-01 : f32
    %120 = vector.broadcast %cst_49 : f32 to vector<16x512xf32>
    %121 = arith.mulf %120, %119 : vector<16x512xf32>
    %cst_50 = arith.constant 4.471500e-02 : f32
    %122 = vector.broadcast %cst_50 : f32 to vector<16x512xf32>
    %123 = arith.mulf %122, %119 : vector<16x512xf32>
    %124 = arith.mulf %123, %119 : vector<16x512xf32>
    %125 = arith.mulf %124, %119 : vector<16x512xf32>
    %126 = arith.addf %119, %125 : vector<16x512xf32>
    %cst_51 = arith.constant 0.797884583 : f32
    %127 = vector.broadcast %cst_51 : f32 to vector<16x512xf32>
    %128 = arith.mulf %127, %126 : vector<16x512xf32>
    %129 = math.tanh %128 : vector<16x512xf32>
    %cst_52 = arith.constant 1.000000e+00 : f32
    %130 = vector.broadcast %cst_52 : f32 to vector<16x512xf32>
    %131 = arith.addf %130, %129 : vector<16x512xf32>
    %132 = arith.mulf %121, %131 : vector<16x512xf32>
    %133 = arith.truncf %132 : vector<16x512xf32> to vector<16x512xbf16>
    %c0_53 = arith.constant 0 : index
    %c256 = arith.constant 256 : index
    %c0_54 = arith.constant 0 : index
    %134 = vector.load %arg5[%c0_53, %c256, %c0_54] : memref<2x768x128xbf16, #tpu.memory_space<vmem>>, vector<1x512x128xbf16>
    %135 = vector.shape_cast %134 : vector<1x512x128xbf16> to vector<512x128xbf16>
    %cst_55 = arith.constant dense<0.000000e+00> : vector<16x128xf32>
    %136 = tpu.matmul %133, %135, %cst_55 {dimension_numbers = #tpu.dot_dimension_numbers<[1], [0], [0], [1], [0, 0, 1, 1], [], []>} : vector<16x512xbf16>, vector<512x128xbf16>, vector<16x128xf32> -> vector<16x128xf32>
    %c0_56 = arith.constant 0 : index
    %c5 = arith.constant 5 : index
    %c0_57 = arith.constant 0 : index
    %137 = vector.load %arg6[%c0_56, %c5, %c0_57] : memref<2x8x768xf32, #tpu.memory_space<vmem>>, vector<1x1x128xf32>
    %138 = vector.shape_cast %137 : vector<1x1x128xf32> to vector<1x128xf32>
    %139 = vector.broadcast %138 : vector<1x128xf32> to vector<16x128xf32>
    %140 = arith.addf %136, %139 : vector<16x128xf32>
    %141 = arith.addf %111, %140 : vector<16x128xf32>
    %c0_58 = arith.constant 0 : index
    %c6 = arith.constant 6 : index
    %c0_59 = arith.constant 0 : index
    %142 = vector.load %arg6[%c0_58, %c6, %c0_59] : memref<2x8x768xf32, #tpu.memory_space<vmem>>, vector<1x1x128xf32>
    %143 = vector.shape_cast %142 : vector<1x1x128xf32> to vector<1x128xf32>
    %c0_60 = arith.constant 0 : index
    %c7 = arith.constant 7 : index
    %c0_61 = arith.constant 0 : index
    %144 = vector.load %arg6[%c0_60, %c7, %c0_61] : memref<2x8x768xf32, #tpu.memory_space<vmem>>, vector<1x1x128xf32>
    %145 = vector.shape_cast %144 : vector<1x1x128xf32> to vector<1x128xf32>
    %cst_62 = arith.constant dense<0.000000e+00> : vector<16xf32>
    %146 = vector.multi_reduction <add>, %141, %cst_62 [1] : vector<16x128xf32> to vector<16xf32>
    %147 = vector.shape_cast %146 : vector<16xf32> to vector<16x1xf32>
    %cst_63 = arith.constant 1.280000e+02 : f32
    %148 = vector.broadcast %cst_63 : f32 to vector<16x1xf32>
    %149 = arith.divf %147, %148 : vector<16x1xf32>
    %150 = vector.broadcast %149 : vector<16x1xf32> to vector<16x128xf32>
    %151 = arith.subf %141, %150 : vector<16x128xf32>
    %152 = arith.mulf %151, %151 : vector<16x128xf32>
    %cst_64 = arith.constant dense<0.000000e+00> : vector<16xf32>
    %153 = vector.multi_reduction <add>, %152, %cst_64 [1] : vector<16x128xf32> to vector<16xf32>
    %154 = vector.shape_cast %153 : vector<16xf32> to vector<16x1xf32>
    %cst_65 = arith.constant 1.280000e+02 : f32
    %155 = vector.broadcast %cst_65 : f32 to vector<16x1xf32>
    %156 = arith.divf %154, %155 : vector<16x1xf32>
    %157 = vector.broadcast %149 : vector<16x1xf32> to vector<16x128xf32>
    %158 = arith.subf %141, %157 : vector<16x128xf32>
    %cst_66 = arith.constant 9.99999996E-13 : f32
    %159 = vector.broadcast %cst_66 : f32 to vector<16x1xf32>
    %160 = arith.addf %156, %159 : vector<16x1xf32>
    %161 = math.rsqrt %160 : vector<16x1xf32>
    %162 = vector.broadcast %161 : vector<16x1xf32> to vector<16x128xf32>
    %163 = arith.mulf %158, %162 : vector<16x128xf32>
    %164 = vector.broadcast %143 : vector<1x128xf32> to vector<16x128xf32>
    %165 = arith.mulf %163, %164 : vector<16x128xf32>
    %166 = vector.broadcast %145 : vector<1x128xf32> to vector<16x128xf32>
    %167 = arith.addf %165, %166 : vector<16x128xf32>
    %168 = arith.truncf %167 : vector<16x128xf32> to vector<16x128xbf16>
    %c1_67 = arith.constant 1 : index
    %c0_68 = arith.constant 0 : index
    %c0_69 = arith.constant 0 : index
    %169 = vector.load %arg4[%c1_67, %c0_68, %c0_69] : memref<2x128x1280xbf16, #tpu.memory_space<vmem>>, vector<1x128x768xbf16>
    %170 = vector.shape_cast %169 : vector<1x128x768xbf16> to vector<128x768xbf16>
    %cst_70 = arith.constant dense<0.000000e+00> : vector<16x768xf32>
    %171 = tpu.matmul %168, %170, %cst_70 {dimension_numbers = #tpu.dot_dimension_numbers<[1], [0], [0], [1], [0, 0, 1, 1], [], []>} : vector<16x128xbf16>, vector<128x768xbf16>, vector<16x768xf32> -> vector<16x768xf32>
    %c1_71 = arith.constant 1 : index
    %c0_72 = arith.constant 0 : index
    %c0_73 = arith.constant 0 : index
    %172 = vector.load %arg6[%c1_71, %c0_72, %c0_73] : memref<2x8x768xf32, #tpu.memory_space<vmem>>, vector<1x1x768xf32>
    %173 = vector.shape_cast %172 : vector<1x1x768xf32> to vector<1x768xf32>
    %174 = vector.broadcast %173 : vector<1x768xf32> to vector<16x768xf32>
    %175 = arith.addf %171, %174 : vector<16x768xf32>
    %176 = arith.truncf %175 : vector<16x768xf32> to vector<16x768xbf16>
    %177 = vector.extract_strided_slice %176 {offsets = [0, 0], sizes = [16, 128], strides = [1, 1]} : vector<16x768xbf16> to vector<16x128xbf16>
    %178 = vector.extract_strided_slice %176 {offsets = [0, 128], sizes = [16, 128], strides = [1, 1]} : vector<16x768xbf16> to vector<16x128xbf16>
    %179 = tpu.concatenate %177, %178 in 0 : vector<16x128xbf16>, vector<16x128xbf16> -> vector<32x128xbf16>
    %180 = vector.extract_strided_slice %176 {offsets = [0, 256], sizes = [16, 128], strides = [1, 1]} : vector<16x768xbf16> to vector<16x128xbf16>
    %181 = vector.extract_strided_slice %176 {offsets = [0, 384], sizes = [16, 128], strides = [1, 1]} : vector<16x768xbf16> to vector<16x128xbf16>
    %182 = tpu.concatenate %180, %181 in 0 : vector<16x128xbf16>, vector<16x128xbf16> -> vector<32x128xbf16>
    %183 = vector.extract_strided_slice %176 {offsets = [0, 512], sizes = [16, 128], strides = [1, 1]} : vector<16x768xbf16> to vector<16x128xbf16>
    %184 = vector.extract_strided_slice %176 {offsets = [0, 640], sizes = [16, 128], strides = [1, 1]} : vector<16x768xbf16> to vector<16x128xbf16>
    %185 = tpu.concatenate %183, %184 in 0 : vector<16x128xbf16>, vector<16x128xbf16> -> vector<32x128xbf16>
    %cst_74 = arith.constant dense<0.000000e+00> : vector<32x32xf32>
    %186 = tpu.matmul %179, %182, %cst_74 {dimension_numbers = #tpu.dot_dimension_numbers<[1], [1], [0], [0], [0, 0, 1, 0], [], []>} : vector<32x128xbf16>, vector<32x128xbf16>, vector<32x32xf32> -> vector<32x32xf32>
    %187 = arith.addf %186, %41 : vector<32x32xf32>
    %cst_75 = arith.constant dense<0xFF800000> : vector<32xf32>
    %188 = vector.multi_reduction <maximumf>, %187, %cst_75 [1] : vector<32x32xf32> to vector<32xf32>
    %189 = vector.shape_cast %188 : vector<32xf32> to vector<32x1xf32>
    %190 = vector.broadcast %189 : vector<32x1xf32> to vector<32x32xf32>
    %191 = arith.subf %187, %190 : vector<32x32xf32>
    %192 = math.exp %191 : vector<32x32xf32>
    %cst_76 = arith.constant dense<0.000000e+00> : vector<32xf32>
    %193 = vector.multi_reduction <add>, %192, %cst_76 [1] : vector<32x32xf32> to vector<32xf32>
    %194 = vector.shape_cast %193 : vector<32xf32> to vector<32x1xf32>
    %195 = tpu.reciprocal %194 {approx = true} : vector<32x1xf32> -> vector<32x1xf32>
    %196 = vector.broadcast %195 : vector<32x1xf32> to vector<32x32xf32>
    %197 = arith.mulf %192, %196 : vector<32x32xf32>
    %198 = arith.truncf %197 : vector<32x32xf32> to vector<32x32xbf16>
    %cst_77 = arith.constant dense<0.000000e+00> : vector<32x128xf32>
    %199 = tpu.matmul %198, %185, %cst_77 {dimension_numbers = #tpu.dot_dimension_numbers<[1], [0], [0], [1], [0, 0, 1, 1], [], []>} : vector<32x32xbf16>, vector<32x128xbf16>, vector<32x128xf32> -> vector<32x128xf32>
    %200 = vector.extract_strided_slice %199 {offsets = [0, 0], sizes = [16, 128], strides = [1, 1]} : vector<32x128xf32> to vector<16x128xf32>
    %201 = vector.extract_strided_slice %199 {offsets = [16, 0], sizes = [16, 128], strides = [1, 1]} : vector<32x128xf32> to vector<16x128xf32>
    %202 = tpu.concatenate %200, %201 in 1 : vector<16x128xf32>, vector<16x128xf32> -> vector<16x256xf32>
    %203 = arith.truncf %202 : vector<16x256xf32> to vector<16x256xbf16>
    %c1_78 = arith.constant 1 : index
    %c0_79 = arith.constant 0 : index
    %c0_80 = arith.constant 0 : index
    %204 = vector.load %arg5[%c1_78, %c0_79, %c0_80] : memref<2x768x128xbf16, #tpu.memory_space<vmem>>, vector<1x256x128xbf16>
    %205 = vector.shape_cast %204 : vector<1x256x128xbf16> to vector<256x128xbf16>
    %cst_81 = arith.constant dense<0.000000e+00> : vector<16x128xf32>
    %206 = tpu.matmul %203, %205, %cst_81 {dimension_numbers = #tpu.dot_dimension_numbers<[1], [0], [0], [1], [0, 0, 1, 1], [], []>} : vector<16x256xbf16>, vector<256x128xbf16>, vector<16x128xf32> -> vector<16x128xf32>
    %c1_82 = arith.constant 1 : index
    %c1_83 = arith.constant 1 : index
    %c0_84 = arith.constant 0 : index
    %207 = vector.load %arg6[%c1_82, %c1_83, %c0_84] : memref<2x8x768xf32, #tpu.memory_space<vmem>>, vector<1x1x128xf32>
    %208 = vector.shape_cast %207 : vector<1x1x128xf32> to vector<1x128xf32>
    %209 = vector.broadcast %208 : vector<1x128xf32> to vector<16x128xf32>
    %210 = arith.addf %206, %209 : vector<16x128xf32>
    %211 = arith.addf %167, %210 : vector<16x128xf32>
    %c1_85 = arith.constant 1 : index
    %c2_86 = arith.constant 2 : index
    %c0_87 = arith.constant 0 : index
    %212 = vector.load %arg6[%c1_85, %c2_86, %c0_87] : memref<2x8x768xf32, #tpu.memory_space<vmem>>, vector<1x1x128xf32>
    %213 = vector.shape_cast %212 : vector<1x1x128xf32> to vector<1x128xf32>
    %c1_88 = arith.constant 1 : index
    %c3_89 = arith.constant 3 : index
    %c0_90 = arith.constant 0 : index
    %214 = vector.load %arg6[%c1_88, %c3_89, %c0_90] : memref<2x8x768xf32, #tpu.memory_space<vmem>>, vector<1x1x128xf32>
    %215 = vector.shape_cast %214 : vector<1x1x128xf32> to vector<1x128xf32>
    %cst_91 = arith.constant dense<0.000000e+00> : vector<16xf32>
    %216 = vector.multi_reduction <add>, %211, %cst_91 [1] : vector<16x128xf32> to vector<16xf32>
    %217 = vector.shape_cast %216 : vector<16xf32> to vector<16x1xf32>
    %cst_92 = arith.constant 1.280000e+02 : f32
    %218 = vector.broadcast %cst_92 : f32 to vector<16x1xf32>
    %219 = arith.divf %217, %218 : vector<16x1xf32>
    %220 = vector.broadcast %219 : vector<16x1xf32> to vector<16x128xf32>
    %221 = arith.subf %211, %220 : vector<16x128xf32>
    %222 = arith.mulf %221, %221 : vector<16x128xf32>
    %cst_93 = arith.constant dense<0.000000e+00> : vector<16xf32>
    %223 = vector.multi_reduction <add>, %222, %cst_93 [1] : vector<16x128xf32> to vector<16xf32>
    %224 = vector.shape_cast %223 : vector<16xf32> to vector<16x1xf32>
    %cst_94 = arith.constant 1.280000e+02 : f32
    %225 = vector.broadcast %cst_94 : f32 to vector<16x1xf32>
    %226 = arith.divf %224, %225 : vector<16x1xf32>
    %227 = vector.broadcast %219 : vector<16x1xf32> to vector<16x128xf32>
    %228 = arith.subf %211, %227 : vector<16x128xf32>
    %cst_95 = arith.constant 9.99999996E-13 : f32
    %229 = vector.broadcast %cst_95 : f32 to vector<16x1xf32>
    %230 = arith.addf %226, %229 : vector<16x1xf32>
    %231 = math.rsqrt %230 : vector<16x1xf32>
    %232 = vector.broadcast %231 : vector<16x1xf32> to vector<16x128xf32>
    %233 = arith.mulf %228, %232 : vector<16x128xf32>
    %234 = vector.broadcast %213 : vector<1x128xf32> to vector<16x128xf32>
    %235 = arith.mulf %233, %234 : vector<16x128xf32>
    %236 = vector.broadcast %215 : vector<1x128xf32> to vector<16x128xf32>
    %237 = arith.addf %235, %236 : vector<16x128xf32>
    %238 = arith.truncf %237 : vector<16x128xf32> to vector<16x128xbf16>
    %c1_96 = arith.constant 1 : index
    %c0_97 = arith.constant 0 : index
    %c768_98 = arith.constant 768 : index
    %239 = vector.load %arg4[%c1_96, %c0_97, %c768_98] : memref<2x128x1280xbf16, #tpu.memory_space<vmem>>, vector<1x128x512xbf16>
    %240 = vector.shape_cast %239 : vector<1x128x512xbf16> to vector<128x512xbf16>
    %cst_99 = arith.constant dense<0.000000e+00> : vector<16x512xf32>
    %241 = tpu.matmul %238, %240, %cst_99 {dimension_numbers = #tpu.dot_dimension_numbers<[1], [0], [0], [1], [0, 0, 1, 1], [], []>} : vector<16x128xbf16>, vector<128x512xbf16>, vector<16x512xf32> -> vector<16x512xf32>
    %c1_100 = arith.constant 1 : index
    %c4_101 = arith.constant 4 : index
    %c0_102 = arith.constant 0 : index
    %242 = vector.load %arg6[%c1_100, %c4_101, %c0_102] : memref<2x8x768xf32, #tpu.memory_space<vmem>>, vector<1x1x512xf32>
    %243 = vector.shape_cast %242 : vector<1x1x512xf32> to vector<1x512xf32>
    %244 = vector.broadcast %243 : vector<1x512xf32> to vector<16x512xf32>
    %245 = arith.addf %241, %244 : vector<16x512xf32>
    %cst_103 = arith.constant 5.000000e-01 : f32
    %246 = vector.broadcast %cst_103 : f32 to vector<16x512xf32>
    %247 = arith.mulf %246, %245 : vector<16x512xf32>
    %cst_104 = arith.constant 4.471500e-02 : f32
    %248 = vector.broadcast %cst_104 : f32 to vector<16x512xf32>
    %249 = arith.mulf %248, %245 : vector<16x512xf32>
    %250 = arith.mulf %249, %245 : vector<16x512xf32>
    %251 = arith.mulf %250, %245 : vector<16x512xf32>
    %252 = arith.addf %245, %251 : vector<16x512xf32>
    %cst_105 = arith.constant 0.797884583 : f32
    %253 = vector.broadcast %cst_105 : f32 to vector<16x512xf32>
    %254 = arith.mulf %253, %252 : vector<16x512xf32>
    %255 = math.tanh %254 : vector<16x512xf32>
    %cst_106 = arith.constant 1.000000e+00 : f32
    %256 = vector.broadcast %cst_106 : f32 to vector<16x512xf32>
    %257 = arith.addf %256, %255 : vector<16x512xf32>
    %258 = arith.mulf %247, %257 : vector<16x512xf32>
    %259 = arith.truncf %258 : vector<16x512xf32> to vector<16x512xbf16>
    %c1_107 = arith.constant 1 : index
    %c256_108 = arith.constant 256 : index
    %c0_109 = arith.constant 0 : index
    %260 = vector.load %arg5[%c1_107, %c256_108, %c0_109] : memref<2x768x128xbf16, #tpu.memory_space<vmem>>, vector<1x512x128xbf16>
    %261 = vector.shape_cast %260 : vector<1x512x128xbf16> to vector<512x128xbf16>
    %cst_110 = arith.constant dense<0.000000e+00> : vector<16x128xf32>
    %262 = tpu.matmul %259, %261, %cst_110 {dimension_numbers = #tpu.dot_dimension_numbers<[1], [0], [0], [1], [0, 0, 1, 1], [], []>} : vector<16x512xbf16>, vector<512x128xbf16>, vector<16x128xf32> -> vector<16x128xf32>
    %c1_111 = arith.constant 1 : index
    %c5_112 = arith.constant 5 : index
    %c0_113 = arith.constant 0 : index
    %263 = vector.load %arg6[%c1_111, %c5_112, %c0_113] : memref<2x8x768xf32, #tpu.memory_space<vmem>>, vector<1x1x128xf32>
    %264 = vector.shape_cast %263 : vector<1x1x128xf32> to vector<1x128xf32>
    %265 = vector.broadcast %264 : vector<1x128xf32> to vector<16x128xf32>
    %266 = arith.addf %262, %265 : vector<16x128xf32>
    %267 = arith.addf %237, %266 : vector<16x128xf32>
    %c1_114 = arith.constant 1 : index
    %c6_115 = arith.constant 6 : index
    %c0_116 = arith.constant 0 : index
    %268 = vector.load %arg6[%c1_114, %c6_115, %c0_116] : memref<2x8x768xf32, #tpu.memory_space<vmem>>, vector<1x1x128xf32>
    %269 = vector.shape_cast %268 : vector<1x1x128xf32> to vector<1x128xf32>
    %c1_117 = arith.constant 1 : index
    %c7_118 = arith.constant 7 : index
    %c0_119 = arith.constant 0 : index
    %270 = vector.load %arg6[%c1_117, %c7_118, %c0_119] : memref<2x8x768xf32, #tpu.memory_space<vmem>>, vector<1x1x128xf32>
    %271 = vector.shape_cast %270 : vector<1x1x128xf32> to vector<1x128xf32>
    %cst_120 = arith.constant dense<0.000000e+00> : vector<16xf32>
    %272 = vector.multi_reduction <add>, %267, %cst_120 [1] : vector<16x128xf32> to vector<16xf32>
    %273 = vector.shape_cast %272 : vector<16xf32> to vector<16x1xf32>
    %cst_121 = arith.constant 1.280000e+02 : f32
    %274 = vector.broadcast %cst_121 : f32 to vector<16x1xf32>
    %275 = arith.divf %273, %274 : vector<16x1xf32>
    %276 = vector.broadcast %275 : vector<16x1xf32> to vector<16x128xf32>
    %277 = arith.subf %267, %276 : vector<16x128xf32>
    %278 = arith.mulf %277, %277 : vector<16x128xf32>
    %cst_122 = arith.constant dense<0.000000e+00> : vector<16xf32>
    %279 = vector.multi_reduction <add>, %278, %cst_122 [1] : vector<16x128xf32> to vector<16xf32>
    %280 = vector.shape_cast %279 : vector<16xf32> to vector<16x1xf32>
    %cst_123 = arith.constant 1.280000e+02 : f32
    %281 = vector.broadcast %cst_123 : f32 to vector<16x1xf32>
    %282 = arith.divf %280, %281 : vector<16x1xf32>
    %283 = vector.broadcast %275 : vector<16x1xf32> to vector<16x128xf32>
    %284 = arith.subf %267, %283 : vector<16x128xf32>
    %cst_124 = arith.constant 9.99999996E-13 : f32
    %285 = vector.broadcast %cst_124 : f32 to vector<16x1xf32>
    %286 = arith.addf %282, %285 : vector<16x1xf32>
    %287 = math.rsqrt %286 : vector<16x1xf32>
    %288 = vector.broadcast %287 : vector<16x1xf32> to vector<16x128xf32>
    %289 = arith.mulf %284, %288 : vector<16x128xf32>
    %290 = vector.broadcast %269 : vector<1x128xf32> to vector<16x128xf32>
    %291 = arith.mulf %289, %290 : vector<16x128xf32>
    %292 = vector.broadcast %271 : vector<1x128xf32> to vector<16x128xf32>
    %293 = arith.addf %291, %292 : vector<16x128xf32>
    %294 = vector.extract_strided_slice %293 {offsets = [0, 0], sizes = [1, 128], strides = [1, 1]} : vector<16x128xf32> to vector<1x128xf32>
    %295 = vector.extract_strided_slice %293 {offsets = [8, 0], sizes = [1, 128], strides = [1, 1]} : vector<16x128xf32> to vector<1x128xf32>
    %296 = tpu.concatenate %294, %295 in 0 : vector<1x128xf32>, vector<1x128xf32> -> vector<2x128xf32>
    %c0_125 = arith.constant 0 : index
    %c0_126 = arith.constant 0 : index
    %c0_127 = arith.constant 0 : index
    %297 = vector.load %arg7[%c0_125, %c0_126, %c0_127] : memref<1x2x128xf32, #tpu.memory_space<vmem>>, vector<1x2x128xf32>
    %298 = vector.shape_cast %297 : vector<1x2x128xf32> to vector<2x128xf32>
    %299 = vector.shape_cast %296 : vector<2x128xf32> to vector<1x2x128xf32>
    tpu.vector_store %arg7[%c0_125, %c0_126, %c0_127], %299 {strides = array<i32>} : memref<1x2x128xf32, #tpu.memory_space<vmem>>, vector<1x2x128xf32>,
    return
  }
  func.func @transform_0(%arg0: i32) -> (i32, i32, i32) {
    %c0_i32 = arith.constant 0 : i32
    %c0_i32_0 = arith.constant 0 : i32
    %c0_i32_1 = arith.constant 0 : i32
    return %arg0, %c0_i32, %c0_i32_0 : i32, i32, i32
  }
  func.func @transform_1(%arg0: i32) -> (i32, i32, i32) {
    %c0_i32 = arith.constant 0 : i32
    %c0_i32_0 = arith.constant 0 : i32
    %c0_i32_1 = arith.constant 0 : i32
    return %arg0, %c0_i32, %c0_i32_0 : i32, i32, i32
  }
  func.func @transform_2(%arg0: i32) -> (i32, i32) {
    %c0_i32 = arith.constant 0 : i32
    %c0_i32_0 = arith.constant 0 : i32
    %c0_i32_1 = arith.constant 0 : i32
    return %c0_i32, %c0_i32_0 : i32, i32
  }
  func.func @transform_3(%arg0: i32) -> (i32, i32, i32) {
    %c0_i32 = arith.constant 0 : i32
    %c0_i32_0 = arith.constant 0 : i32
    %c0_i32_1 = arith.constant 0 : i32
    %c0_i32_2 = arith.constant 0 : i32
    return %c0_i32, %c0_i32_0, %c0_i32_1 : i32, i32, i32
  }
  func.func @transform_4(%arg0: i32) -> (i32, i32, i32) {
    %c0_i32 = arith.constant 0 : i32
    %c0_i32_0 = arith.constant 0 : i32
    %c0_i32_1 = arith.constant 0 : i32
    %c0_i32_2 = arith.constant 0 : i32
    return %c0_i32, %c0_i32_0, %c0_i32_1 : i32, i32, i32
  }
  func.func @transform_5(%arg0: i32) -> (i32, i32, i32) {
    %c0_i32 = arith.constant 0 : i32
    %c0_i32_0 = arith.constant 0 : i32
    %c0_i32_1 = arith.constant 0 : i32
    %c0_i32_2 = arith.constant 0 : i32
    return %c0_i32, %c0_i32_0, %c0_i32_1 : i32, i32, i32
  }
  func.func @transform_6(%arg0: i32) -> (i32, i32, i32) {
    %c0_i32 = arith.constant 0 : i32
    %c0_i32_0 = arith.constant 0 : i32
    %c0_i32_1 = arith.constant 0 : i32
    return %arg0, %c0_i32, %c0_i32_0 : i32, i32, i32
  }
}

</mosaic_0001>

<llo_original>
// kernel: local_encoder_forward.1
$region0: #{local_encoder_forward.1}
  #allocation0 [shape = 'u32[]', space=smem, size = 0x4, offset = 0x4, fixed_abs, tag = 'smem constant byte address 0x4 - core index']
  #allocation1 [shape = 'u32[144,128]{1,0:T(1,128)}', space=vmem, size = 0x12000, scoped, tag = 'internal scratch']
  %s0 = inlined_call_operand.vmem [shape: s32[1,16,1], index: 0, kind: input, shape index: {}]
  %s1 = inlined_call_operand.vmem [shape: f32[1,32,32], index: 1, kind: input, shape index: {}]
  %s2 = inlined_call_operand.vmem [shape: f32[83,128], index: 2, kind: input, shape index: {}]
  %s3 = inlined_call_operand.hbm [shape: bf16[2,128,1280], index: 3, kind: input, shape index: {}]
  %s4 = inlined_call_operand.vmem [shape: bf16[2,768,128], index: 4, kind: input, shape index: {}]
  %s5 = inlined_call_operand.vmem [shape: f32[2,8,768], index: 5, kind: input, shape index: {}]
  %s6 = inlined_call_operand.hbm [shape: f32[1,2,128], index: 6, kind: output, shape index: {}]
  %s7 = sld [smem:[#allocation0]]
  $region38: #{local_encoder_forward.1} parent=0
    _
  %s9 = ssub.s32 1, %s7
  %s10 = scalar_select 0, %s9, %s7
  $region1: #{local_encoder_forward.1} parent=0
    #allocation2 [shape = 'u8[655360]{0}', space=vmem, size = 0xa0000, scoped, tag = 'input window, operand 3, single buffered']
    #allocation3 [shape = 's32[1]{0}', space=sflag, size = 0x4, scoped, tag = 'scoped memory for local_encoder_forward.1']
    #allocation4 [shape = 's32[1]{0}', space=sflag, size = 0x4, scoped, tag = 'scoped memory for local_encoder_forward.1']
    #allocation5 [shape = 'u8[1024]{0}', space=vmem, size = 0x400, scoped, tag = 'output window, operand 0, single buffered']
    %11 = vsyncpa [#allocation3], 0
    %12 = vsyncpa [#allocation4], 0
    // Predicated region
    $region2: #{local_encoder_forward.1} parent=1 // pred_check
      _
    $region3: #{local_encoder_forward.1} parent=1 // pred_check_branch
      %14 = sbr.rel (0) target = $region5
    $region4: #{local_encoder_forward.1} parent=1 // pred_region
      _
    $region5: #{local_encoder_forward.1} parent=1 // pred_fallthru
      _
    // Predicated region
    $region6: #{local_encoder_forward.1} parent=1 // pred_check
      _
    $region7: #{local_encoder_forward.1} parent=1 // pred_check_branch
      %16 = sbr.rel (0) target = $region9
    $region8: #{local_encoder_forward.1} parent=1 // pred_region
      _
    $region9: #{local_encoder_forward.1} parent=1 // pred_fallthru
      _
    // Predicated region
    $region10: #{local_encoder_forward.1} parent=1 // pred_check
      _
    $region11: #{local_encoder_forward.1} parent=1 // pred_check_branch
      %18 = sbr.rel (0) target = $region13
    $region12: #{local_encoder_forward.1} parent=1 // pred_region
      _
    $region13: #{local_encoder_forward.1} parent=1 // pred_fallthru
      _
    // Predicated region
    $region14: #{local_encoder_forward.1} parent=1 // pred_check
      _
    $region15: #{local_encoder_forward.1} parent=1 // pred_check_branch
      %20 = sbr.rel (0) target = $region17
    $region16: #{local_encoder_forward.1} parent=1 // pred_region
      %s22 = ssub.s32 20480, 20480
      %23 = vsyncadd [#allocation3], %s22
      %s24 = sshll.u32 [#allocation2], 4
      %s25 = int_to_ptr.vmem [resolvable:$true] %s24
      %30 = dma.hbm_to_vmem [thread:$0]  %s3, 20480, %s25, [#allocation3], 640, 640, 40
    $region17: #{local_encoder_forward.1} parent=1 // pred_fallthru
      _
    // Predicated region
    $region18: #{local_encoder_forward.1} parent=1 // pred_check
      _
    $region19: #{local_encoder_forward.1} parent=1 // pred_check_branch
      %32 = sbr.rel (0) target = $region21
    $region20: #{local_encoder_forward.1} parent=1 // pred_region
      _
    $region21: #{local_encoder_forward.1} parent=1 // pred_fallthru
      _
    // Predicated region
    $region22: #{local_encoder_forward.1} parent=1 // pred_check
      _
    $region23: #{local_encoder_forward.1} parent=1 // pred_check_branch
      %34 = sbr.rel (0) target = $region25
    $region24: #{local_encoder_forward.1} parent=1 // pred_region
      _
    $region25: #{local_encoder_forward.1} parent=1 // pred_fallthru
      _
    // Predicated region
    $region26: #{local_encoder_forward.1} parent=1 // pred_check
      _
    $region27: #{local_encoder_forward.1} parent=1 // pred_check_branch
      %36 = sbr.rel (0) target = $region29
    $region28: #{local_encoder_forward.1} parent=1 // pred_region
      %37 = dma.done [#allocation3], 20480
    $region29: #{local_encoder_forward.1} parent=1 // pred_fallthru
      _
    %v39 = vld [vmem:[%s0] sm:$0xff]
    %v40 = vld [vmem:[%s0 + $0x8] sm:$0xff]
    %v41 = vlaneseq
    %v42 = vand.u32 %v41, 127
    %43 = vset.pattern.permute.xlu0 0
    %44 = vperm.xlu0 %43, %v39
    %v45 = vpop.permute.xlu0 %44
    %46 = vset.pattern.permute.xlu0 0
    %47 = vperm.xlu0 %46, %v40
    %v48 = vpop.permute.xlu0 %47
    %vm49 = vcmp.eq.s32.totalorder %v42, %v45
    %vm50 = vcmp.eq.s32.totalorder %v42, %v48
    %v51 = vsel %vm49, 1.0, 0.0
    %v52 = vsel %vm50, 1.0, 0.0
    %v53 = vld [vmem:[%s2] sm:$0xff]
    %v54 = vld [vmem:[%s2 + $0x8] sm:$0xff]
    %v55 = vld [vmem:[%s2 + $0x10] sm:$0xff]
    %v56 = vld [vmem:[%s2 + $0x18] sm:$0xff]
    %v57 = vld [vmem:[%s2 + $0x20] sm:$0xff]
    %v58 = vld [vmem:[%s2 + $0x28] sm:$0xff]
    %v59 = vld [vmem:[%s2 + $0x30] sm:$0xff]
    %v60 = vld [vmem:[%s2 + $0x38] sm:$0xff]
    %v61 = vld [vmem:[%s2 + $0x40] sm:$0xff]
    %vm62 = vcmask 523264
    %v64 = vsel %vm62, %v51, 0
    %v67 = vsel %vm62, %v52, 0
    %69 = vmatprep.subr.mxu0 0.0
    %70 = vmatpush1.msra.mxu0 %v53
    %71 = vmatprep.subr.mxu0 0.0
    %72 = vmatpush1.msra.mxu0 %v54
    %73 = vmatprep.subr.mxu0 0.0
    %74 = vmatpush1.msra.mxu0 %v55
    %75 = vmatprep.subr.mxu0 0.0
    %76 = vmatpush1.msra.mxu0 %v56
    %77 = vmatprep.subr.mxu0 0.0
    %78 = vmatpush1.msra.mxu0 %v57
    %79 = vmatprep.subr.mxu0 0.0
    %80 = vmatpush1.msra.mxu0 %v58
    %81 = vmatprep.subr.mxu0 0.0
    %82 = vmatpush1.msra.mxu0 %v59
    %83 = vmatprep.subr.mxu0 0.0
    %84 = vmatpush1.msra.mxu0 %v60
    %85 = vmatprep.subr.mxu0 0.0
    %86 = vmatpush1.msra.mxu0 0.0
    %87 = vmatprep.subr.mxu0 0.0
    %88 = vmatpush1.msra.mxu0 0.0
    %89 = vmatprep.subr.mxu0 0.0
    %90 = vmatpush1.msra.mxu0 0.0
    %91 = vmatprep.subr.mxu0 0.0
    %92 = vmatpush1.msra.mxu0 0.0
    %93 = vmatprep.subr.mxu0 0.0
    %94 = vmatpush1.msra.mxu0 0.0
    %95 = vmatprep.subr.mxu0 0.0
    %96 = vmatpush1.msra.mxu0 0.0
    %97 = vmatprep.subr.mxu0 0.0
    %98 = vmatpush1.msra.mxu0 0.0
    %99 = vmatprep.subr.mxu0 0.0
    %100 = vmatpush1.msra.mxu0 0.0
    %101 = vmatprep.subr.mxu0 0.0
    %102 = vmatpush1.msra.mxu0 0.0
    %103 = vmatprep.subr.mxu0 0.0
    %104 = vmatpush1.msra.mxu0 0.0
    %105 = vmatprep.subr.mxu0 0.0
    %106 = vmatpush1.msra.mxu0 0.0
    %107 = vmatprep.subr.mxu0 0.0
    %108 = vmatpush1.msra.mxu0 0.0
    %109 = vmatprep.subr.mxu0 0.0
    %110 = vmatpush1.msra.mxu0 0.0
    %111 = vmatprep.subr.mxu0 0.0
    %112 = vmatpush1.msra.mxu0 0.0
    %113 = vmatprep.subr.mxu0 0.0
    %114 = vmatpush1.msra.mxu0 0.0
    %115 = vmatprep.subr.mxu0 0.0
    %116 = vmatpush1.msra.mxu0 0.0
    %117 = vmatprep.subr.mxu0 0.0
    %118 = vmatpush1.msra.mxu0 0.0
    %119 = vmatprep.subr.mxu0 0.0
    %120 = vmatpush1.msra.mxu0 0.0
    %121 = vmatprep.subr.mxu0 0.0
    %122 = vmatpush1.msra.mxu0 0.0
    %123 = vmatprep.subr.mxu0 0.0
    %124 = vmatpush1.msra.mxu0 0.0
    %125 = vmatprep.subr.mxu0 0.0
    %126 = vmatpush1.msra.mxu0 0.0
    %127 = vmatprep.subr.mxu0 0.0
    %128 = vmatpush1.msra.mxu0 0.0
    %129 = vmatprep.subr.mxu0 0.0
    %130 = vmatpush1.msra.mxu0 0.0
    %131 = vmatprep.subr.mxu0 0.0
    %132 = vmatpush1.msra.mxu0 0.0
    %133 = vmatprep.mubr.f32.mxu0 0.0
    %134 = vmatmul.mubr.f32.gmra.mrb[0].mxu0 %v64
    %v135 = vpop.f32.mrb[0].mxu0
    %v136 = vadd.f32 %v61, %v135
    %v137 = vpop.f32.mrb[0].mxu0
    %138 = vmatprep.mubr.f32.mxu0 0.0
    %139 = vmatmul.mubr.f32.gmra.mrb[0].mxu0 %v67
    %v140 = vpop.f32.mrb[0].mxu0
    %v141 = vadd.f32 %v61, %v140
    %v142 = vpop.f32.mrb[0].mxu0
    %143 = vdwg.mxu0
    %v144 = vld [vmem:[%s2 + $0x50] sm:$0x1]
    %v145 = vlaneseq
    %v146 = vshrl.u32 %v145, 7
    %v147 = vsub.s32 0, %v146
    %v148 = vrot.slane %v144, %v147
    %v149 = vadd.f32 %v136, %v148
    %v150 = vadd.f32 %v141, %v148
    %v151 = vld [vmem:[%s2 + $0x51] sm:$0x1]
    %v152 = vld [vmem:[%s2 + $0x52] sm:$0x1]
    %153 = vadd.xlane.f32.xlu0 %v149
    %v154 = vpop.xlane.xlu0 %153
    %155 = vadd.xlane.f32.xlu0 %v150
    %v156 = vpop.xlane.xlu0 %155
    %v157 = vrcp.pop 128.0
    %v158 = vmul.f32 %v154, %v157
    %v159 = vmul.f32 %v156, %v157
    %v160 = vsub.f32 %v149, %v158
    %v161 = vsub.f32 %v150, %v159
    %v162 = vmul.f32 %v160, %v160
    %v163 = vmul.f32 %v161, %v161
    %164 = vadd.xlane.f32.xlu0 %v162
    %v165 = vpop.xlane.xlu0 %164
    %166 = vadd.xlane.f32.xlu0 %v163
    %v167 = vpop.xlane.xlu0 %166
    %v168 = vmul.f32 %v165, %v157
    %v169 = vmul.f32 %v167, %v157
    %v170 = vadd.f32 %v168, 1e-12
    %v171 = vadd.f32 %v169, 1e-12
    %v172 = vrsqrt.pop %v170
    %v173 = vrsqrt.pop %v171
    %v174 = vmul.f32 %v160, %v172
    %v175 = vmul.f32 %v161, %v173
    %v176 = vlaneseq
    %v177 = vshrl.u32 %v176, 7
    %v178 = vsub.s32 0, %v177
    %v179 = vrot.slane %v151, %v178
    %v180 = vmul.f32 %v174, %v179
    %v181 = vmul.f32 %v175, %v179
    %v182 = vlaneseq
    %v183 = vshrl.u32 %v182, 7
    %v184 = vsub.s32 0, %v183
    %v185 = vrot.slane %v152, %v184
    %v186 = vadd.f32 %v180, %v185
    %v187 = vadd.f32 %v181, %v185
    %v188 = vld [vmem:[%s1] sm:$0xff]
    %v189 = vld [vmem:[%s1 + $0x8] sm:$0xff]
    %v190 = vld [vmem:[%s1 + $0x10] sm:$0xff]
    %v191 = vld [vmem:[%s1 + $0x18] sm:$0xff]
    %v192 = vpack.c.bf16 %v187, %v186
    %v193 = vld [vmem:[#allocation2] sm:$0xff]
    %v194 = vld [vmem:[#allocation2 + $0x8] sm:$0xff]
    %v195 = vld [vmem:[#allocation2 + $0x10] sm:$0xff]
    %v196 = vld [vmem:[#allocation2 + $0x28] sm:$0xff]
    %v197 = vld [vmem:[#allocation2 + $0x30] sm:$0xff]
    %v198 = vld [vmem:[#allocation2 + $0x38] sm:$0xff]
    %v199 = vld [vmem:[#allocation2 + $0x50] sm:$0xff]
    %v200 = vld [vmem:[#allocation2 + $0x58] sm:$0xff]
    %v201 = vld [vmem:[#allocation2 + $0x60] sm:$0xff]
    %v202 = vld [vmem:[#allocation2 + $0x78] sm:$0xff]
    %v203 = vld [vmem:[#allocation2 + $0x80] sm:$0xff]
    %v204 = vld [vmem:[#allocation2 + $0x88] sm:$0xff]
    %v205 = vld [vmem:[#allocation2 + $0xa0] sm:$0xff]
    %v206 = vld [vmem:[#allocation2 + $0xa8] sm:$0xff]
    %v207 = vld [vmem:[#allocation2 + $0xb0] sm:$0xff]
    %v208 = vld [vmem:[#allocation2 + $0xc8] sm:$0xff]
    %v209 = vld [vmem:[#allocation2 + $0xd0] sm:$0xff]
    %v210 = vld [vmem:[#allocation2 + $0xd8] sm:$0xff]
    %v211 = vld [vmem:[#allocation2 + $0xf0] sm:$0xff]
    %v212 = vld [vmem:[#allocation2 + $0xf8] sm:$0xff]
    %v213 = vld [vmem:[#allocation2 + $0x100] sm:$0xff]
    %v214 = vld [vmem:[#allocation2 + $0x118] sm:$0xff]
    %v215 = vld [vmem:[#allocation2 + $0x120] sm:$0xff]
    %v216 = vld [vmem:[#allocation2 + $0x128] sm:$0xff]
    %v217 = vld [vmem:[#allocation2 + $0x140] sm:$0xff]
    %v218 = vld [vmem:[#allocation2 + $0x148] sm:$0xff]
    %v219 = vld [vmem:[#allocation2 + $0x150] sm:$0xff]
    %v220 = vld [vmem:[#allocation2 + $0x168] sm:$0xff]
    %v221 = vld [vmem:[#allocation2 + $0x170] sm:$0xff]
    %v222 = vld [vmem:[#allocation2 + $0x178] sm:$0xff]
    %v223 = vld [vmem:[#allocation2 + $0x190] sm:$0xff]
    %v224 = vld [vmem:[#allocation2 + $0x198] sm:$0xff]
    %v225 = vld [vmem:[#allocation2 + $0x1a0] sm:$0xff]
    %v226 = vld [vmem:[#allocation2 + $0x1b8] sm:$0xff]
    %v227 = vld [vmem:[#allocation2 + $0x1c0] sm:$0xff]
    %v228 = vld [vmem:[#allocation2 + $0x1c8] sm:$0xff]
    %v229 = vld [vmem:[#allocation2 + $0x1e0] sm:$0xff]
    %v230 = vld [vmem:[#allocation2 + $0x1e8] sm:$0xff]
    %v231 = vld [vmem:[#allocation2 + $0x1f0] sm:$0xff]
    %v232 = vld [vmem:[#allocation2 + $0x208] sm:$0xff]
    %v233 = vld [vmem:[#allocation2 + $0x210] sm:$0xff]
    %v234 = vld [vmem:[#allocation2 + $0x218] sm:$0xff]
    %v235 = vld [vmem:[#allocation2 + $0x230] sm:$0xff]
    %v236 = vld [vmem:[#allocation2 + $0x238] sm:$0xff]
    %v237 = vld [vmem:[#allocation2 + $0x240] sm:$0xff]
    %v238 = vld [vmem:[#allocation2 + $0x258] sm:$0xff]
    %v239 = vld [vmem:[#allocation2 + $0x260] sm:$0xff]
    %v240 = vld [vmem:[#allocation2 + $0x268] sm:$0xff]
    %v241 = vld [vmem:[%s5] ss:$8 sm:$0xf]
    %v242 = vld [vmem:[%s5] ss:$8 sm:$0x30]
    %v243 = vor.u32 %v241, %v242
    %v245 = vlaneseq
    %v246 = vshrl.u32 %v245, 7
    %v247 = vsub.s32 0, %v246
    %v248 = vrot.slane %v243, %v247
    %v249 = vlaneseq
    %v250 = vshrl.u32 %v249, 7
    %v251 = vsub.s32 1, %v250
    %v252 = vrot.slane %v243, %v251
    %v253 = vlaneseq
    %v254 = vshrl.u32 %v253, 7
    %v255 = vsub.s32 2, %v254
    %v256 = vrot.slane %v243, %v255
    %v257 = vlaneseq
    %v258 = vshrl.u32 %v257, 7
    %v259 = vsub.s32 3, %v258
    %v260 = vrot.slane %v243, %v259
    %v261 = vlaneseq
    %v262 = vshrl.u32 %v261, 7
    %v263 = vsub.s32 4, %v262
    %v264 = vrot.slane %v243, %v263
    %v265 = vlaneseq
    %v266 = vshrl.u32 %v265, 7
    %v267 = vsub.s32 5, %v266
    %v268 = vrot.slane %v243, %v267
    %v323 = vunpack.c.l.b16 %v193
    %v324 = vunpack.c.h.b16 %v193
    %v325 = vunpack.c.l.b16 %v194
    %v326 = vunpack.c.h.b16 %v194
    %v327 = vunpack.c.l.b16 %v195
    %v328 = vunpack.c.h.b16 %v195
    %v329 = vunpack.c.l.b16 %v196
    %v330 = vunpack.c.h.b16 %v196
    %v331 = vunpack.c.l.b16 %v197
    %v332 = vunpack.c.h.b16 %v197
    %v333 = vunpack.c.l.b16 %v198
    %v334 = vunpack.c.h.b16 %v198
    %v335 = vunpack.c.l.b16 %v199
    %v336 = vunpack.c.h.b16 %v199
    %v337 = vunpack.c.l.b16 %v200
    %v338 = vunpack.c.h.b16 %v200
    %v339 = vunpack.c.l.b16 %v201
    %v340 = vunpack.c.h.b16 %v201
    %v341 = vunpack.c.l.b16 %v202
    %v342 = vunpack.c.h.b16 %v202
    %v343 = vunpack.c.l.b16 %v203
    %v344 = vunpack.c.h.b16 %v203
    %v345 = vunpack.c.l.b16 %v204
    %v346 = vunpack.c.h.b16 %v204
    %v347 = vunpack.c.l.b16 %v205
    %v348 = vunpack.c.h.b16 %v205
    %v349 = vunpack.c.l.b16 %v206
    %v350 = vunpack.c.h.b16 %v206
    %v351 = vunpack.c.l.b16 %v207
    %v352 = vunpack.c.h.b16 %v207
    %v353 = vunpack.c.l.b16 %v208
    %v354 = vunpack.c.h.b16 %v208
    %v355 = vunpack.c.l.b16 %v209
    %v356 = vunpack.c.h.b16 %v209
    %v357 = vunpack.c.l.b16 %v210
    %v358 = vunpack.c.h.b16 %v210
    %v359 = vunpack.c.l.b16 %v211
    %v360 = vunpack.c.h.b16 %v211
    %v361 = vunpack.c.l.b16 %v212
    %v362 = vunpack.c.h.b16 %v212
    %v363 = vunpack.c.l.b16 %v213
    %v364 = vunpack.c.h.b16 %v213
    %v365 = vunpack.c.l.b16 %v214
    %v366 = vunpack.c.h.b16 %v214
    %v367 = vunpack.c.l.b16 %v215
    %v368 = vunpack.c.h.b16 %v215
    %v369 = vunpack.c.l.b16 %v216
    %v370 = vunpack.c.h.b16 %v216
    %v371 = vunpack.c.l.b16 %v217
    %v372 = vunpack.c.h.b16 %v217
    %v373 = vunpack.c.l.b16 %v218
    %v374 = vunpack.c.h.b16 %v218
    %v375 = vunpack.c.l.b16 %v219
    %v376 = vunpack.c.h.b16 %v219
    %v377 = vunpack.c.l.b16 %v220
    %v378 = vunpack.c.h.b16 %v220
    %v379 = vunpack.c.l.b16 %v221
    %v380 = vunpack.c.h.b16 %v221
    %v381 = vunpack.c.l.b16 %v222
    %v382 = vunpack.c.h.b16 %v222
    %v383 = vunpack.c.l.b16 %v223
    %v384 = vunpack.c.h.b16 %v223
    %v385 = vunpack.c.l.b16 %v224
    %v386 = vunpack.c.h.b16 %v224
    %v387 = vunpack.c.l.b16 %v225
    %v388 = vunpack.c.h.b16 %v225
    %v389 = vunpack.c.l.b16 %v226
    %v390 = vunpack.c.h.b16 %v226
    %v391 = vunpack.c.l.b16 %v227
    %v392 = vunpack.c.h.b16 %v227
    %v393 = vunpack.c.l.b16 %v228
    %v394 = vunpack.c.h.b16 %v228
    %v395 = vunpack.c.l.b16 %v229
    %v396 = vunpack.c.h.b16 %v229
    %v397 = vunpack.c.l.b16 %v230
    %v398 = vunpack.c.h.b16 %v230
    %v399 = vunpack.c.l.b16 %v231
    %v400 = vunpack.c.h.b16 %v231
    %v401 = vunpack.c.l.b16 %v232
    %v402 = vunpack.c.h.b16 %v232
    %v403 = vunpack.c.l.b16 %v233
    %v404 = vunpack.c.h.b16 %v233
    %v405 = vunpack.c.l.b16 %v234
    %v406 = vunpack.c.h.b16 %v234
    %v407 = vunpack.c.l.b16 %v235
    %v408 = vunpack.c.h.b16 %v235
    %v409 = vunpack.c.l.b16 %v236
    %v410 = vunpack.c.h.b16 %v236
    %v411 = vunpack.c.l.b16 %v237
    %v412 = vunpack.c.h.b16 %v237
    %v413 = vunpack.c.l.b16 %v238
    %v414 = vunpack.c.h.b16 %v238
    %v415 = vunpack.c.l.b16 %v239
    %v416 = vunpack.c.h.b16 %v239
    %v417 = vunpack.c.l.b16 %v240
    %v418 = vunpack.c.h.b16 %v240
    %v419 = vpack.c.b16 %v329, %v323
    %v420 = vpack.c.b16 %v330, %v324
    %v421 = vpack.c.b16 %v331, %v325
    %v422 = vpack.c.b16 %v332, %v326
    %v423 = vpack.c.b16 %v333, %v327
    %v424 = vpack.c.b16 %v334, %v328
    %v425 = vpack.c.b16 %v341, %v335
    %v426 = vpack.c.b16 %v342, %v336
    %v427 = vpack.c.b16 %v343, %v337
    %v428 = vpack.c.b16 %v344, %v338
    %v429 = vpack.c.b16 %v345, %v339
    %v430 = vpack.c.b16 %v346, %v340
    %v431 = vpack.c.b16 %v353, %v347
    %v432 = vpack.c.b16 %v354, %v348
    %v433 = vpack.c.b16 %v355, %v349
    %v434 = vpack.c.b16 %v356, %v350
    %v435 = vpack.c.b16 %v357, %v351
    %v436 = vpack.c.b16 %v358, %v352
    %v437 = vpack.c.b16 %v365, %v359
    %v438 = vpack.c.b16 %v366, %v360
    %v439 = vpack.c.b16 %v367, %v361
    %v440 = vpack.c.b16 %v368, %v362
    %v441 = vpack.c.b16 %v369, %v363
    %v442 = vpack.c.b16 %v370, %v364
    %v443 = vpack.c.b16 %v377, %v371
    %v444 = vpack.c.b16 %v378, %v372
    %v445 = vpack.c.b16 %v379, %v373
    %v446 = vpack.c.b16 %v380, %v374
    %v447 = vpack.c.b16 %v381, %v375
    %v448 = vpack.c.b16 %v382, %v376
    %v449 = vpack.c.b16 %v389, %v383
    %v450 = vpack.c.b16 %v390, %v384
    %v451 = vpack.c.b16 %v391, %v385
    %v452 = vpack.c.b16 %v392, %v386
    %v453 = vpack.c.b16 %v393, %v387
    %v454 = vpack.c.b16 %v394, %v388
    %v455 = vpack.c.b16 %v401, %v395
    %v456 = vpack.c.b16 %v402, %v396
    %v457 = vpack.c.b16 %v403, %v397
    %v458 = vpack.c.b16 %v404, %v398
    %v459 = vpack.c.b16 %v405, %v399
    %v460 = vpack.c.b16 %v406, %v400
    %v461 = vpack.c.b16 %v413, %v407
    %v462 = vpack.c.b16 %v414, %v408
    %v463 = vpack.c.b16 %v415, %v409
    %v464 = vpack.c.b16 %v416, %v410
    %v465 = vpack.c.b16 %v417, %v411
    %v466 = vpack.c.b16 %v418, %v412
    %515 = vmatprep.subr.bf16.mxu0 %v420
    %516 = vmatpush1.bf16.msra.mxu0 %v419
    %517 = vmatprep.subr.bf16.mxu0 %v426
    %518 = vmatpush1.bf16.msra.mxu0 %v425
    %519 = vmatprep.subr.bf16.mxu0 %v432
    %520 = vmatpush1.bf16.msra.mxu0 %v431
    %521 = vmatprep.subr.bf16.mxu0 %v438
    %522 = vmatpush1.bf16.msra.mxu0 %v437
    %523 = vmatprep.subr.bf16.mxu0 %v444
    %524 = vmatpush1.bf16.msra.mxu0 %v443
    %525 = vmatprep.subr.bf16.mxu0 %v450
    %526 = vmatpush1.bf16.msra.mxu0 %v449
    %527 = vmatprep.subr.bf16.mxu0 %v456
    %528 = vmatpush1.bf16.msra.mxu0 %v455
    %529 = vmatprep.subr.bf16.mxu0 %v462
    %530 = vmatpush1.bf16.msra.mxu0 %v461
    %531 = vmatprep.subr.bf16.mxu0 0
    %532 = vmatpush1.bf16.msra.mxu0 0
    %533 = vmatprep.subr.bf16.mxu0 0
    %534 = vmatpush1.bf16.msra.mxu0 0
    %535 = vmatprep.subr.bf16.mxu0 0
    %536 = vmatpush1.bf16.msra.mxu0 0
    %537 = vmatprep.subr.bf16.mxu0 0
    %538 = vmatpush1.bf16.msra.mxu0 0
    %539 = vmatprep.subr.bf16.mxu0 0
    %540 = vmatpush1.bf16.msra.mxu0 0
    %541 = vmatprep.subr.bf16.mxu0 0
    %542 = vmatpush1.bf16.msra.mxu0 0
    %543 = vmatprep.subr.bf16.mxu0 0
    %544 = vmatpush1.bf16.msra.mxu0 0
    %545 = vmatprep.subr.bf16.mxu0 0
    %546 = vmatpush1.bf16.msra.mxu0 0
    %547 = vmatprep.mubr.bf16.mxu0 0
    %548 = vmatmul.mubr.bf16.gmra.mrb[0].mxu0 %v192
    %v549 = vpop.f32.mrb[0].mxu0
    %v550 = vadd.f32 %v248, %v549
    %v551 = vpop.f32.mrb[0].mxu0
    %v552 = vadd.f32 %v252, %v551
    %v553 = vpop.f32.mrb[0].mxu0
    %v554 = vadd.f32 %v248, %v553
    %v555 = vpop.f32.mrb[0].mxu0
    %v556 = vadd.f32 %v252, %v555
    %557 = vdwg.mxu0
    %558 = vmatprep.subr.bf16.mxu0 %v422
    %559 = vmatpush1.bf16.msra.mxu0 %v421
    %560 = vmatprep.subr.bf16.mxu0 %v428
    %561 = vmatpush1.bf16.msra.mxu0 %v427
    %562 = vmatprep.subr.bf16.mxu0 %v434
    %563 = vmatpush1.bf16.msra.mxu0 %v433
    %564 = vmatprep.subr.bf16.mxu0 %v440
    %565 = vmatpush1.bf16.msra.mxu0 %v439
    %566 = vmatprep.subr.bf16.mxu0 %v446
    %567 = vmatpush1.bf16.msra.mxu0 %v445
    %568 = vmatprep.subr.bf16.mxu0 %v452
    %569 = vmatpush1.bf16.msra.mxu0 %v451
    %570 = vmatprep.subr.bf16.mxu0 %v458
    %571 = vmatpush1.bf16.msra.mxu0 %v457
    %572 = vmatprep.subr.bf16.mxu0 %v464
    %573 = vmatpush1.bf16.msra.mxu0 %v463
    %574 = vmatprep.subr.bf16.mxu0 0
    %575 = vmatpush1.bf16.msra.mxu0 0
    %576 = vmatprep.subr.bf16.mxu0 0
    %577 = vmatpush1.bf16.msra.mxu0 0
    %578 = vmatprep.subr.bf16.mxu0 0
    %579 = vmatpush1.bf16.msra.mxu0 0
    %580 = vmatprep.subr.bf16.mxu0 0
    %581 = vmatpush1.bf16.msra.mxu0 0
    %582 = vmatprep.subr.bf16.mxu0 0
    %583 = vmatpush1.bf16.msra.mxu0 0
    %584 = vmatprep.subr.bf16.mxu0 0
    %585 = vmatpush1.bf16.msra.mxu0 0
    %586 = vmatprep.subr.bf16.mxu0 0
    %587 = vmatpush1.bf16.msra.mxu0 0
    %588 = vmatprep.subr.bf16.mxu0 0
    %589 = vmatpush1.bf16.msra.mxu0 0
    %590 = vmatprep.mubr.bf16.mxu0 0
    %591 = vmatmul.mubr.bf16.gmra.mrb[0].mxu0 %v192
    %v592 = vpop.f32.mrb[0].mxu0
    %v593 = vadd.f32 %v256, %v592
    %v594 = vpop.f32.mrb[0].mxu0
    %v595 = vadd.f32 %v260, %v594
    %v596 = vpop.f32.mrb[0].mxu0
    %v597 = vadd.f32 %v256, %v596
    %v598 = vpop.f32.mrb[0].mxu0
    %v599 = vadd.f32 %v260, %v598
    %600 = vdwg.mxu0
    %601 = vmatprep.subr.bf16.mxu0 %v424
    %602 = vmatpush1.bf16.msra.mxu0 %v423
    %603 = vmatprep.subr.bf16.mxu0 %v430
    %604 = vmatpush1.bf16.msra.mxu0 %v429
    %605 = vmatprep.subr.bf16.mxu0 %v436
    %606 = vmatpush1.bf16.msra.mxu0 %v435
    %607 = vmatprep.subr.bf16.mxu0 %v442
    %608 = vmatpush1.bf16.msra.mxu0 %v441
    %609 = vmatprep.subr.bf16.mxu0 %v448
    %610 = vmatpush1.bf16.msra.mxu0 %v447
    %611 = vmatprep.subr.bf16.mxu0 %v454
    %612 = vmatpush1.bf16.msra.mxu0 %v453
    %613 = vmatprep.subr.bf16.mxu0 %v460
    %614 = vmatpush1.bf16.msra.mxu0 %v459
    %615 = vmatprep.subr.bf16.mxu0 %v466
    %616 = vmatpush1.bf16.msra.mxu0 %v465
    %617 = vmatprep.subr.bf16.mxu0 0
    %618 = vmatpush1.bf16.msra.mxu0 0
    %619 = vmatprep.subr.bf16.mxu0 0
    %620 = vmatpush1.bf16.msra.mxu0 0
    %621 = vmatprep.subr.bf16.mxu0 0
    %622 = vmatpush1.bf16.msra.mxu0 0
    %623 = vmatprep.subr.bf16.mxu0 0
    %624 = vmatpush1.bf16.msra.mxu0 0
    %625 = vmatprep.subr.bf16.mxu0 0
    %626 = vmatpush1.bf16.msra.mxu0 0
    %627 = vmatprep.subr.bf16.mxu0 0
    %628 = vmatpush1.bf16.msra.mxu0 0
    %629 = vmatprep.subr.bf16.mxu0 0
    %630 = vmatpush1.bf16.msra.mxu0 0
    %631 = vmatprep.subr.bf16.mxu0 0
    %632 = vmatpush1.bf16.msra.mxu0 0
    %633 = vmatprep.mubr.bf16.mxu0 0
    %634 = vmatmul.mubr.bf16.gmra.mrb[0].mxu0 %v192
    %v635 = vpop.f32.mrb[0].mxu0
    %v636 = vadd.f32 %v264, %v635
    %v637 = vpop.f32.mrb[0].mxu0
    %v638 = vadd.f32 %v268, %v637
    %v639 = vpop.f32.mrb[0].mxu0
    %v640 = vadd.f32 %v264, %v639
    %v641 = vpop.f32.mrb[0].mxu0
    %v642 = vadd.f32 %v268, %v641
    %643 = vdwg.mxu0
    %v644 = vpack.c.bf16 %v554, %v550
    %v645 = vpack.c.bf16 %v556, %v552
    %v646 = vpack.c.bf16 %v597, %v593
    %v647 = vpack.c.bf16 %v599, %v595
    %v648 = vpack.c.bf16 %v640, %v636
    %v649 = vpack.c.bf16 %v642, %v638
    %650 = vmatprep.subr.bf16.mxu0 0
    %651 = vmatpush1.bf16.xpose.msra.mxu0 %v646
    %652 = vmatprep.subr.bf16.mxu0 0
    %653 = vmatpush1.bf16.xpose.msra.mxu0 %v647
    %654 = vmatprep.subr.bf16.mxu0 0
    %655 = vmatpush1.bf16.xpose.msra.mxu0 0
    %656 = vmatprep.subr.bf16.mxu0 0
    %657 = vmatpush1.bf16.xpose.msra.mxu0 0
    %658 = vmatprep.subr.bf16.mxu0 0
    %659 = vmatpush1.bf16.xpose.msra.mxu0 0
    %660 = vmatprep.subr.bf16.mxu0 0
    %661 = vmatpush1.bf16.xpose.msra.mxu0 0
    %662 = vmatprep.subr.bf16.mxu0 0
    %663 = vmatpush1.bf16.xpose.msra.mxu0 0
    %664 = vmatprep.subr.bf16.mxu0 0
    %665 = vmatpush1.bf16.xpose.msra.mxu0 0
    %666 = vmatprep.subr.bf16.mxu0 0
    %667 = vmatpush1.bf16.xpose.msra.mxu0 0
    %668 = vmatprep.subr.bf16.mxu0 0
    %669 = vmatpush1.bf16.xpose.msra.mxu0 0
    %670 = vmatprep.subr.bf16.mxu0 0
    %671 = vmatpush1.bf16.xpose.msra.mxu0 0
    %672 = vmatprep.subr.bf16.mxu0 0
    %673 = vmatpush1.bf16.xpose.msra.mxu0 0
    %674 = vmatprep.subr.bf16.mxu0 0
    %675 = vmatpush1.bf16.xpose.msra.mxu0 0
    %676 = vmatprep.subr.bf16.mxu0 0
    %677 = vmatpush1.bf16.xpose.msra.mxu0 0
    %678 = vmatprep.subr.bf16.mxu0 0
    %679 = vmatpush1.bf16.xpose.msra.mxu0 0
    %680 = vmatprep.subr.bf16.mxu0 0
    %681 = vmatpush1.bf16.xpose.msra.mxu0 0
    %682 = vmatprep.mubr.bf16.mxu0 0
    %683 = vmatmul.mubr.bf16.gmra.mrb[0].mxu0 %v644
    %v684 = vpop.f32.mrb[0].mxu0
    %v685 = vadd.f32 %v188, %v684
    %v686 = vpop.f32.mrb[0].mxu0
    %v687 = vpop.f32.mrb[0].mxu0
    %v688 = vadd.f32 %v189, %v687
    %v689 = vpop.f32.mrb[0].mxu0
    %690 = vmatprep.mubr.bf16.mxu0 0
    %691 = vmatmul.mubr.bf16.gmra.mrb[0].mxu0 %v645
    %v692 = vpop.f32.mrb[0].mxu0
    %v693 = vadd.f32 %v190, %v692
    %v694 = vpop.f32.mrb[0].mxu0
    %v695 = vpop.f32.mrb[0].mxu0
    %v696 = vadd.f32 %v191, %v695
    %v697 = vpop.f32.mrb[0].mxu0
    %698 = vdwg.mxu0
    %vm699 = vcmask 261120
    %v700 = vsel %vm699, %v685, -inf
    %701 = vmax.xlane.f32.xlu0 %v700
    %v702 = vpop.xlane.xlu0 %701
    %v703 = vsel %vm699, %v688, -inf
    %704 = vmax.xlane.f32.xlu0 %v703
    %v705 = vpop.xlane.xlu0 %704
    %v706 = vsel %vm699, %v693, -inf
    %707 = vmax.xlane.f32.xlu0 %v706
    %v708 = vpop.xlane.xlu0 %707
    %v709 = vsel %vm699, %v696, -inf
    %710 = vmax.xlane.f32.xlu0 %v709
    %v711 = vpop.xlane.xlu0 %710
    %v712 = vsub.f32 %v685, %v702
    %v713 = vsub.f32 %v688, %v705
    %v714 = vsub.f32 %v693, %v708
    %v715 = vsub.f32 %v696, %v711
    %v716 = vmul.f32 %v712, 1.442695
    %v717 = vpow.pop %v716
    %v718 = vmul.f32 %v713, 1.442695
    %v719 = vpow.pop %v718
    %v720 = vmul.f32 %v714, 1.442695
    %v721 = vpow.pop %v720
    %v722 = vmul.f32 %v715, 1.442695
    %v723 = vpow.pop %v722
    %v724 = vsel %vm699, %v717, 0.0
    %725 = vadd.xlane.f32.xlu0 %v724
    %v726 = vpop.xlane.xlu0 %725
    %v727 = vsel %vm699, %v719, 0.0
    %728 = vadd.xlane.f32.xlu0 %v727
    %v729 = vpop.xlane.xlu0 %728
    %v730 = vsel %vm699, %v721, 0.0
    %731 = vadd.xlane.f32.xlu0 %v730
    %v732 = vpop.xlane.xlu0 %731
    %v733 = vsel %vm699, %v723, 0.0
    %734 = vadd.xlane.f32.xlu0 %v733
    %v735 = vpop.xlane.xlu0 %734
    %v736 = vrcp.pop %v726
    %v737 = vrcp.pop %v729
    %v738 = vrcp.pop %v732
    %v739 = vrcp.pop %v735
    %v740 = vmul.f32 %v717, %v736
    %v741 = vmul.f32 %v719, %v737
    %v742 = vmul.f32 %v721, %v738
    %v743 = vmul.f32 %v723, %v739
    %v744 = vpack.c.bf16 %v741, %v740
    %v745 = vpack.c.bf16 %v743, %v742
    %v747 = vsel %vm699, %v744, 0
    %v750 = vsel %vm699, %v745, 0
    %752 = vmatprep.subr.bf16.mxu0 0
    %753 = vmatpush1.bf16.msra.mxu0 %v648
    %754 = vmatprep.subr.bf16.mxu0 0
    %755 = vmatpush1.bf16.msra.mxu0 %v649
    %756 = vmatprep.subr.bf16.mxu0 0
    %757 = vmatpush1.bf16.msra.mxu0 0
    %758 = vmatprep.subr.bf16.mxu0 0
    %759 = vmatpush1.bf16.msra.mxu0 0
    %760 = vmatprep.subr.bf16.mxu0 0
    %761 = vmatpush1.bf16.msra.mxu0 0
    %762 = vmatprep.subr.bf16.mxu0 0
    %763 = vmatpush1.bf16.msra.mxu0 0
    %764 = vmatprep.subr.bf16.mxu0 0
    %765 = vmatpush1.bf16.msra.mxu0 0
    %766 = vmatprep.subr.bf16.mxu0 0
    %767 = vmatpush1.bf16.msra.mxu0 0
    %768 = vmatprep.subr.bf16.mxu0 0
    %769 = vmatpush1.bf16.msra.mxu0 0
    %770 = vmatprep.subr.bf16.mxu0 0
    %771 = vmatpush1.bf16.msra.mxu0 0
    %772 = vmatprep.subr.bf16.mxu0 0
    %773 = vmatpush1.bf16.msra.mxu0 0
    %774 = vmatprep.subr.bf16.mxu0 0
    %775 = vmatpush1.bf16.msra.mxu0 0
    %776 = vmatprep.subr.bf16.mxu0 0
    %777 = vmatpush1.bf16.msra.mxu0 0
    %778 = vmatprep.subr.bf16.mxu0 0
    %779 = vmatpush1.bf16.msra.mxu0 0
    %780 = vmatprep.subr.bf16.mxu0 0
    %781 = vmatpush1.bf16.msra.mxu0 0
    %782 = vmatprep.subr.bf16.mxu0 0
    %783 = vmatpush1.bf16.msra.mxu0 0
    %784 = vmatprep.mubr.bf16.mxu0 0
    %785 = vmatmul.mubr.bf16.gmra.mrb[0].mxu0 %v747
    %v786 = vpop.f32.mrb[0].mxu0
    %v787 = vadd.f32 0.0, %v786
    %v788 = vpop.f32.mrb[0].mxu0
    %v789 = vpop.f32.mrb[0].mxu0
    %v790 = vadd.f32 0.0, %v789
    %v791 = vpop.f32.mrb[0].mxu0
    %792 = vmatprep.mubr.bf16.mxu0 0
    %793 = vmatmul.mubr.bf16.gmra.mrb[0].mxu0 %v750
    %v794 = vpop.f32.mrb[0].mxu0
    %v795 = vadd.f32 0.0, %v794
    %v796 = vpop.f32.mrb[0].mxu0
    %v797 = vpop.f32.mrb[0].mxu0
    %v798 = vadd.f32 0.0, %v797
    %v799 = vpop.f32.mrb[0].mxu0
    %800 = vdwg.mxu0
    %v801 = vpack.c.bf16 %v790, %v787
    %v802 = vpack.c.bf16 %v798, %v795
    %v803 = vld [vmem:[%s4] sm:$0xf]
    %v804 = vld [vmem:[%s4 + $0x4] sm:$0xf]
    %v805 = vld [vmem:[%s4 + $0x8] sm:$0xf]
    %v806 = vld [vmem:[%s4 + $0xc] sm:$0xf]
    %v807 = vld [vmem:[%s4 + $0x10] sm:$0xf]
    %v808 = vld [vmem:[%s4 + $0x14] sm:$0xf]
    %v809 = vld [vmem:[%s4 + $0x18] sm:$0xf]
    %v810 = vld [vmem:[%s4 + $0x1c] sm:$0xf]
    %v811 = vld [vmem:[%s4 + $0x20] sm:$0xf]
    %v812 = vld [vmem:[%s4 + $0x24] sm:$0xf]
    %v813 = vld [vmem:[%s4 + $0x28] sm:$0xf]
    %v814 = vld [vmem:[%s4 + $0x2c] sm:$0xf]
    %v815 = vld [vmem:[%s4 + $0x30] sm:$0xf]
    %v816 = vld [vmem:[%s4 + $0x34] sm:$0xf]
    %v817 = vld [vmem:[%s4 + $0x38] sm:$0xf]
    %v818 = vld [vmem:[%s4 + $0x3c] sm:$0xf]
    %v819 = vld [vmem:[%s4 + $0x40] sm:$0xf]
    %v820 = vld [vmem:[%s4 + $0x44] sm:$0xf]
    %v821 = vld [vmem:[%s4 + $0x48] sm:$0xf]
    %v822 = vld [vmem:[%s4 + $0x4c] sm:$0xf]
    %v823 = vld [vmem:[%s4 + $0x50] sm:$0xf]
    %v824 = vld [vmem:[%s4 + $0x54] sm:$0xf]
    %v825 = vld [vmem:[%s4 + $0x58] sm:$0xf]
    %v826 = vld [vmem:[%s4 + $0x5c] sm:$0xf]
    %v827 = vld [vmem:[%s4 + $0x60] sm:$0xf]
    %v828 = vld [vmem:[%s4 + $0x64] sm:$0xf]
    %v829 = vld [vmem:[%s4 + $0x68] sm:$0xf]
    %v830 = vld [vmem:[%s4 + $0x6c] sm:$0xf]
    %v831 = vld [vmem:[%s4 + $0x70] sm:$0xf]
    %v832 = vld [vmem:[%s4 + $0x74] sm:$0xf]
    %v833 = vld [vmem:[%s4 + $0x78] sm:$0xf]
    %v834 = vld [vmem:[%s4 + $0x7c] sm:$0xf]
    %v835 = vld [vmem:[%s5 + $0x1] ss:$0 sm:$0xff]
    %v868 = vunpack.c.l.b16 %v803
    %v869 = vunpack.c.l.b16 %v804
    %v870 = vunpack.c.l.b16 %v805
    %v871 = vunpack.c.l.b16 %v806
    %v872 = vunpack.c.l.b16 %v807
    %v873 = vunpack.c.l.b16 %v808
    %v874 = vunpack.c.l.b16 %v809
    %v875 = vunpack.c.l.b16 %v810
    %v876 = vunpack.c.l.b16 %v811
    %v877 = vunpack.c.l.b16 %v812
    %v878 = vunpack.c.l.b16 %v813
    %v879 = vunpack.c.l.b16 %v814
    %v880 = vunpack.c.l.b16 %v815
    %v881 = vunpack.c.l.b16 %v816
    %v882 = vunpack.c.l.b16 %v817
    %v883 = vunpack.c.l.b16 %v818
    %v884 = vunpack.c.l.b16 %v819
    %v885 = vunpack.c.l.b16 %v820
    %v886 = vunpack.c.l.b16 %v821
    %v887 = vunpack.c.l.b16 %v822
    %v888 = vunpack.c.l.b16 %v823
    %v889 = vunpack.c.l.b16 %v824
    %v890 = vunpack.c.l.b16 %v825
    %v891 = vunpack.c.l.b16 %v826
    %v892 = vunpack.c.l.b16 %v827
    %v893 = vunpack.c.l.b16 %v828
    %v894 = vunpack.c.l.b16 %v829
    %v895 = vunpack.c.l.b16 %v830
    %v896 = vunpack.c.l.b16 %v831
    %v897 = vunpack.c.l.b16 %v832
    %v898 = vunpack.c.l.b16 %v833
    %v899 = vunpack.c.l.b16 %v834
    %v900 = vpack.c.b16 %v869, %v868
    %v901 = vpack.c.b16 %v871, %v870
    %v902 = vpack.c.b16 %v873, %v872
    %v903 = vpack.c.b16 %v875, %v874
    %v904 = vpack.c.b16 %v877, %v876
    %v905 = vpack.c.b16 %v879, %v878
    %v906 = vpack.c.b16 %v881, %v880
    %v907 = vpack.c.b16 %v883, %v882
    %v908 = vpack.c.b16 %v885, %v884
    %v909 = vpack.c.b16 %v887, %v886
    %v910 = vpack.c.b16 %v889, %v888
    %v911 = vpack.c.b16 %v891, %v890
    %v912 = vpack.c.b16 %v893, %v892
    %v913 = vpack.c.b16 %v895, %v894
    %v914 = vpack.c.b16 %v897, %v896
    %v915 = vpack.c.b16 %v899, %v898
    %932 = vmatprep.subr.bf16.mxu0 0
    %933 = vmatpush1.bf16.msra.mxu0 %v900
    %934 = vmatprep.subr.bf16.mxu0 0
    %935 = vmatpush1.bf16.msra.mxu0 %v901
    %936 = vmatprep.subr.bf16.mxu0 0
    %937 = vmatpush1.bf16.msra.mxu0 %v902
    %938 = vmatprep.subr.bf16.mxu0 0
    %939 = vmatpush1.bf16.msra.mxu0 %v903
    %940 = vmatprep.subr.bf16.mxu0 0
    %941 = vmatpush1.bf16.msra.mxu0 %v904
    %942 = vmatprep.subr.bf16.mxu0 0
    %943 = vmatpush1.bf16.msra.mxu0 %v905
    %944 = vmatprep.subr.bf16.mxu0 0
    %945 = vmatpush1.bf16.msra.mxu0 %v906
    %946 = vmatprep.subr.bf16.mxu0 0
    %947 = vmatpush1.bf16.msra.mxu0 %v907
    %948 = vmatprep.subr.bf16.mxu0 0
    %949 = vmatpush1.bf16.msra.mxu0 %v908
    %950 = vmatprep.subr.bf16.mxu0 0
    %951 = vmatpush1.bf16.msra.mxu0 %v909
    %952 = vmatprep.subr.bf16.mxu0 0
    %953 = vmatpush1.bf16.msra.mxu0 %v910
    %954 = vmatprep.subr.bf16.mxu0 0
    %955 = vmatpush1.bf16.msra.mxu0 %v911
    %956 = vmatprep.subr.bf16.mxu0 0
    %957 = vmatpush1.bf16.msra.mxu0 %v912
    %958 = vmatprep.subr.bf16.mxu0 0
    %959 = vmatpush1.bf16.msra.mxu0 %v913
    %960 = vmatprep.subr.bf16.mxu0 0
    %961 = vmatpush1.bf16.msra.mxu0 %v914
    %962 = vmatprep.subr.bf16.mxu0 0
    %963 = vmatpush1.bf16.msra.mxu0 %v915
    %964 = vmatprep.mubr.bf16.mxu0 %v802
    %965 = vmatmul.mubr.bf16.gmra.mrb[0].mxu0 %v801
    %v966 = vpop.f32.mrb[0].mxu0
    %v967 = vadd.f32 %v835, %v966
    %v968 = vpop.f32.mrb[0].mxu0
    %v969 = vpop.f32.mrb[0].mxu0
    %v970 = vadd.f32 %v835, %v969
    %v971 = vpop.f32.mrb[0].mxu0
    %972 = vdwg.mxu0
    %v973 = vadd.f32 %v186, %v967
    %v974 = vadd.f32 %v187, %v970
    %v975 = vld [vmem:[%s5 + $0x2] ss:$0 sm:$0xff]
    %v976 = vld [vmem:[%s5 + $0x3] ss:$0 sm:$0xff]
    %977 = vadd.xlane.f32.xlu0 %v973
    %v978 = vpop.xlane.xlu0 %977
    %979 = vadd.xlane.f32.xlu0 %v974
    %v980 = vpop.xlane.xlu0 %979
    %v981 = vmul.f32 %v978, %v157
    %v982 = vmul.f32 %v980, %v157
    %v983 = vsub.f32 %v973, %v981
    %v984 = vsub.f32 %v974, %v982
    %v985 = vmul.f32 %v983, %v983
    %v986 = vmul.f32 %v984, %v984
    %987 = vadd.xlane.f32.xlu0 %v985
    %v988 = vpop.xlane.xlu0 %987
    %989 = vadd.xlane.f32.xlu0 %v986
    %v990 = vpop.xlane.xlu0 %989
    %v991 = vmul.f32 %v988, %v157
    %v992 = vmul.f32 %v990, %v157
    %v993 = vadd.f32 %v991, 1e-12
    %v994 = vadd.f32 %v992, 1e-12
    %v995 = vrsqrt.pop %v993
    %v996 = vrsqrt.pop %v994
    %v997 = vmul.f32 %v983, %v995
    %v998 = vmul.f32 %v984, %v996
    %v999 = vmul.f32 %v997, %v975
    %v1000 = vmul.f32 %v998, %v975
    %v1001 = vadd.f32 %v999, %v976
    %v1002 = vadd.f32 %v1000, %v976
    %v1003 = vpack.c.bf16 %v1002, %v1001
    %v1004 = vld [vmem:[#allocation2 + $0x18] sm:$0xff]
    %v1005 = vld [vmem:[#allocation2 + $0x20] sm:$0xff]
    %v1006 = vld [vmem:[#allocation2 + $0x40] sm:$0xff]
    %v1007 = vld [vmem:[#allocation2 + $0x48] sm:$0xff]
    %v1008 = vld [vmem:[#allocation2 + $0x68] sm:$0xff]
    %v1009 = vld [vmem:[#allocation2 + $0x70] sm:$0xff]
    %v1010 = vld [vmem:[#allocation2 + $0x90] sm:$0xff]
    %v1011 = vld [vmem:[#allocation2 + $0x98] sm:$0xff]
    %v1012 = vld [vmem:[#allocation2 + $0xb8] sm:$0xff]
    %v1013 = vld [vmem:[#allocation2 + $0xc0] sm:$0xff]
    %v1014 = vld [vmem:[#allocation2 + $0xe0] sm:$0xff]
    %v1015 = vld [vmem:[#allocation2 + $0xe8] sm:$0xff]
    %v1016 = vld [vmem:[#allocation2 + $0x108] sm:$0xff]
    %v1017 = vld [vmem:[#allocation2 + $0x110] sm:$0xff]
    %v1018 = vld [vmem:[#allocation2 + $0x130] sm:$0xff]
    %v1019 = vld [vmem:[#allocation2 + $0x138] sm:$0xff]
    %v1020 = vld [vmem:[#allocation2 + $0x158] sm:$0xff]
    %v1021 = vld [vmem:[#allocation2 + $0x160] sm:$0xff]
    %v1022 = vld [vmem:[#allocation2 + $0x180] sm:$0xff]
    %v1023 = vld [vmem:[#allocation2 + $0x188] sm:$0xff]
    %v1024 = vld [vmem:[#allocation2 + $0x1a8] sm:$0xff]
    %v1025 = vld [vmem:[#allocation2 + $0x1b0] sm:$0xff]
    %v1026 = vld [vmem:[#allocation2 + $0x1d0] sm:$0xff]
    %v1027 = vld [vmem:[#allocation2 + $0x1d8] sm:$0xff]
    %v1028 = vld [vmem:[#allocation2 + $0x1f8] sm:$0xff]
    %v1029 = vld [vmem:[#allocation2 + $0x200] sm:$0xff]
    %v1030 = vld [vmem:[#allocation2 + $0x220] sm:$0xff]
    %v1031 = vld [vmem:[#allocation2 + $0x228] sm:$0xff]
    %v1032 = vld [vmem:[#allocation2 + $0x248] sm:$0xff]
    %v1033 = vld [vmem:[#allocation2 + $0x250] sm:$0xff]
    %v1034 = vld [vmem:[#allocation2 + $0x270] sm:$0xff]
    %v1035 = vld [vmem:[#allocation2 + $0x278] sm:$0xff]
    %s1036 = scalar_lea.vmem %s5, 4
    %v1037 = vld [vmem:[%s1036] ss:$8 sm:$0xf]
    %v1039 = vlaneseq
    %v1040 = vshrl.u32 %v1039, 7
    %v1041 = vsub.s32 0, %v1040
    %v1042 = vrot.slane %v1037, %v1041
    %v1043 = vlaneseq
    %v1044 = vshrl.u32 %v1043, 7
    %v1045 = vsub.s32 1, %v1044
    %v1046 = vrot.slane %v1037, %v1045
    %v1047 = vlaneseq
    %v1048 = vshrl.u32 %v1047, 7
    %v1049 = vsub.s32 2, %v1048
    %v1050 = vrot.slane %v1037, %v1049
    %v1051 = vlaneseq
    %v1052 = vshrl.u32 %v1051, 7
    %v1053 = vsub.s32 3, %v1052
    %v1054 = vrot.slane %v1037, %v1053
    %v1091 = vunpack.c.l.b16 %v1004
    %v1092 = vunpack.c.h.b16 %v1004
    %v1093 = vunpack.c.l.b16 %v1005
    %v1094 = vunpack.c.h.b16 %v1005
    %v1095 = vunpack.c.l.b16 %v1006
    %v1096 = vunpack.c.h.b16 %v1006
    %v1097 = vunpack.c.l.b16 %v1007
    %v1098 = vunpack.c.h.b16 %v1007
    %v1099 = vunpack.c.l.b16 %v1008
    %v1100 = vunpack.c.h.b16 %v1008
    %v1101 = vunpack.c.l.b16 %v1009
    %v1102 = vunpack.c.h.b16 %v1009
    %v1103 = vunpack.c.l.b16 %v1010
    %v1104 = vunpack.c.h.b16 %v1010
    %v1105 = vunpack.c.l.b16 %v1011
    %v1106 = vunpack.c.h.b16 %v1011
    %v1107 = vunpack.c.l.b16 %v1012
    %v1108 = vunpack.c.h.b16 %v1012
    %v1109 = vunpack.c.l.b16 %v1013
    %v1110 = vunpack.c.h.b16 %v1013
    %v1111 = vunpack.c.l.b16 %v1014
    %v1112 = vunpack.c.h.b16 %v1014
    %v1113 = vunpack.c.l.b16 %v1015
    %v1114 = vunpack.c.h.b16 %v1015
    %v1115 = vunpack.c.l.b16 %v1016
    %v1116 = vunpack.c.h.b16 %v1016
    %v1117 = vunpack.c.l.b16 %v1017
    %v1118 = vunpack.c.h.b16 %v1017
    %v1119 = vunpack.c.l.b16 %v1018
    %v1120 = vunpack.c.h.b16 %v1018
    %v1121 = vunpack.c.l.b16 %v1019
    %v1122 = vunpack.c.h.b16 %v1019
    %v1123 = vunpack.c.l.b16 %v1020
    %v1124 = vunpack.c.h.b16 %v1020
    %v1125 = vunpack.c.l.b16 %v1021
    %v1126 = vunpack.c.h.b16 %v1021
    %v1127 = vunpack.c.l.b16 %v1022
    %v1128 = vunpack.c.h.b16 %v1022
    %v1129 = vunpack.c.l.b16 %v1023
    %v1130 = vunpack.c.h.b16 %v1023
    %v1131 = vunpack.c.l.b16 %v1024
    %v1132 = vunpack.c.h.b16 %v1024
    %v1133 = vunpack.c.l.b16 %v1025
    %v1134 = vunpack.c.h.b16 %v1025
    %v1135 = vunpack.c.l.b16 %v1026
    %v1136 = vunpack.c.h.b16 %v1026
    %v1137 = vunpack.c.l.b16 %v1027
    %v1138 = vunpack.c.h.b16 %v1027
    %v1139 = vunpack.c.l.b16 %v1028
    %v1140 = vunpack.c.h.b16 %v1028
    %v1141 = vunpack.c.l.b16 %v1029
    %v1142 = vunpack.c.h.b16 %v1029
    %v1143 = vunpack.c.l.b16 %v1030
    %v1144 = vunpack.c.h.b16 %v1030
    %v1145 = vunpack.c.l.b16 %v1031
    %v1146 = vunpack.c.h.b16 %v1031
    %v1147 = vunpack.c.l.b16 %v1032
    %v1148 = vunpack.c.h.b16 %v1032
    %v1149 = vunpack.c.l.b16 %v1033
    %v1150 = vunpack.c.h.b16 %v1033
    %v1151 = vunpack.c.l.b16 %v1034
    %v1152 = vunpack.c.h.b16 %v1034
    %v1153 = vunpack.c.l.b16 %v1035
    %v1154 = vunpack.c.h.b16 %v1035
    %v1155 = vpack.c.b16 %v1095, %v1091
    %v1156 = vpack.c.b16 %v1096, %v1092
    %v1157 = vpack.c.b16 %v1097, %v1093
    %v1158 = vpack.c.b16 %v1098, %v1094
    %v1159 = vpack.c.b16 %v1103, %v1099
    %v1160 = vpack.c.b16 %v1104, %v1100
    %v1161 = vpack.c.b16 %v1105, %v1101
    %v1162 = vpack.c.b16 %v1106, %v1102
    %v1163 = vpack.c.b16 %v1111, %v1107
    %v1164 = vpack.c.b16 %v1112, %v1108
    %v1165 = vpack.c.b16 %v1113, %v1109
    %v1166 = vpack.c.b16 %v1114, %v1110
    %v1167 = vpack.c.b16 %v1119, %v1115
    %v1168 = vpack.c.b16 %v1120, %v1116
    %v1169 = vpack.c.b16 %v1121, %v1117
    %v1170 = vpack.c.b16 %v1122, %v1118
    %v1171 = vpack.c.b16 %v1127, %v1123
    %v1172 = vpack.c.b16 %v1128, %v1124
    %v1173 = vpack.c.b16 %v1129, %v1125
    %v1174 = vpack.c.b16 %v1130, %v1126
    %v1175 = vpack.c.b16 %v1135, %v1131
    %v1176 = vpack.c.b16 %v1136, %v1132
    %v1177 = vpack.c.b16 %v1137, %v1133
    %v1178 = vpack.c.b16 %v1138, %v1134
    %v1179 = vpack.c.b16 %v1143, %v1139
    %v1180 = vpack.c.b16 %v1144, %v1140
    %v1181 = vpack.c.b16 %v1145, %v1141
    %v1182 = vpack.c.b16 %v1146, %v1142
    %v1183 = vpack.c.b16 %v1151, %v1147
    %v1184 = vpack.c.b16 %v1152, %v1148
    %v1185 = vpack.c.b16 %v1153, %v1149
    %v1186 = vpack.c.b16 %v1154, %v1150
    %1219 = vmatprep.subr.bf16.mxu0 %v1156
    %1220 = vmatpush1.bf16.msra.mxu0 %v1155
    %1221 = vmatprep.subr.bf16.mxu0 %v1160
    %1222 = vmatpush1.bf16.msra.mxu0 %v1159
    %1223 = vmatprep.subr.bf16.mxu0 %v1164
    %1224 = vmatpush1.bf16.msra.mxu0 %v1163
    %1225 = vmatprep.subr.bf16.mxu0 %v1168
    %1226 = vmatpush1.bf16.msra.mxu0 %v1167
    %1227 = vmatprep.subr.bf16.mxu0 %v1172
    %1228 = vmatpush1.bf16.msra.mxu0 %v1171
    %1229 = vmatprep.subr.bf16.mxu0 %v1176
    %1230 = vmatpush1.bf16.msra.mxu0 %v1175
    %1231 = vmatprep.subr.bf16.mxu0 %v1180
    %1232 = vmatpush1.bf16.msra.mxu0 %v1179
    %1233 = vmatprep.subr.bf16.mxu0 %v1184
    %1234 = vmatpush1.bf16.msra.mxu0 %v1183
    %1235 = vmatprep.subr.bf16.mxu0 0
    %1236 = vmatpush1.bf16.msra.mxu0 0
    %1237 = vmatprep.subr.bf16.mxu0 0
    %1238 = vmatpush1.bf16.msra.mxu0 0
    %1239 = vmatprep.subr.bf16.mxu0 0
    %1240 = vmatpush1.bf16.msra.mxu0 0
    %1241 = vmatprep.subr.bf16.mxu0 0
    %1242 = vmatpush1.bf16.msra.mxu0 0
    %1243 = vmatprep.subr.bf16.mxu0 0
    %1244 = vmatpush1.bf16.msra.mxu0 0
    %1245 = vmatprep.subr.bf16.mxu0 0
    %1246 = vmatpush1.bf16.msra.mxu0 0
    %1247 = vmatprep.subr.bf16.mxu0 0
    %1248 = vmatpush1.bf16.msra.mxu0 0
    %1249 = vmatprep.subr.bf16.mxu0 0
    %1250 = vmatpush1.bf16.msra.mxu0 0
    %1251 = vmatprep.mubr.bf16.mxu0 0
    %1252 = vmatmul.mubr.bf16.gmra.mrb[0].mxu0 %v1003
    %v1253 = vpop.f32.mrb[0].mxu0
    %v1254 = vadd.f32 %v1042, %v1253
    %v1255 = vpop.f32.mrb[0].mxu0
    %v1256 = vadd.f32 %v1046, %v1255
    %v1257 = vpop.f32.mrb[0].mxu0
    %v1258 = vadd.f32 %v1042, %v1257
    %v1259 = vpop.f32.mrb[0].mxu0
    %v1260 = vadd.f32 %v1046, %v1259
    %1261 = vdwg.mxu0
    %1262 = vmatprep.subr.bf16.mxu0 %v1158
    %1263 = vmatpush1.bf16.msra.mxu0 %v1157
    %1264 = vmatprep.subr.bf16.mxu0 %v1162
    %1265 = vmatpush1.bf16.msra.mxu0 %v1161
    %1266 = vmatprep.subr.bf16.mxu0 %v1166
    %1267 = vmatpush1.bf16.msra.mxu0 %v1165
    %1268 = vmatprep.subr.bf16.mxu0 %v1170
    %1269 = vmatpush1.bf16.msra.mxu0 %v1169
    %1270 = vmatprep.subr.bf16.mxu0 %v1174
    %1271 = vmatpush1.bf16.msra.mxu0 %v1173
    %1272 = vmatprep.subr.bf16.mxu0 %v1178
    %1273 = vmatpush1.bf16.msra.mxu0 %v1177
    %1274 = vmatprep.subr.bf16.mxu0 %v1182
    %1275 = vmatpush1.bf16.msra.mxu0 %v1181
    %1276 = vmatprep.subr.bf16.mxu0 %v1186
    %1277 = vmatpush1.bf16.msra.mxu0 %v1185
    %1278 = vmatprep.subr.bf16.mxu0 0
    %1279 = vmatpush1.bf16.msra.mxu0 0
    %1280 = vmatprep.subr.bf16.mxu0 0
    %1281 = vmatpush1.bf16.msra.mxu0 0
    %1282 = vmatprep.subr.bf16.mxu0 0
    %1283 = vmatpush1.bf16.msra.mxu0 0
    %1284 = vmatprep.subr.bf16.mxu0 0
    %1285 = vmatpush1.bf16.msra.mxu0 0
    %1286 = vmatprep.subr.bf16.mxu0 0
    %1287 = vmatpush1.bf16.msra.mxu0 0
    %1288 = vmatprep.subr.bf16.mxu0 0
    %1289 = vmatpush1.bf16.msra.mxu0 0
    %1290 = vmatprep.subr.bf16.mxu0 0
    %1291 = vmatpush1.bf16.msra.mxu0 0
    %1292 = vmatprep.subr.bf16.mxu0 0
    %1293 = vmatpush1.bf16.msra.mxu0 0
    %1294 = vmatprep.mubr.bf16.mxu0 0
    %1295 = vmatmul.mubr.bf16.gmra.mrb[0].mxu0 %v1003
    %v1296 = vpop.f32.mrb[0].mxu0
    %v1297 = vadd.f32 %v1050, %v1296
    %v1298 = vpop.f32.mrb[0].mxu0
    %v1299 = vadd.f32 %v1054, %v1298
    %v1300 = vpop.f32.mrb[0].mxu0
    %v1301 = vadd.f32 %v1050, %v1300
    %v1302 = vpop.f32.mrb[0].mxu0
    %v1303 = vadd.f32 %v1054, %v1302
    %1304 = vdwg.mxu0
    %v1305 = vmul.f32 %v1254, 0.5
    %v1306 = vmul.f32 %v1256, 0.5
    %v1307 = vmul.f32 %v1297, 0.5
    %v1308 = vmul.f32 %v1299, 0.5
    %v1309 = vmul.f32 %v1258, 0.5
    %v1310 = vmul.f32 %v1260, 0.5
    %v1311 = vmul.f32 %v1301, 0.5
    %v1312 = vmul.f32 %v1303, 0.5
    %v1313 = vmul.f32 %v1254, 0.044715
    %v1314 = vmul.f32 %v1256, 0.044715
    %v1315 = vmul.f32 %v1297, 0.044715
    %v1316 = vmul.f32 %v1299, 0.044715
    %v1317 = vmul.f32 %v1258, 0.044715
    %v1318 = vmul.f32 %v1260, 0.044715
    %v1319 = vmul.f32 %v1301, 0.044715
    %v1320 = vmul.f32 %v1303, 0.044715
    %v1321 = vmul.f32 %v1313, %v1254
    %v1322 = vmul.f32 %v1314, %v1256
    %v1323 = vmul.f32 %v1315, %v1297
    %v1324 = vmul.f32 %v1316, %v1299
    %v1325 = vmul.f32 %v1317, %v1258
    %v1326 = vmul.f32 %v1318, %v1260
    %v1327 = vmul.f32 %v1319, %v1301
    %v1328 = vmul.f32 %v1320, %v1303
    %v1329 = vmul.f32 %v1321, %v1254
    %v1330 = vmul.f32 %v1322, %v1256
    %v1331 = vmul.f32 %v1323, %v1297
    %v1332 = vmul.f32 %v1324, %v1299
    %v1333 = vmul.f32 %v1325, %v1258
    %v1334 = vmul.f32 %v1326, %v1260
    %v1335 = vmul.f32 %v1327, %v1301
    %v1336 = vmul.f32 %v1328, %v1303
    %v1337 = vadd.f32 %v1254, %v1329
    %v1338 = vadd.f32 %v1256, %v1330
    %v1339 = vadd.f32 %v1297, %v1331
    %v1340 = vadd.f32 %v1299, %v1332
    %v1341 = vadd.f32 %v1258, %v1333
    %v1342 = vadd.f32 %v1260, %v1334
    %v1343 = vadd.f32 %v1301, %v1335
    %v1344 = vadd.f32 %v1303, %v1336
    %v1345 = vmul.f32 %v1337, 0.7978846
    %v1346 = vmul.f32 %v1338, 0.7978846
    %v1347 = vmul.f32 %v1339, 0.7978846
    %v1348 = vmul.f32 %v1340, 0.7978846
    %v1349 = vmul.f32 %v1341, 0.7978846
    %v1350 = vmul.f32 %v1342, 0.7978846
    %v1351 = vmul.f32 %v1343, 0.7978846
    %v1352 = vmul.f32 %v1344, 0.7978846
    %v1353 = vtanh.pop %v1345
    %v1354 = vtanh.pop %v1346
    %v1355 = vtanh.pop %v1347
    %v1356 = vtanh.pop %v1348
    %v1357 = vtanh.pop %v1349
    %v1358 = vtanh.pop %v1350
    %v1359 = vtanh.pop %v1351
    %v1360 = vtanh.pop %v1352
    %v1361 = vadd.f32 %v1353, 1.0
    %v1362 = vadd.f32 %v1354, 1.0
    %v1363 = vadd.f32 %v1355, 1.0
    %v1364 = vadd.f32 %v1356, 1.0
    %v1365 = vadd.f32 %v1357, 1.0
    %v1366 = vadd.f32 %v1358, 1.0
    %v1367 = vadd.f32 %v1359, 1.0
    %v1368 = vadd.f32 %v1360, 1.0
    %v1369 = vmul.f32 %v1305, %v1361
    %v1370 = vmul.f32 %v1306, %v1362
    %v1371 = vmul.f32 %v1307, %v1363
    %v1372 = vmul.f32 %v1308, %v1364
    %v1373 = vmul.f32 %v1309, %v1365
    %v1374 = vmul.f32 %v1310, %v1366
    %v1375 = vmul.f32 %v1311, %v1367
    %v1376 = vmul.f32 %v1312, %v1368
    %v1377 = vpack.c.bf16 %v1373, %v1369
    %v1378 = vpack.c.bf16 %v1374, %v1370
    %v1379 = vpack.c.bf16 %v1375, %v1371
    %v1380 = vpack.c.bf16 %v1376, %v1372
    %v1381 = vld [vmem:[%s4 + $0x80] sm:$0xf]
    %v1382 = vld [vmem:[%s4 + $0x84] sm:$0xf]
    %v1383 = vld [vmem:[%s4 + $0x88] sm:$0xf]
    %v1384 = vld [vmem:[%s4 + $0x8c] sm:$0xf]
    %v1385 = vld [vmem:[%s4 + $0x90] sm:$0xf]
    %v1386 = vld [vmem:[%s4 + $0x94] sm:$0xf]
    %v1387 = vld [vmem:[%s4 + $0x98] sm:$0xf]
    %v1388 = vld [vmem:[%s4 + $0x9c] sm:$0xf]
    %v1389 = vld [vmem:[%s4 + $0xa0] sm:$0xf]
    %v1390 = vld [vmem:[%s4 + $0xa4] sm:$0xf]
    %v1391 = vld [vmem:[%s4 + $0xa8] sm:$0xf]
    %v1392 = vld [vmem:[%s4 + $0xac] sm:$0xf]
    %v1393 = vld [vmem:[%s4 + $0xb0] sm:$0xf]
    %v1394 = vld [vmem:[%s4 + $0xb4] sm:$0xf]
    %v1395 = vld [vmem:[%s4 + $0xb8] sm:$0xf]
    %v1396 = vld [vmem:[%s4 + $0xbc] sm:$0xf]
    %v1397 = vld [vmem:[%s4 + $0xc0] sm:$0xf]
    %v1398 = vld [vmem:[%s4 + $0xc4] sm:$0xf]
    %v1399 = vld [vmem:[%s4 + $0xc8] sm:$0xf]
    %v1400 = vld [vmem:[%s4 + $0xcc] sm:$0xf]
    %v1401 = vld [vmem:[%s4 + $0xd0] sm:$0xf]
    %v1402 = vld [vmem:[%s4 + $0xd4] sm:$0xf]
    %v1403 = vld [vmem:[%s4 + $0xd8] sm:$0xf]
    %v1404 = vld [vmem:[%s4 + $0xdc] sm:$0xf]
    %v1405 = vld [vmem:[%s4 + $0xe0] sm:$0xf]
    %v1406 = vld [vmem:[%s4 + $0xe4] sm:$0xf]
    %v1407 = vld [vmem:[%s4 + $0xe8] sm:$0xf]
    %v1408 = vld [vmem:[%s4 + $0xec] sm:$0xf]
    %v1409 = vld [vmem:[%s4 + $0xf0] sm:$0xf]
    %v1410 = vld [vmem:[%s4 + $0xf4] sm:$0xf]
    %v1411 = vld [vmem:[%s4 + $0xf8] sm:$0xf]
    %v1412 = vld [vmem:[%s4 + $0xfc] sm:$0xf]
    %v1413 = vld [vmem:[%s4 + $0x100] sm:$0xf]
    %v1414 = vld [vmem:[%s4 + $0x104] sm:$0xf]
    %v1415 = vld [vmem:[%s4 + $0x108] sm:$0xf]
    %v1416 = vld [vmem:[%s4 + $0x10c] sm:$0xf]
    %v1417 = vld [vmem:[%s4 + $0x110] sm:$0xf]
    %v1418 = vld [vmem:[%s4 + $0x114] sm:$0xf]
    %v1419 = vld [vmem:[%s4 + $0x118] sm:$0xf]
    %v1420 = vld [vmem:[%s4 + $0x11c] sm:$0xf]
    %v1421 = vld [vmem:[%s4 + $0x120] sm:$0xf]
    %v1422 = vld [vmem:[%s4 + $0x124] sm:$0xf]
    %v1423 = vld [vmem:[%s4 + $0x128] sm:$0xf]
    %v1424 = vld [vmem:[%s4 + $0x12c] sm:$0xf]
    %v1425 = vld [vmem:[%s4 + $0x130] sm:$0xf]
    %v1426 = vld [vmem:[%s4 + $0x134] sm:$0xf]
    %v1427 = vld [vmem:[%s4 + $0x138] sm:$0xf]
    %v1428 = vld [vmem:[%s4 + $0x13c] sm:$0xf]
    %v1429 = vld [vmem:[%s4 + $0x140] sm:$0xf]
    %v1430 = vld [vmem:[%s4 + $0x144] sm:$0xf]
    %v1431 = vld [vmem:[%s4 + $0x148] sm:$0xf]
    %v1432 = vld [vmem:[%s4 + $0x14c] sm:$0xf]
    %v1433 = vld [vmem:[%s4 + $0x150] sm:$0xf]
    %v1434 = vld [vmem:[%s4 + $0x154] sm:$0xf]
    %v1435 = vld [vmem:[%s4 + $0x158] sm:$0xf]
    %v1436 = vld [vmem:[%s4 + $0x15c] sm:$0xf]
    %v1437 = vld [vmem:[%s4 + $0x160] sm:$0xf]
    %v1438 = vld [vmem:[%s4 + $0x164] sm:$0xf]
    %v1439 = vld [vmem:[%s4 + $0x168] sm:$0xf]
    %v1440 = vld [vmem:[%s4 + $0x16c] sm:$0xf]
    %v1441 = vld [vmem:[%s4 + $0x170] sm:$0xf]
    %v1442 = vld [vmem:[%s4 + $0x174] sm:$0xf]
    %v1443 = vld [vmem:[%s4 + $0x178] sm:$0xf]
    %v1444 = vld [vmem:[%s4 + $0x17c] sm:$0xf]
    %v1445 = vld [vmem:[%s5 + $0x5] ss:$0 sm:$0xff]
    %v1510 = vunpack.c.l.b16 %v1381
    %v1511 = vunpack.c.l.b16 %v1382
    %v1512 = vunpack.c.l.b16 %v1383
    %v1513 = vunpack.c.l.b16 %v1384
    %v1514 = vunpack.c.l.b16 %v1385
    %v1515 = vunpack.c.l.b16 %v1386
    %v1516 = vunpack.c.l.b16 %v1387
    %v1517 = vunpack.c.l.b16 %v1388
    %v1518 = vunpack.c.l.b16 %v1389
    %v1519 = vunpack.c.l.b16 %v1390
    %v1520 = vunpack.c.l.b16 %v1391
    %v1521 = vunpack.c.l.b16 %v1392
    %v1522 = vunpack.c.l.b16 %v1393
    %v1523 = vunpack.c.l.b16 %v1394
    %v1524 = vunpack.c.l.b16 %v1395
    %v1525 = vunpack.c.l.b16 %v1396
    %v1526 = vunpack.c.l.b16 %v1397
    %v1527 = vunpack.c.l.b16 %v1398
    %v1528 = vunpack.c.l.b16 %v1399
    %v1529 = vunpack.c.l.b16 %v1400
    %v1530 = vunpack.c.l.b16 %v1401
    %v1531 = vunpack.c.l.b16 %v1402
    %v1532 = vunpack.c.l.b16 %v1403
    %v1533 = vunpack.c.l.b16 %v1404
    %v1534 = vunpack.c.l.b16 %v1405
    %v1535 = vunpack.c.l.b16 %v1406
    %v1536 = vunpack.c.l.b16 %v1407
    %v1537 = vunpack.c.l.b16 %v1408
    %v1538 = vunpack.c.l.b16 %v1409
    %v1539 = vunpack.c.l.b16 %v1410
    %v1540 = vunpack.c.l.b16 %v1411
    %v1541 = vunpack.c.l.b16 %v1412
    %v1542 = vunpack.c.l.b16 %v1413
    %v1543 = vunpack.c.l.b16 %v1414
    %v1544 = vunpack.c.l.b16 %v1415
    %v1545 = vunpack.c.l.b16 %v1416
    %v1546 = vunpack.c.l.b16 %v1417
    %v1547 = vunpack.c.l.b16 %v1418
    %v1548 = vunpack.c.l.b16 %v1419
    %v1549 = vunpack.c.l.b16 %v1420
    %v1550 = vunpack.c.l.b16 %v1421
    %v1551 = vunpack.c.l.b16 %v1422
    %v1552 = vunpack.c.l.b16 %v1423
    %v1553 = vunpack.c.l.b16 %v1424
    %v1554 = vunpack.c.l.b16 %v1425
    %v1555 = vunpack.c.l.b16 %v1426
    %v1556 = vunpack.c.l.b16 %v1427
    %v1557 = vunpack.c.l.b16 %v1428
    %v1558 = vunpack.c.l.b16 %v1429
    %v1559 = vunpack.c.l.b16 %v1430
    %v1560 = vunpack.c.l.b16 %v1431
    %v1561 = vunpack.c.l.b16 %v1432
    %v1562 = vunpack.c.l.b16 %v1433
    %v1563 = vunpack.c.l.b16 %v1434
    %v1564 = vunpack.c.l.b16 %v1435
    %v1565 = vunpack.c.l.b16 %v1436
    %v1566 = vunpack.c.l.b16 %v1437
    %v1567 = vunpack.c.l.b16 %v1438
    %v1568 = vunpack.c.l.b16 %v1439
    %v1569 = vunpack.c.l.b16 %v1440
    %v1570 = vunpack.c.l.b16 %v1441
    %v1571 = vunpack.c.l.b16 %v1442
    %v1572 = vunpack.c.l.b16 %v1443
    %v1573 = vunpack.c.l.b16 %v1444
    %v1574 = vpack.c.b16 %v1511, %v1510
    %v1575 = vpack.c.b16 %v1513, %v1512
    %v1576 = vpack.c.b16 %v1515, %v1514
    %v1577 = vpack.c.b16 %v1517, %v1516
    %v1578 = vpack.c.b16 %v1519, %v1518
    %v1579 = vpack.c.b16 %v1521, %v1520
    %v1580 = vpack.c.b16 %v1523, %v1522
    %v1581 = vpack.c.b16 %v1525, %v1524
    %v1582 = vpack.c.b16 %v1527, %v1526
    %v1583 = vpack.c.b16 %v1529, %v1528
    %v1584 = vpack.c.b16 %v1531, %v1530
    %v1585 = vpack.c.b16 %v1533, %v1532
    %v1586 = vpack.c.b16 %v1535, %v1534
    %v1587 = vpack.c.b16 %v1537, %v1536
    %v1588 = vpack.c.b16 %v1539, %v1538
    %v1589 = vpack.c.b16 %v1541, %v1540
    %v1590 = vpack.c.b16 %v1543, %v1542
    %v1591 = vpack.c.b16 %v1545, %v1544
    %v1592 = vpack.c.b16 %v1547, %v1546
    %v1593 = vpack.c.b16 %v1549, %v1548
    %v1594 = vpack.c.b16 %v1551, %v1550
    %v1595 = vpack.c.b16 %v1553, %v1552
    %v1596 = vpack.c.b16 %v1555, %v1554
    %v1597 = vpack.c.b16 %v1557, %v1556
    %v1598 = vpack.c.b16 %v1559, %v1558
    %v1599 = vpack.c.b16 %v1561, %v1560
    %v1600 = vpack.c.b16 %v1563, %v1562
    %v1601 = vpack.c.b16 %v1565, %v1564
    %v1602 = vpack.c.b16 %v1567, %v1566
    %v1603 = vpack.c.b16 %v1569, %v1568
    %v1604 = vpack.c.b16 %v1571, %v1570
    %v1605 = vpack.c.b16 %v1573, %v1572
    %1638 = vmatprep.subr.bf16.mxu0 0
    %1639 = vmatpush1.bf16.msra.mxu0 %v1574
    %1640 = vmatprep.subr.bf16.mxu0 0
    %1641 = vmatpush1.bf16.msra.mxu0 %v1575
    %1642 = vmatprep.subr.bf16.mxu0 0
    %1643 = vmatpush1.bf16.msra.mxu0 %v1576
    %1644 = vmatprep.subr.bf16.mxu0 0
    %1645 = vmatpush1.bf16.msra.mxu0 %v1577
    %1646 = vmatprep.subr.bf16.mxu0 0
    %1647 = vmatpush1.bf16.msra.mxu0 %v1578
    %1648 = vmatprep.subr.bf16.mxu0 0
    %1649 = vmatpush1.bf16.msra.mxu0 %v1579
    %1650 = vmatprep.subr.bf16.mxu0 0
    %1651 = vmatpush1.bf16.msra.mxu0 %v1580
    %1652 = vmatprep.subr.bf16.mxu0 0
    %1653 = vmatpush1.bf16.msra.mxu0 %v1581
    %1654 = vmatprep.subr.bf16.mxu0 0
    %1655 = vmatpush1.bf16.msra.mxu0 %v1582
    %1656 = vmatprep.subr.bf16.mxu0 0
    %1657 = vmatpush1.bf16.msra.mxu0 %v1583
    %1658 = vmatprep.subr.bf16.mxu0 0
    %1659 = vmatpush1.bf16.msra.mxu0 %v1584
    %1660 = vmatprep.subr.bf16.mxu0 0
    %1661 = vmatpush1.bf16.msra.mxu0 %v1585
    %1662 = vmatprep.subr.bf16.mxu0 0
    %1663 = vmatpush1.bf16.msra.mxu0 %v1586
    %1664 = vmatprep.subr.bf16.mxu0 0
    %1665 = vmatpush1.bf16.msra.mxu0 %v1587
    %1666 = vmatprep.subr.bf16.mxu0 0
    %1667 = vmatpush1.bf16.msra.mxu0 %v1588
    %1668 = vmatprep.subr.bf16.mxu0 0
    %1669 = vmatpush1.bf16.msra.mxu0 %v1589
    %1670 = vmatprep.mubr.bf16.mxu0 %v1378
    %1671 = vmatmul.mubr.bf16.gmra.mrb[0].mxu0 %v1377
    %v1672 = vpop.f32.mrb[0].mxu0
    %v1673 = vadd.f32 %v1445, %v1672
    %v1674 = vpop.f32.mrb[0].mxu0
    %v1675 = vpop.f32.mrb[0].mxu0
    %v1676 = vadd.f32 %v1445, %v1675
    %v1677 = vpop.f32.mrb[0].mxu0
    %1678 = vdwg.mxu0
    %1679 = vmatprep.subr.bf16.mxu0 0
    %1680 = vmatpush1.bf16.msra.mxu0 %v1590
    %1681 = vmatprep.subr.bf16.mxu0 0
    %1682 = vmatpush1.bf16.msra.mxu0 %v1591
    %1683 = vmatprep.subr.bf16.mxu0 0
    %1684 = vmatpush1.bf16.msra.mxu0 %v1592
    %1685 = vmatprep.subr.bf16.mxu0 0
    %1686 = vmatpush1.bf16.msra.mxu0 %v1593
    %1687 = vmatprep.subr.bf16.mxu0 0
    %1688 = vmatpush1.bf16.msra.mxu0 %v1594
    %1689 = vmatprep.subr.bf16.mxu0 0
    %1690 = vmatpush1.bf16.msra.mxu0 %v1595
    %1691 = vmatprep.subr.bf16.mxu0 0
    %1692 = vmatpush1.bf16.msra.mxu0 %v1596
    %1693 = vmatprep.subr.bf16.mxu0 0
    %1694 = vmatpush1.bf16.msra.mxu0 %v1597
    %1695 = vmatprep.subr.bf16.mxu0 0
    %1696 = vmatpush1.bf16.msra.mxu0 %v1598
    %1697 = vmatprep.subr.bf16.mxu0 0
    %1698 = vmatpush1.bf16.msra.mxu0 %v1599
    %1699 = vmatprep.subr.bf16.mxu0 0
    %1700 = vmatpush1.bf16.msra.mxu0 %v1600
    %1701 = vmatprep.subr.bf16.mxu0 0
    %1702 = vmatpush1.bf16.msra.mxu0 %v1601
    %1703 = vmatprep.subr.bf16.mxu0 0
    %1704 = vmatpush1.bf16.msra.mxu0 %v1602
    %1705 = vmatprep.subr.bf16.mxu0 0
    %1706 = vmatpush1.bf16.msra.mxu0 %v1603
    %1707 = vmatprep.subr.bf16.mxu0 0
    %1708 = vmatpush1.bf16.msra.mxu0 %v1604
    %1709 = vmatprep.subr.bf16.mxu0 0
    %1710 = vmatpush1.bf16.msra.mxu0 %v1605
    %1711 = vmatprep.mubr.bf16.mxu0 %v1380
    %1712 = vmatmul.mubr.bf16.gmra.mrb[0].mxu0 %v1379
    %v1713 = vpop.f32.mrb[0].mxu0
    %v1714 = vadd.f32 %v1673, %v1713
    %v1715 = vpop.f32.mrb[0].mxu0
    %v1716 = vpop.f32.mrb[0].mxu0
    %v1717 = vadd.f32 %v1676, %v1716
    %v1718 = vpop.f32.mrb[0].mxu0
    %1719 = vdwg.mxu0
    %v1720 = vadd.f32 %v1001, %v1714
    %v1721 = vadd.f32 %v1002, %v1717
    %v1722 = vld [vmem:[%s5 + $0x6] ss:$0 sm:$0xff]
    %v1723 = vld [vmem:[%s5 + $0x7] ss:$0 sm:$0xff]
    %1724 = vadd.xlane.f32.xlu0 %v1720
    %v1725 = vpop.xlane.xlu0 %1724
    %1726 = vadd.xlane.f32.xlu0 %v1721
    %v1727 = vpop.xlane.xlu0 %1726
    %v1728 = vmul.f32 %v1725, %v157
    %v1729 = vmul.f32 %v1727, %v157
    %v1730 = vsub.f32 %v1720, %v1728
    %v1731 = vsub.f32 %v1721, %v1729
    %v1732 = vmul.f32 %v1730, %v1730
    %v1733 = vmul.f32 %v1731, %v1731
    %1734 = vadd.xlane.f32.xlu0 %v1732
    %v1735 = vpop.xlane.xlu0 %1734
    %1736 = vadd.xlane.f32.xlu0 %v1733
    %v1737 = vpop.xlane.xlu0 %1736
    %v1738 = vmul.f32 %v1735, %v157
    %v1739 = vmul.f32 %v1737, %v157
    %v1740 = vadd.f32 %v1738, 1e-12
    %v1741 = vadd.f32 %v1739, 1e-12
    %v1742 = vrsqrt.pop %v1740
    %v1743 = vrsqrt.pop %v1741
    %v1744 = vmul.f32 %v1730, %v1742
    %v1745 = vmul.f32 %v1731, %v1743
    %v1746 = vmul.f32 %v1744, %v1722
    %v1747 = vmul.f32 %v1745, %v1722
    %v1748 = vadd.f32 %v1746, %v1723
    %v1749 = vadd.f32 %v1747, %v1723
    %v1750 = vpack.c.bf16 %v1749, %v1748
    %s1751 = scalar_lea.vmem [#allocation2], 640
    %v1752 = vld [vmem:[%s1751] sm:$0xff]
    %v1753 = vld [vmem:[%s1751 + $0x8] sm:$0xff]
    %v1754 = vld [vmem:[%s1751 + $0x10] sm:$0xff]
    %v1755 = vld [vmem:[%s1751 + $0x28] sm:$0xff]
    %v1756 = vld [vmem:[%s1751 + $0x30] sm:$0xff]
    %v1757 = vld [vmem:[%s1751 + $0x38] sm:$0xff]
    %v1758 = vld [vmem:[%s1751 + $0x50] sm:$0xff]
    %v1759 = vld [vmem:[%s1751 + $0x58] sm:$0xff]
    %v1760 = vld [vmem:[%s1751 + $0x60] sm:$0xff]
    %v1761 = vld [vmem:[%s1751 + $0x78] sm:$0xff]
    %v1762 = vld [vmem:[%s1751 + $0x80] sm:$0xff]
    %v1763 = vld [vmem:[%s1751 + $0x88] sm:$0xff]
    %v1764 = vld [vmem:[%s1751 + $0xa0] sm:$0xff]
    %v1765 = vld [vmem:[%s1751 + $0xa8] sm:$0xff]
    %v1766 = vld [vmem:[%s1751 + $0xb0] sm:$0xff]
    %v1767 = vld [vmem:[%s1751 + $0xc8] sm:$0xff]
    %v1768 = vld [vmem:[%s1751 + $0xd0] sm:$0xff]
    %v1769 = vld [vmem:[%s1751 + $0xd8] sm:$0xff]
    %v1770 = vld [vmem:[%s1751 + $0xf0] sm:$0xff]
    %v1771 = vld [vmem:[%s1751 + $0xf8] sm:$0xff]
    %v1772 = vld [vmem:[%s1751 + $0x100] sm:$0xff]
    %v1773 = vld [vmem:[%s1751 + $0x118] sm:$0xff]
    %v1774 = vld [vmem:[%s1751 + $0x120] sm:$0xff]
    %v1775 = vld [vmem:[%s1751 + $0x128] sm:$0xff]
    %v1776 = vld [vmem:[%s1751 + $0x140] sm:$0xff]
    %v1777 = vld [vmem:[%s1751 + $0x148] sm:$0xff]
    %v1778 = vld [vmem:[%s1751 + $0x150] sm:$0xff]
    %v1779 = vld [vmem:[%s1751 + $0x168] sm:$0xff]
    %v1780 = vld [vmem:[%s1751 + $0x170] sm:$0xff]
    %v1781 = vld [vmem:[%s1751 + $0x178] sm:$0xff]
    %v1782 = vld [vmem:[%s1751 + $0x190] sm:$0xff]
    %v1783 = vld [vmem:[%s1751 + $0x198] sm:$0xff]
    %v1784 = vld [vmem:[%s1751 + $0x1a0] sm:$0xff]
    %v1785 = vld [vmem:[%s1751 + $0x1b8] sm:$0xff]
    %v1786 = vld [vmem:[%s1751 + $0x1c0] sm:$0xff]
    %v1787 = vld [vmem:[%s1751 + $0x1c8] sm:$0xff]
    %v1788 = vld [vmem:[%s1751 + $0x1e0] sm:$0xff]
    %v1789 = vld [vmem:[%s1751 + $0x1e8] sm:$0xff]
    %v1790 = vld [vmem:[%s1751 + $0x1f0] sm:$0xff]
    %v1791 = vld [vmem:[%s1751 + $0x208] sm:$0xff]
    %v1792 = vld [vmem:[%s1751 + $0x210] sm:$0xff]
    %v1793 = vld [vmem:[%s1751 + $0x218] sm:$0xff]
    %v1794 = vld [vmem:[%s1751 + $0x230] sm:$0xff]
    %v1795 = vld [vmem:[%s1751 + $0x238] sm:$0xff]
    %v1796 = vld [vmem:[%s1751 + $0x240] sm:$0xff]
    %v1797 = vld [vmem:[%s1751 + $0x258] sm:$0xff]
    %v1798 = vld [vmem:[%s1751 + $0x260] sm:$0xff]
    %v1799 = vld [vmem:[%s1751 + $0x268] sm:$0xff]
    %s1800 = scalar_lea.vmem %s5, 48
    %v1801 = vld [vmem:[%s1800] ss:$8 sm:$0xf]
    %v1802 = vld [vmem:[%s1800] ss:$8 sm:$0x30]
    %v1803 = vor.u32 %v1801, %v1802
    %v1805 = vlaneseq
    %v1806 = vshrl.u32 %v1805, 7
    %v1807 = vsub.s32 0, %v1806
    %v1808 = vrot.slane %v1803, %v1807
    %v1809 = vlaneseq
    %v1810 = vshrl.u32 %v1809, 7
    %v1811 = vsub.s32 1, %v1810
    %v1812 = vrot.slane %v1803, %v1811
    %v1813 = vlaneseq
    %v1814 = vshrl.u32 %v1813, 7
    %v1815 = vsub.s32 2, %v1814
    %v1816 = vrot.slane %v1803, %v1815
    %v1817 = vlaneseq
    %v1818 = vshrl.u32 %v1817, 7
    %v1819 = vsub.s32 3, %v1818
    %v1820 = vrot.slane %v1803, %v1819
    %v1821 = vlaneseq
    %v1822 = vshrl.u32 %v1821, 7
    %v1823 = vsub.s32 4, %v1822
    %v1824 = vrot.slane %v1803, %v1823
    %v1825 = vlaneseq
    %v1826 = vshrl.u32 %v1825, 7
    %v1827 = vsub.s32 5, %v1826
    %v1828 = vrot.slane %v1803, %v1827
    %v1883 = vunpack.c.l.b16 %v1752
    %v1884 = vunpack.c.h.b16 %v1752
    %v1885 = vunpack.c.l.b16 %v1753
    %v1886 = vunpack.c.h.b16 %v1753
    %v1887 = vunpack.c.l.b16 %v1754
    %v1888 = vunpack.c.h.b16 %v1754
    %v1889 = vunpack.c.l.b16 %v1755
    %v1890 = vunpack.c.h.b16 %v1755
    %v1891 = vunpack.c.l.b16 %v1756
    %v1892 = vunpack.c.h.b16 %v1756
    %v1893 = vunpack.c.l.b16 %v1757
    %v1894 = vunpack.c.h.b16 %v1757
    %v1895 = vunpack.c.l.b16 %v1758
    %v1896 = vunpack.c.h.b16 %v1758
    %v1897 = vunpack.c.l.b16 %v1759
    %v1898 = vunpack.c.h.b16 %v1759
    %v1899 = vunpack.c.l.b16 %v1760
    %v1900 = vunpack.c.h.b16 %v1760
    %v1901 = vunpack.c.l.b16 %v1761
    %v1902 = vunpack.c.h.b16 %v1761
    %v1903 = vunpack.c.l.b16 %v1762
    %v1904 = vunpack.c.h.b16 %v1762
    %v1905 = vunpack.c.l.b16 %v1763
    %v1906 = vunpack.c.h.b16 %v1763
    %v1907 = vunpack.c.l.b16 %v1764
    %v1908 = vunpack.c.h.b16 %v1764
    %v1909 = vunpack.c.l.b16 %v1765
    %v1910 = vunpack.c.h.b16 %v1765
    %v1911 = vunpack.c.l.b16 %v1766
    %v1912 = vunpack.c.h.b16 %v1766
    %v1913 = vunpack.c.l.b16 %v1767
    %v1914 = vunpack.c.h.b16 %v1767
    %v1915 = vunpack.c.l.b16 %v1768
    %v1916 = vunpack.c.h.b16 %v1768
    %v1917 = vunpack.c.l.b16 %v1769
    %v1918 = vunpack.c.h.b16 %v1769
    %v1919 = vunpack.c.l.b16 %v1770
    %v1920 = vunpack.c.h.b16 %v1770
    %v1921 = vunpack.c.l.b16 %v1771
    %v1922 = vunpack.c.h.b16 %v1771
    %v1923 = vunpack.c.l.b16 %v1772
    %v1924 = vunpack.c.h.b16 %v1772
    %v1925 = vunpack.c.l.b16 %v1773
    %v1926 = vunpack.c.h.b16 %v1773
    %v1927 = vunpack.c.l.b16 %v1774
    %v1928 = vunpack.c.h.b16 %v1774
    %v1929 = vunpack.c.l.b16 %v1775
    %v1930 = vunpack.c.h.b16 %v1775
    %v1931 = vunpack.c.l.b16 %v1776
    %v1932 = vunpack.c.h.b16 %v1776
    %v1933 = vunpack.c.l.b16 %v1777
    %v1934 = vunpack.c.h.b16 %v1777
    %v1935 = vunpack.c.l.b16 %v1778
    %v1936 = vunpack.c.h.b16 %v1778
    %v1937 = vunpack.c.l.b16 %v1779
    %v1938 = vunpack.c.h.b16 %v1779
    %v1939 = vunpack.c.l.b16 %v1780
    %v1940 = vunpack.c.h.b16 %v1780
    %v1941 = vunpack.c.l.b16 %v1781
    %v1942 = vunpack.c.h.b16 %v1781
    %v1943 = vunpack.c.l.b16 %v1782
    %v1944 = vunpack.c.h.b16 %v1782
    %v1945 = vunpack.c.l.b16 %v1783
    %v1946 = vunpack.c.h.b16 %v1783
    %v1947 = vunpack.c.l.b16 %v1784
    %v1948 = vunpack.c.h.b16 %v1784
    %v1949 = vunpack.c.l.b16 %v1785
    %v1950 = vunpack.c.h.b16 %v1785
    %v1951 = vunpack.c.l.b16 %v1786
    %v1952 = vunpack.c.h.b16 %v1786
    %v1953 = vunpack.c.l.b16 %v1787
    %v1954 = vunpack.c.h.b16 %v1787
    %v1955 = vunpack.c.l.b16 %v1788
    %v1956 = vunpack.c.h.b16 %v1788
    %v1957 = vunpack.c.l.b16 %v1789
    %v1958 = vunpack.c.h.b16 %v1789
    %v1959 = vunpack.c.l.b16 %v1790
    %v1960 = vunpack.c.h.b16 %v1790
    %v1961 = vunpack.c.l.b16 %v1791
    %v1962 = vunpack.c.h.b16 %v1791
    %v1963 = vunpack.c.l.b16 %v1792
    %v1964 = vunpack.c.h.b16 %v1792
    %v1965 = vunpack.c.l.b16 %v1793
    %v1966 = vunpack.c.h.b16 %v1793
    %v1967 = vunpack.c.l.b16 %v1794
    %v1968 = vunpack.c.h.b16 %v1794
    %v1969 = vunpack.c.l.b16 %v1795
    %v1970 = vunpack.c.h.b16 %v1795
    %v1971 = vunpack.c.l.b16 %v1796
    %v1972 = vunpack.c.h.b16 %v1796
    %v1973 = vunpack.c.l.b16 %v1797
    %v1974 = vunpack.c.h.b16 %v1797
    %v1975 = vunpack.c.l.b16 %v1798
    %v1976 = vunpack.c.h.b16 %v1798
    %v1977 = vunpack.c.l.b16 %v1799
    %v1978 = vunpack.c.h.b16 %v1799
    %v1979 = vpack.c.b16 %v1889, %v1883
    %v1980 = vpack.c.b16 %v1890, %v1884
    %v1981 = vpack.c.b16 %v1891, %v1885
    %v1982 = vpack.c.b16 %v1892, %v1886
    %v1983 = vpack.c.b16 %v1893, %v1887
    %v1984 = vpack.c.b16 %v1894, %v1888
    %v1985 = vpack.c.b16 %v1901, %v1895
    %v1986 = vpack.c.b16 %v1902, %v1896
    %v1987 = vpack.c.b16 %v1903, %v1897
    %v1988 = vpack.c.b16 %v1904, %v1898
    %v1989 = vpack.c.b16 %v1905, %v1899
    %v1990 = vpack.c.b16 %v1906, %v1900
    %v1991 = vpack.c.b16 %v1913, %v1907
    %v1992 = vpack.c.b16 %v1914, %v1908
    %v1993 = vpack.c.b16 %v1915, %v1909
    %v1994 = vpack.c.b16 %v1916, %v1910
    %v1995 = vpack.c.b16 %v1917, %v1911
    %v1996 = vpack.c.b16 %v1918, %v1912
    %v1997 = vpack.c.b16 %v1925, %v1919
    %v1998 = vpack.c.b16 %v1926, %v1920
    %v1999 = vpack.c.b16 %v1927, %v1921
    %v2000 = vpack.c.b16 %v1928, %v1922
    %v2001 = vpack.c.b16 %v1929, %v1923
    %v2002 = vpack.c.b16 %v1930, %v1924
    %v2003 = vpack.c.b16 %v1937, %v1931
    %v2004 = vpack.c.b16 %v1938, %v1932
    %v2005 = vpack.c.b16 %v1939, %v1933
    %v2006 = vpack.c.b16 %v1940, %v1934
    %v2007 = vpack.c.b16 %v1941, %v1935
    %v2008 = vpack.c.b16 %v1942, %v1936
    %v2009 = vpack.c.b16 %v1949, %v1943
    %v2010 = vpack.c.b16 %v1950, %v1944
    %v2011 = vpack.c.b16 %v1951, %v1945
    %v2012 = vpack.c.b16 %v1952, %v1946
    %v2013 = vpack.c.b16 %v1953, %v1947
    %v2014 = vpack.c.b16 %v1954, %v1948
    %v2015 = vpack.c.b16 %v1961, %v1955
    %v2016 = vpack.c.b16 %v1962, %v1956
    %v2017 = vpack.c.b16 %v1963, %v1957
    %v2018 = vpack.c.b16 %v1964, %v1958
    %v2019 = vpack.c.b16 %v1965, %v1959
    %v2020 = vpack.c.b16 %v1966, %v1960
    %v2021 = vpack.c.b16 %v1973, %v1967
    %v2022 = vpack.c.b16 %v1974, %v1968
    %v2023 = vpack.c.b16 %v1975, %v1969
    %v2024 = vpack.c.b16 %v1976, %v1970
    %v2025 = vpack.c.b16 %v1977, %v1971
    %v2026 = vpack.c.b16 %v1978, %v1972
    %2075 = vmatprep.subr.bf16.mxu0 %v1980
    %2076 = vmatpush1.bf16.msra.mxu0 %v1979
    %2077 = vmatprep.subr.bf16.mxu0 %v1986
    %2078 = vmatpush1.bf16.msra.mxu0 %v1985
    %2079 = vmatprep.subr.bf16.mxu0 %v1992
    %2080 = vmatpush1.bf16.msra.mxu0 %v1991
    %2081 = vmatprep.subr.bf16.mxu0 %v1998
    %2082 = vmatpush1.bf16.msra.mxu0 %v1997
    %2083 = vmatprep.subr.bf16.mxu0 %v2004
    %2084 = vmatpush1.bf16.msra.mxu0 %v2003
    %2085 = vmatprep.subr.bf16.mxu0 %v2010
    %2086 = vmatpush1.bf16.msra.mxu0 %v2009
    %2087 = vmatprep.subr.bf16.mxu0 %v2016
    %2088 = vmatpush1.bf16.msra.mxu0 %v2015
    %2089 = vmatprep.subr.bf16.mxu0 %v2022
    %2090 = vmatpush1.bf16.msra.mxu0 %v2021
    %2091 = vmatprep.subr.bf16.mxu0 0
    %2092 = vmatpush1.bf16.msra.mxu0 0
    %2093 = vmatprep.subr.bf16.mxu0 0
    %2094 = vmatpush1.bf16.msra.mxu0 0
    %2095 = vmatprep.subr.bf16.mxu0 0
    %2096 = vmatpush1.bf16.msra.mxu0 0
    %2097 = vmatprep.subr.bf16.mxu0 0
    %2098 = vmatpush1.bf16.msra.mxu0 0
    %2099 = vmatprep.subr.bf16.mxu0 0
    %2100 = vmatpush1.bf16.msra.mxu0 0
    %2101 = vmatprep.subr.bf16.mxu0 0
    %2102 = vmatpush1.bf16.msra.mxu0 0
    %2103 = vmatprep.subr.bf16.mxu0 0
    %2104 = vmatpush1.bf16.msra.mxu0 0
    %2105 = vmatprep.subr.bf16.mxu0 0
    %2106 = vmatpush1.bf16.msra.mxu0 0
    %2107 = vmatprep.mubr.bf16.mxu0 0
    %2108 = vmatmul.mubr.bf16.gmra.mrb[0].mxu0 %v1750
    %v2109 = vpop.f32.mrb[0].mxu0
    %v2110 = vadd.f32 %v1808, %v2109
    %v2111 = vpop.f32.mrb[0].mxu0
    %v2112 = vadd.f32 %v1812, %v2111
    %v2113 = vpop.f32.mrb[0].mxu0
    %v2114 = vadd.f32 %v1808, %v2113
    %v2115 = vpop.f32.mrb[0].mxu0
    %v2116 = vadd.f32 %v1812, %v2115
    %2117 = vdwg.mxu0
    %2118 = vmatprep.subr.bf16.mxu0 %v1982
    %2119 = vmatpush1.bf16.msra.mxu0 %v1981
    %2120 = vmatprep.subr.bf16.mxu0 %v1988
    %2121 = vmatpush1.bf16.msra.mxu0 %v1987
    %2122 = vmatprep.subr.bf16.mxu0 %v1994
    %2123 = vmatpush1.bf16.msra.mxu0 %v1993
    %2124 = vmatprep.subr.bf16.mxu0 %v2000
    %2125 = vmatpush1.bf16.msra.mxu0 %v1999
    %2126 = vmatprep.subr.bf16.mxu0 %v2006
    %2127 = vmatpush1.bf16.msra.mxu0 %v2005
    %2128 = vmatprep.subr.bf16.mxu0 %v2012
    %2129 = vmatpush1.bf16.msra.mxu0 %v2011
    %2130 = vmatprep.subr.bf16.mxu0 %v2018
    %2131 = vmatpush1.bf16.msra.mxu0 %v2017
    %2132 = vmatprep.subr.bf16.mxu0 %v2024
    %2133 = vmatpush1.bf16.msra.mxu0 %v2023
    %2134 = vmatprep.subr.bf16.mxu0 0
    %2135 = vmatpush1.bf16.msra.mxu0 0
    %2136 = vmatprep.subr.bf16.mxu0 0
    %2137 = vmatpush1.bf16.msra.mxu0 0
    %2138 = vmatprep.subr.bf16.mxu0 0
    %2139 = vmatpush1.bf16.msra.mxu0 0
    %2140 = vmatprep.subr.bf16.mxu0 0
    %2141 = vmatpush1.bf16.msra.mxu0 0
    %2142 = vmatprep.subr.bf16.mxu0 0
    %2143 = vmatpush1.bf16.msra.mxu0 0
    %2144 = vmatprep.subr.bf16.mxu0 0
    %2145 = vmatpush1.bf16.msra.mxu0 0
    %2146 = vmatprep.subr.bf16.mxu0 0
    %2147 = vmatpush1.bf16.msra.mxu0 0
    %2148 = vmatprep.subr.bf16.mxu0 0
    %2149 = vmatpush1.bf16.msra.mxu0 0
    %2150 = vmatprep.mubr.bf16.mxu0 0
    %2151 = vmatmul.mubr.bf16.gmra.mrb[0].mxu0 %v1750
    %v2152 = vpop.f32.mrb[0].mxu0
    %v2153 = vadd.f32 %v1816, %v2152
    %v2154 = vpop.f32.mrb[0].mxu0
    %v2155 = vadd.f32 %v1820, %v2154
    %v2156 = vpop.f32.mrb[0].mxu0
    %v2157 = vadd.f32 %v1816, %v2156
    %v2158 = vpop.f32.mrb[0].mxu0
    %v2159 = vadd.f32 %v1820, %v2158
    %2160 = vdwg.mxu0
    %2161 = vmatprep.subr.bf16.mxu0 %v1984
    %2162 = vmatpush1.bf16.msra.mxu0 %v1983
    %2163 = vmatprep.subr.bf16.mxu0 %v1990
    %2164 = vmatpush1.bf16.msra.mxu0 %v1989
    %2165 = vmatprep.subr.bf16.mxu0 %v1996
    %2166 = vmatpush1.bf16.msra.mxu0 %v1995
    %2167 = vmatprep.subr.bf16.mxu0 %v2002
    %2168 = vmatpush1.bf16.msra.mxu0 %v2001
    %2169 = vmatprep.subr.bf16.mxu0 %v2008
    %2170 = vmatpush1.bf16.msra.mxu0 %v2007
    %2171 = vmatprep.subr.bf16.mxu0 %v2014
    %2172 = vmatpush1.bf16.msra.mxu0 %v2013
    %2173 = vmatprep.subr.bf16.mxu0 %v2020
    %2174 = vmatpush1.bf16.msra.mxu0 %v2019
    %2175 = vmatprep.subr.bf16.mxu0 %v2026
    %2176 = vmatpush1.bf16.msra.mxu0 %v2025
    %2177 = vmatprep.subr.bf16.mxu0 0
    %2178 = vmatpush1.bf16.msra.mxu0 0
    %2179 = vmatprep.subr.bf16.mxu0 0
    %2180 = vmatpush1.bf16.msra.mxu0 0
    %2181 = vmatprep.subr.bf16.mxu0 0
    %2182 = vmatpush1.bf16.msra.mxu0 0
    %2183 = vmatprep.subr.bf16.mxu0 0
    %2184 = vmatpush1.bf16.msra.mxu0 0
    %2185 = vmatprep.subr.bf16.mxu0 0
    %2186 = vmatpush1.bf16.msra.mxu0 0
    %2187 = vmatprep.subr.bf16.mxu0 0
    %2188 = vmatpush1.bf16.msra.mxu0 0
    %2189 = vmatprep.subr.bf16.mxu0 0
    %2190 = vmatpush1.bf16.msra.mxu0 0
    %2191 = vmatprep.subr.bf16.mxu0 0
    %2192 = vmatpush1.bf16.msra.mxu0 0
    %2193 = vmatprep.mubr.bf16.mxu0 0
    %2194 = vmatmul.mubr.bf16.gmra.mrb[0].mxu0 %v1750
    %v2195 = vpop.f32.mrb[0].mxu0
    %v2196 = vadd.f32 %v1824, %v2195
    %v2197 = vpop.f32.mrb[0].mxu0
    %v2198 = vadd.f32 %v1828, %v2197
    %v2199 = vpop.f32.mrb[0].mxu0
    %v2200 = vadd.f32 %v1824, %v2199
    %v2201 = vpop.f32.mrb[0].mxu0
    %v2202 = vadd.f32 %v1828, %v2201
    %2203 = vdwg.mxu0
    %v2204 = vpack.c.bf16 %v2114, %v2110
    %v2205 = vpack.c.bf16 %v2116, %v2112
    %v2206 = vpack.c.bf16 %v2157, %v2153
    %v2207 = vpack.c.bf16 %v2159, %v2155
    %v2208 = vpack.c.bf16 %v2200, %v2196
    %v2209 = vpack.c.bf16 %v2202, %v2198
    %2210 = vmatprep.subr.bf16.mxu0 0
    %2211 = vmatpush1.bf16.xpose.msra.mxu0 %v2206
    %2212 = vmatprep.subr.bf16.mxu0 0
    %2213 = vmatpush1.bf16.xpose.msra.mxu0 %v2207
    %2214 = vmatprep.subr.bf16.mxu0 0
    %2215 = vmatpush1.bf16.xpose.msra.mxu0 0
    %2216 = vmatprep.subr.bf16.mxu0 0
    %2217 = vmatpush1.bf16.xpose.msra.mxu0 0
    %2218 = vmatprep.subr.bf16.mxu0 0
    %2219 = vmatpush1.bf16.xpose.msra.mxu0 0
    %2220 = vmatprep.subr.bf16.mxu0 0
    %2221 = vmatpush1.bf16.xpose.msra.mxu0 0
    %2222 = vmatprep.subr.bf16.mxu0 0
    %2223 = vmatpush1.bf16.xpose.msra.mxu0 0
    %2224 = vmatprep.subr.bf16.mxu0 0
    %2225 = vmatpush1.bf16.xpose.msra.mxu0 0
    %2226 = vmatprep.subr.bf16.mxu0 0
    %2227 = vmatpush1.bf16.xpose.msra.mxu0 0
    %2228 = vmatprep.subr.bf16.mxu0 0
    %2229 = vmatpush1.bf16.xpose.msra.mxu0 0
    %2230 = vmatprep.subr.bf16.mxu0 0
    %2231 = vmatpush1.bf16.xpose.msra.mxu0 0
    %2232 = vmatprep.subr.bf16.mxu0 0
    %2233 = vmatpush1.bf16.xpose.msra.mxu0 0
    %2234 = vmatprep.subr.bf16.mxu0 0
    %2235 = vmatpush1.bf16.xpose.msra.mxu0 0
    %2236 = vmatprep.subr.bf16.mxu0 0
    %2237 = vmatpush1.bf16.xpose.msra.mxu0 0
    %2238 = vmatprep.subr.bf16.mxu0 0
    %2239 = vmatpush1.bf16.xpose.msra.mxu0 0
    %2240 = vmatprep.subr.bf16.mxu0 0
    %2241 = vmatpush1.bf16.xpose.msra.mxu0 0
    %2242 = vmatprep.mubr.bf16.mxu0 0
    %2243 = vmatmul.mubr.bf16.gmra.mrb[0].mxu0 %v2204
    %v2244 = vpop.f32.mrb[0].mxu0
    %v2245 = vadd.f32 %v188, %v2244
    %v2246 = vpop.f32.mrb[0].mxu0
    %v2247 = vpop.f32.mrb[0].mxu0
    %v2248 = vadd.f32 %v189, %v2247
    %v2249 = vpop.f32.mrb[0].mxu0
    %2250 = vmatprep.mubr.bf16.mxu0 0
    %2251 = vmatmul.mubr.bf16.gmra.mrb[0].mxu0 %v2205
    %v2252 = vpop.f32.mrb[0].mxu0
    %v2253 = vadd.f32 %v190, %v2252
    %v2254 = vpop.f32.mrb[0].mxu0
    %v2255 = vpop.f32.mrb[0].mxu0
    %v2256 = vadd.f32 %v191, %v2255
    %v2257 = vpop.f32.mrb[0].mxu0
    %2258 = vdwg.mxu0
    %v2259 = vsel %vm699, %v2245, -inf
    %2260 = vmax.xlane.f32.xlu0 %v2259
    %v2261 = vpop.xlane.xlu0 %2260
    %v2262 = vsel %vm699, %v2248, -inf
    %2263 = vmax.xlane.f32.xlu0 %v2262
    %v2264 = vpop.xlane.xlu0 %2263
    %v2265 = vsel %vm699, %v2253, -inf
    %2266 = vmax.xlane.f32.xlu0 %v2265
    %v2267 = vpop.xlane.xlu0 %2266
    %v2268 = vsel %vm699, %v2256, -inf
    %2269 = vmax.xlane.f32.xlu0 %v2268
    %v2270 = vpop.xlane.xlu0 %2269
    %v2271 = vsub.f32 %v2245, %v2261
    %v2272 = vsub.f32 %v2248, %v2264
    %v2273 = vsub.f32 %v2253, %v2267
    %v2274 = vsub.f32 %v2256, %v2270
    %v2275 = vmul.f32 %v2271, 1.442695
    %v2276 = vpow.pop %v2275
    %v2277 = vmul.f32 %v2272, 1.442695
    %v2278 = vpow.pop %v2277
    %v2279 = vmul.f32 %v2273, 1.442695
    %v2280 = vpow.pop %v2279
    %v2281 = vmul.f32 %v2274, 1.442695
    %v2282 = vpow.pop %v2281
    %v2283 = vsel %vm699, %v2276, 0.0
    %2284 = vadd.xlane.f32.xlu0 %v2283
    %v2285 = vpop.xlane.xlu0 %2284
    %v2286 = vsel %vm699, %v2278, 0.0
    %2287 = vadd.xlane.f32.xlu0 %v2286
    %v2288 = vpop.xlane.xlu0 %2287
    %v2289 = vsel %vm699, %v2280, 0.0
    %2290 = vadd.xlane.f32.xlu0 %v2289
    %v2291 = vpop.xlane.xlu0 %2290
    %v2292 = vsel %vm699, %v2282, 0.0
    %2293 = vadd.xlane.f32.xlu0 %v2292
    %v2294 = vpop.xlane.xlu0 %2293
    %v2295 = vrcp.pop %v2285
    %v2296 = vrcp.pop %v2288
    %v2297 = vrcp.pop %v2291
    %v2298 = vrcp.pop %v2294
    %v2299 = vmul.f32 %v2276, %v2295
    %v2300 = vmul.f32 %v2278, %v2296
    %v2301 = vmul.f32 %v2280, %v2297
    %v2302 = vmul.f32 %v2282, %v2298
    %v2303 = vpack.c.bf16 %v2300, %v2299
    %v2304 = vpack.c.bf16 %v2302, %v2301
    %v2306 = vsel %vm699, %v2303, 0
    %v2309 = vsel %vm699, %v2304, 0
    %2311 = vmatprep.subr.bf16.mxu0 0
    %2312 = vmatpush1.bf16.msra.mxu0 %v2208
    %2313 = vmatprep.subr.bf16.mxu0 0
    %2314 = vmatpush1.bf16.msra.mxu0 %v2209
    %2315 = vmatprep.subr.bf16.mxu0 0
    %2316 = vmatpush1.bf16.msra.mxu0 0
    %2317 = vmatprep.subr.bf16.mxu0 0
    %2318 = vmatpush1.bf16.msra.mxu0 0
    %2319 = vmatprep.subr.bf16.mxu0 0
    %2320 = vmatpush1.bf16.msra.mxu0 0
    %2321 = vmatprep.subr.bf16.mxu0 0
    %2322 = vmatpush1.bf16.msra.mxu0 0
    %2323 = vmatprep.subr.bf16.mxu0 0
    %2324 = vmatpush1.bf16.msra.mxu0 0
    %2325 = vmatprep.subr.bf16.mxu0 0
    %2326 = vmatpush1.bf16.msra.mxu0 0
    %2327 = vmatprep.subr.bf16.mxu0 0
    %2328 = vmatpush1.bf16.msra.mxu0 0
    %2329 = vmatprep.subr.bf16.mxu0 0
    %2330 = vmatpush1.bf16.msra.mxu0 0
    %2331 = vmatprep.subr.bf16.mxu0 0
    %2332 = vmatpush1.bf16.msra.mxu0 0
    %2333 = vmatprep.subr.bf16.mxu0 0
    %2334 = vmatpush1.bf16.msra.mxu0 0
    %2335 = vmatprep.subr.bf16.mxu0 0
    %2336 = vmatpush1.bf16.msra.mxu0 0
    %2337 = vmatprep.subr.bf16.mxu0 0
    %2338 = vmatpush1.bf16.msra.mxu0 0
    %2339 = vmatprep.subr.bf16.mxu0 0
    %2340 = vmatpush1.bf16.msra.mxu0 0
    %2341 = vmatprep.subr.bf16.mxu0 0
    %2342 = vmatpush1.bf16.msra.mxu0 0
    %2343 = vmatprep.mubr.bf16.mxu0 0
    %2344 = vmatmul.mubr.bf16.gmra.mrb[0].mxu0 %v2306
    %v2345 = vpop.f32.mrb[0].mxu0
    %v2346 = vadd.f32 0.0, %v2345
    %v2347 = vpop.f32.mrb[0].mxu0
    %v2348 = vpop.f32.mrb[0].mxu0
    %v2349 = vadd.f32 0.0, %v2348
    %v2350 = vpop.f32.mrb[0].mxu0
    %2351 = vmatprep.mubr.bf16.mxu0 0
    %2352 = vmatmul.mubr.bf16.gmra.mrb[0].mxu0 %v2309
    %v2353 = vpop.f32.mrb[0].mxu0
    %v2354 = vadd.f32 0.0, %v2353
    %v2355 = vpop.f32.mrb[0].mxu0
    %v2356 = vpop.f32.mrb[0].mxu0
    %v2357 = vadd.f32 0.0, %v2356
    %v2358 = vpop.f32.mrb[0].mxu0
    %2359 = vdwg.mxu0
    %v2360 = vpack.c.bf16 %v2349, %v2346
    %v2361 = vpack.c.bf16 %v2357, %v2354
    %s2362 = scalar_lea.vmem %s4, 384
    %v2363 = vld [vmem:[%s2362] sm:$0xf]
    %v2364 = vld [vmem:[%s2362 + $0x4] sm:$0xf]
    %v2365 = vld [vmem:[%s2362 + $0x8] sm:$0xf]
    %v2366 = vld [vmem:[%s2362 + $0xc] sm:$0xf]
    %v2367 = vld [vmem:[%s2362 + $0x10] sm:$0xf]
    %v2368 = vld [vmem:[%s2362 + $0x14] sm:$0xf]
    %v2369 = vld [vmem:[%s2362 + $0x18] sm:$0xf]
    %v2370 = vld [vmem:[%s2362 + $0x1c] sm:$0xf]
    %v2371 = vld [vmem:[%s2362 + $0x20] sm:$0xf]
    %v2372 = vld [vmem:[%s2362 + $0x24] sm:$0xf]
    %v2373 = vld [vmem:[%s2362 + $0x28] sm:$0xf]
    %v2374 = vld [vmem:[%s2362 + $0x2c] sm:$0xf]
    %v2375 = vld [vmem:[%s2362 + $0x30] sm:$0xf]
    %v2376 = vld [vmem:[%s2362 + $0x34] sm:$0xf]
    %v2377 = vld [vmem:[%s2362 + $0x38] sm:$0xf]
    %v2378 = vld [vmem:[%s2362 + $0x3c] sm:$0xf]
    %v2379 = vld [vmem:[%s2362 + $0x40] sm:$0xf]
    %v2380 = vld [vmem:[%s2362 + $0x44] sm:$0xf]
    %v2381 = vld [vmem:[%s2362 + $0x48] sm:$0xf]
    %v2382 = vld [vmem:[%s2362 + $0x4c] sm:$0xf]
    %v2383 = vld [vmem:[%s2362 + $0x50] sm:$0xf]
    %v2384 = vld [vmem:[%s2362 + $0x54] sm:$0xf]
    %v2385 = vld [vmem:[%s2362 + $0x58] sm:$0xf]
    %v2386 = vld [vmem:[%s2362 + $0x5c] sm:$0xf]
    %v2387 = vld [vmem:[%s2362 + $0x60] sm:$0xf]
    %v2388 = vld [vmem:[%s2362 + $0x64] sm:$0xf]
    %v2389 = vld [vmem:[%s2362 + $0x68] sm:$0xf]
    %v2390 = vld [vmem:[%s2362 + $0x6c] sm:$0xf]
    %v2391 = vld [vmem:[%s2362 + $0x70] sm:$0xf]
    %v2392 = vld [vmem:[%s2362 + $0x74] sm:$0xf]
    %v2393 = vld [vmem:[%s2362 + $0x78] sm:$0xf]
    %v2394 = vld [vmem:[%s2362 + $0x7c] sm:$0xf]
    %v2395 = vld [vmem:[%s1800 + $0x1] ss:$0 sm:$0xff]
    %v2428 = vunpack.c.l.b16 %v2363
    %v2429 = vunpack.c.l.b16 %v2364
    %v2430 = vunpack.c.l.b16 %v2365
    %v2431 = vunpack.c.l.b16 %v2366
    %v2432 = vunpack.c.l.b16 %v2367
    %v2433 = vunpack.c.l.b16 %v2368
    %v2434 = vunpack.c.l.b16 %v2369
    %v2435 = vunpack.c.l.b16 %v2370
    %v2436 = vunpack.c.l.b16 %v2371
    %v2437 = vunpack.c.l.b16 %v2372
    %v2438 = vunpack.c.l.b16 %v2373
    %v2439 = vunpack.c.l.b16 %v2374
    %v2440 = vunpack.c.l.b16 %v2375
    %v2441 = vunpack.c.l.b16 %v2376
    %v2442 = vunpack.c.l.b16 %v2377
    %v2443 = vunpack.c.l.b16 %v2378
    %v2444 = vunpack.c.l.b16 %v2379
    %v2445 = vunpack.c.l.b16 %v2380
    %v2446 = vunpack.c.l.b16 %v2381
    %v2447 = vunpack.c.l.b16 %v2382
    %v2448 = vunpack.c.l.b16 %v2383
    %v2449 = vunpack.c.l.b16 %v2384
    %v2450 = vunpack.c.l.b16 %v2385
    %v2451 = vunpack.c.l.b16 %v2386
    %v2452 = vunpack.c.l.b16 %v2387
    %v2453 = vunpack.c.l.b16 %v2388
    %v2454 = vunpack.c.l.b16 %v2389
    %v2455 = vunpack.c.l.b16 %v2390
    %v2456 = vunpack.c.l.b16 %v2391
    %v2457 = vunpack.c.l.b16 %v2392
    %v2458 = vunpack.c.l.b16 %v2393
    %v2459 = vunpack.c.l.b16 %v2394
    %v2460 = vpack.c.b16 %v2429, %v2428
    %v2461 = vpack.c.b16 %v2431, %v2430
    %v2462 = vpack.c.b16 %v2433, %v2432
    %v2463 = vpack.c.b16 %v2435, %v2434
    %v2464 = vpack.c.b16 %v2437, %v2436
    %v2465 = vpack.c.b16 %v2439, %v2438
    %v2466 = vpack.c.b16 %v2441, %v2440
    %v2467 = vpack.c.b16 %v2443, %v2442
    %v2468 = vpack.c.b16 %v2445, %v2444
    %v2469 = vpack.c.b16 %v2447, %v2446
    %v2470 = vpack.c.b16 %v2449, %v2448
    %v2471 = vpack.c.b16 %v2451, %v2450
    %v2472 = vpack.c.b16 %v2453, %v2452
    %v2473 = vpack.c.b16 %v2455, %v2454
    %v2474 = vpack.c.b16 %v2457, %v2456
    %v2475 = vpack.c.b16 %v2459, %v2458
    %2492 = vmatprep.subr.bf16.mxu0 0
    %2493 = vmatpush1.bf16.msra.mxu0 %v2460
    %2494 = vmatprep.subr.bf16.mxu0 0
    %2495 = vmatpush1.bf16.msra.mxu0 %v2461
    %2496 = vmatprep.subr.bf16.mxu0 0
    %2497 = vmatpush1.bf16.msra.mxu0 %v2462
    %2498 = vmatprep.subr.bf16.mxu0 0
    %2499 = vmatpush1.bf16.msra.mxu0 %v2463
    %2500 = vmatprep.subr.bf16.mxu0 0
    %2501 = vmatpush1.bf16.msra.mxu0 %v2464
    %2502 = vmatprep.subr.bf16.mxu0 0
    %2503 = vmatpush1.bf16.msra.mxu0 %v2465
    %2504 = vmatprep.subr.bf16.mxu0 0
    %2505 = vmatpush1.bf16.msra.mxu0 %v2466
    %2506 = vmatprep.subr.bf16.mxu0 0
    %2507 = vmatpush1.bf16.msra.mxu0 %v2467
    %2508 = vmatprep.subr.bf16.mxu0 0
    %2509 = vmatpush1.bf16.msra.mxu0 %v2468
    %2510 = vmatprep.subr.bf16.mxu0 0
    %2511 = vmatpush1.bf16.msra.mxu0 %v2469
    %2512 = vmatprep.subr.bf16.mxu0 0
    %2513 = vmatpush1.bf16.msra.mxu0 %v2470
    %2514 = vmatprep.subr.bf16.mxu0 0
    %2515 = vmatpush1.bf16.msra.mxu0 %v2471
    %2516 = vmatprep.subr.bf16.mxu0 0
    %2517 = vmatpush1.bf16.msra.mxu0 %v2472
    %2518 = vmatprep.subr.bf16.mxu0 0
    %2519 = vmatpush1.bf16.msra.mxu0 %v2473
    %2520 = vmatprep.subr.bf16.mxu0 0
    %2521 = vmatpush1.bf16.msra.mxu0 %v2474
    %2522 = vmatprep.subr.bf16.mxu0 0
    %2523 = vmatpush1.bf16.msra.mxu0 %v2475
    %2524 = vmatprep.mubr.bf16.mxu0 %v2361
    %2525 = vmatmul.mubr.bf16.gmra.mrb[0].mxu0 %v2360
    %v2526 = vpop.f32.mrb[0].mxu0
    %v2527 = vadd.f32 %v2395, %v2526
    %v2528 = vpop.f32.mrb[0].mxu0
    %v2529 = vpop.f32.mrb[0].mxu0
    %v2530 = vadd.f32 %v2395, %v2529
    %v2531 = vpop.f32.mrb[0].mxu0
    %2532 = vdwg.mxu0
    %v2533 = vadd.f32 %v1748, %v2527
    %v2534 = vadd.f32 %v1749, %v2530
    %v2535 = vld [vmem:[%s1800 + $0x2] ss:$0 sm:$0xff]
    %v2536 = vld [vmem:[%s1800 + $0x3] ss:$0 sm:$0xff]
    %2537 = vadd.xlane.f32.xlu0 %v2533
    %v2538 = vpop.xlane.xlu0 %2537
    %2539 = vadd.xlane.f32.xlu0 %v2534
    %v2540 = vpop.xlane.xlu0 %2539
    %v2541 = vmul.f32 %v2538, %v157
    %v2542 = vmul.f32 %v2540, %v157
    %v2543 = vsub.f32 %v2533, %v2541
    %v2544 = vsub.f32 %v2534, %v2542
    %v2545 = vmul.f32 %v2543, %v2543
    %v2546 = vmul.f32 %v2544, %v2544
    %2547 = vadd.xlane.f32.xlu0 %v2545
    %v2548 = vpop.xlane.xlu0 %2547
    %2549 = vadd.xlane.f32.xlu0 %v2546
    %v2550 = vpop.xlane.xlu0 %2549
    %v2551 = vmul.f32 %v2548, %v157
    %v2552 = vmul.f32 %v2550, %v157
    %v2553 = vadd.f32 %v2551, 1e-12
    %v2554 = vadd.f32 %v2552, 1e-12
    %v2555 = vrsqrt.pop %v2553
    %v2556 = vrsqrt.pop %v2554
    %v2557 = vmul.f32 %v2543, %v2555
    %v2558 = vmul.f32 %v2544, %v2556
    %v2559 = vmul.f32 %v2557, %v2535
    %v2560 = vmul.f32 %v2558, %v2535
    %v2561 = vadd.f32 %v2559, %v2536
    %v2562 = vadd.f32 %v2560, %v2536
    %v2563 = vpack.c.bf16 %v2562, %v2561
    %v2564 = vld [vmem:[%s1751 + $0x18] sm:$0xff]
    %v2565 = vld [vmem:[%s1751 + $0x20] sm:$0xff]
    %v2566 = vld [vmem:[%s1751 + $0x40] sm:$0xff]
    %v2567 = vld [vmem:[%s1751 + $0x48] sm:$0xff]
    %v2568 = vld [vmem:[%s1751 + $0x68] sm:$0xff]
    %v2569 = vld [vmem:[%s1751 + $0x70] sm:$0xff]
    %v2570 = vld [vmem:[%s1751 + $0x90] sm:$0xff]
    %v2571 = vld [vmem:[%s1751 + $0x98] sm:$0xff]
    %v2572 = vld [vmem:[%s1751 + $0xb8] sm:$0xff]
    %v2573 = vld [vmem:[%s1751 + $0xc0] sm:$0xff]
    %v2574 = vld [vmem:[%s1751 + $0xe0] sm:$0xff]
    %v2575 = vld [vmem:[%s1751 + $0xe8] sm:$0xff]
    %v2576 = vld [vmem:[%s1751 + $0x108] sm:$0xff]
    %v2577 = vld [vmem:[%s1751 + $0x110] sm:$0xff]
    %v2578 = vld [vmem:[%s1751 + $0x130] sm:$0xff]
    %v2579 = vld [vmem:[%s1751 + $0x138] sm:$0xff]
    %v2580 = vld [vmem:[%s1751 + $0x158] sm:$0xff]
    %v2581 = vld [vmem:[%s1751 + $0x160] sm:$0xff]
    %v2582 = vld [vmem:[%s1751 + $0x180] sm:$0xff]
    %v2583 = vld [vmem:[%s1751 + $0x188] sm:$0xff]
    %v2584 = vld [vmem:[%s1751 + $0x1a8] sm:$0xff]
    %v2585 = vld [vmem:[%s1751 + $0x1b0] sm:$0xff]
    %v2586 = vld [vmem:[%s1751 + $0x1d0] sm:$0xff]
    %v2587 = vld [vmem:[%s1751 + $0x1d8] sm:$0xff]
    %v2588 = vld [vmem:[%s1751 + $0x1f8] sm:$0xff]
    %v2589 = vld [vmem:[%s1751 + $0x200] sm:$0xff]
    %v2590 = vld [vmem:[%s1751 + $0x220] sm:$0xff]
    %v2591 = vld [vmem:[%s1751 + $0x228] sm:$0xff]
    %v2592 = vld [vmem:[%s1751 + $0x248] sm:$0xff]
    %v2593 = vld [vmem:[%s1751 + $0x250] sm:$0xff]
    %v2594 = vld [vmem:[%s1751 + $0x270] sm:$0xff]
    %v2595 = vld [vmem:[%s1751 + $0x278] sm:$0xff]
    %s2596 = scalar_lea.vmem %s1800, 4
    %v2597 = vld [vmem:[%s2596] ss:$8 sm:$0xf]
    %v2599 = vlaneseq
    %v2600 = vshrl.u32 %v2599, 7
    %v2601 = vsub.s32 0, %v2600
    %v2602 = vrot.slane %v2597, %v2601
    %v2603 = vlaneseq
    %v2604 = vshrl.u32 %v2603, 7
    %v2605 = vsub.s32 1, %v2604
    %v2606 = vrot.slane %v2597, %v2605
    %v2607 = vlaneseq
    %v2608 = vshrl.u32 %v2607, 7
    %v2609 = vsub.s32 2, %v2608
    %v2610 = vrot.slane %v2597, %v2609
    %v2611 = vlaneseq
    %v2612 = vshrl.u32 %v2611, 7
    %v2613 = vsub.s32 3, %v2612
    %v2614 = vrot.slane %v2597, %v2613
    %v2651 = vunpack.c.l.b16 %v2564
    %v2652 = vunpack.c.h.b16 %v2564
    %v2653 = vunpack.c.l.b16 %v2565
    %v2654 = vunpack.c.h.b16 %v2565
    %v2655 = vunpack.c.l.b16 %v2566
    %v2656 = vunpack.c.h.b16 %v2566
    %v2657 = vunpack.c.l.b16 %v2567
    %v2658 = vunpack.c.h.b16 %v2567
    %v2659 = vunpack.c.l.b16 %v2568
    %v2660 = vunpack.c.h.b16 %v2568
    %v2661 = vunpack.c.l.b16 %v2569
    %v2662 = vunpack.c.h.b16 %v2569
    %v2663 = vunpack.c.l.b16 %v2570
    %v2664 = vunpack.c.h.b16 %v2570
    %v2665 = vunpack.c.l.b16 %v2571
    %v2666 = vunpack.c.h.b16 %v2571
    %v2667 = vunpack.c.l.b16 %v2572
    %v2668 = vunpack.c.h.b16 %v2572
    %v2669 = vunpack.c.l.b16 %v2573
    %v2670 = vunpack.c.h.b16 %v2573
    %v2671 = vunpack.c.l.b16 %v2574
    %v2672 = vunpack.c.h.b16 %v2574
    %v2673 = vunpack.c.l.b16 %v2575
    %v2674 = vunpack.c.h.b16 %v2575
    %v2675 = vunpack.c.l.b16 %v2576
    %v2676 = vunpack.c.h.b16 %v2576
    %v2677 = vunpack.c.l.b16 %v2577
    %v2678 = vunpack.c.h.b16 %v2577
    %v2679 = vunpack.c.l.b16 %v2578
    %v2680 = vunpack.c.h.b16 %v2578
    %v2681 = vunpack.c.l.b16 %v2579
    %v2682 = vunpack.c.h.b16 %v2579
    %v2683 = vunpack.c.l.b16 %v2580
    %v2684 = vunpack.c.h.b16 %v2580
    %v2685 = vunpack.c.l.b16 %v2581
    %v2686 = vunpack.c.h.b16 %v2581
    %v2687 = vunpack.c.l.b16 %v2582
    %v2688 = vunpack.c.h.b16 %v2582
    %v2689 = vunpack.c.l.b16 %v2583
    %v2690 = vunpack.c.h.b16 %v2583
    %v2691 = vunpack.c.l.b16 %v2584
    %v2692 = vunpack.c.h.b16 %v2584
    %v2693 = vunpack.c.l.b16 %v2585
    %v2694 = vunpack.c.h.b16 %v2585
    %v2695 = vunpack.c.l.b16 %v2586
    %v2696 = vunpack.c.h.b16 %v2586
    %v2697 = vunpack.c.l.b16 %v2587
    %v2698 = vunpack.c.h.b16 %v2587
    %v2699 = vunpack.c.l.b16 %v2588
    %v2700 = vunpack.c.h.b16 %v2588
    %v2701 = vunpack.c.l.b16 %v2589
    %v2702 = vunpack.c.h.b16 %v2589
    %v2703 = vunpack.c.l.b16 %v2590
    %v2704 = vunpack.c.h.b16 %v2590
    %v2705 = vunpack.c.l.b16 %v2591
    %v2706 = vunpack.c.h.b16 %v2591
    %v2707 = vunpack.c.l.b16 %v2592
    %v2708 = vunpack.c.h.b16 %v2592
    %v2709 = vunpack.c.l.b16 %v2593
    %v2710 = vunpack.c.h.b16 %v2593
    %v2711 = vunpack.c.l.b16 %v2594
    %v2712 = vunpack.c.h.b16 %v2594
    %v2713 = vunpack.c.l.b16 %v2595
    %v2714 = vunpack.c.h.b16 %v2595
    %v2715 = vpack.c.b16 %v2655, %v2651
    %v2716 = vpack.c.b16 %v2656, %v2652
    %v2717 = vpack.c.b16 %v2657, %v2653
    %v2718 = vpack.c.b16 %v2658, %v2654
    %v2719 = vpack.c.b16 %v2663, %v2659
    %v2720 = vpack.c.b16 %v2664, %v2660
    %v2721 = vpack.c.b16 %v2665, %v2661
    %v2722 = vpack.c.b16 %v2666, %v2662
    %v2723 = vpack.c.b16 %v2671, %v2667
    %v2724 = vpack.c.b16 %v2672, %v2668
    %v2725 = vpack.c.b16 %v2673, %v2669
    %v2726 = vpack.c.b16 %v2674, %v2670
    %v2727 = vpack.c.b16 %v2679, %v2675
    %v2728 = vpack.c.b16 %v2680, %v2676
    %v2729 = vpack.c.b16 %v2681, %v2677
    %v2730 = vpack.c.b16 %v2682, %v2678
    %v2731 = vpack.c.b16 %v2687, %v2683
    %v2732 = vpack.c.b16 %v2688, %v2684
    %v2733 = vpack.c.b16 %v2689, %v2685
    %v2734 = vpack.c.b16 %v2690, %v2686
    %v2735 = vpack.c.b16 %v2695, %v2691
    %v2736 = vpack.c.b16 %v2696, %v2692
    %v2737 = vpack.c.b16 %v2697, %v2693
    %v2738 = vpack.c.b16 %v2698, %v2694
    %v2739 = vpack.c.b16 %v2703, %v2699
    %v2740 = vpack.c.b16 %v2704, %v2700
    %v2741 = vpack.c.b16 %v2705, %v2701
    %v2742 = vpack.c.b16 %v2706, %v2702
    %v2743 = vpack.c.b16 %v2711, %v2707
    %v2744 = vpack.c.b16 %v2712, %v2708
    %v2745 = vpack.c.b16 %v2713, %v2709
    %v2746 = vpack.c.b16 %v2714, %v2710
    %2779 = vmatprep.subr.bf16.mxu0 %v2716
    %2780 = vmatpush1.bf16.msra.mxu0 %v2715
    %2781 = vmatprep.subr.bf16.mxu0 %v2720
    %2782 = vmatpush1.bf16.msra.mxu0 %v2719
    %2783 = vmatprep.subr.bf16.mxu0 %v2724
    %2784 = vmatpush1.bf16.msra.mxu0 %v2723
    %2785 = vmatprep.subr.bf16.mxu0 %v2728
    %2786 = vmatpush1.bf16.msra.mxu0 %v2727
    %2787 = vmatprep.subr.bf16.mxu0 %v2732
    %2788 = vmatpush1.bf16.msra.mxu0 %v2731
    %2789 = vmatprep.subr.bf16.mxu0 %v2736
    %2790 = vmatpush1.bf16.msra.mxu0 %v2735
    %2791 = vmatprep.subr.bf16.mxu0 %v2740
    %2792 = vmatpush1.bf16.msra.mxu0 %v2739
    %2793 = vmatprep.subr.bf16.mxu0 %v2744
    %2794 = vmatpush1.bf16.msra.mxu0 %v2743
    %2795 = vmatprep.subr.bf16.mxu0 0
    %2796 = vmatpush1.bf16.msra.mxu0 0
    %2797 = vmatprep.subr.bf16.mxu0 0
    %2798 = vmatpush1.bf16.msra.mxu0 0
    %2799 = vmatprep.subr.bf16.mxu0 0
    %2800 = vmatpush1.bf16.msra.mxu0 0
    %2801 = vmatprep.subr.bf16.mxu0 0
    %2802 = vmatpush1.bf16.msra.mxu0 0
    %2803 = vmatprep.subr.bf16.mxu0 0
    %2804 = vmatpush1.bf16.msra.mxu0 0
    %2805 = vmatprep.subr.bf16.mxu0 0
    %2806 = vmatpush1.bf16.msra.mxu0 0
    %2807 = vmatprep.subr.bf16.mxu0 0
    %2808 = vmatpush1.bf16.msra.mxu0 0
    %2809 = vmatprep.subr.bf16.mxu0 0
    %2810 = vmatpush1.bf16.msra.mxu0 0
    %2811 = vmatprep.mubr.bf16.mxu0 0
    %2812 = vmatmul.mubr.bf16.gmra.mrb[0].mxu0 %v2563
    %v2813 = vpop.f32.mrb[0].mxu0
    %v2814 = vadd.f32 %v2602, %v2813
    %v2815 = vpop.f32.mrb[0].mxu0
    %v2816 = vadd.f32 %v2606, %v2815
    %v2817 = vpop.f32.mrb[0].mxu0
    %v2818 = vadd.f32 %v2602, %v2817
    %v2819 = vpop.f32.mrb[0].mxu0
    %v2820 = vadd.f32 %v2606, %v2819
    %2821 = vdwg.mxu0
    %2822 = vmatprep.subr.bf16.mxu0 %v2718
    %2823 = vmatpush1.bf16.msra.mxu0 %v2717
    %2824 = vmatprep.subr.bf16.mxu0 %v2722
    %2825 = vmatpush1.bf16.msra.mxu0 %v2721
    %2826 = vmatprep.subr.bf16.mxu0 %v2726
    %2827 = vmatpush1.bf16.msra.mxu0 %v2725
    %2828 = vmatprep.subr.bf16.mxu0 %v2730
    %2829 = vmatpush1.bf16.msra.mxu0 %v2729
    %2830 = vmatprep.subr.bf16.mxu0 %v2734
    %2831 = vmatpush1.bf16.msra.mxu0 %v2733
    %2832 = vmatprep.subr.bf16.mxu0 %v2738
    %2833 = vmatpush1.bf16.msra.mxu0 %v2737
    %2834 = vmatprep.subr.bf16.mxu0 %v2742
    %2835 = vmatpush1.bf16.msra.mxu0 %v2741
    %2836 = vmatprep.subr.bf16.mxu0 %v2746
    %2837 = vmatpush1.bf16.msra.mxu0 %v2745
    %2838 = vmatprep.subr.bf16.mxu0 0
    %2839 = vmatpush1.bf16.msra.mxu0 0
    %2840 = vmatprep.subr.bf16.mxu0 0
    %2841 = vmatpush1.bf16.msra.mxu0 0
    %2842 = vmatprep.subr.bf16.mxu0 0
    %2843 = vmatpush1.bf16.msra.mxu0 0
    %2844 = vmatprep.subr.bf16.mxu0 0
    %2845 = vmatpush1.bf16.msra.mxu0 0
    %2846 = vmatprep.subr.bf16.mxu0 0
    %2847 = vmatpush1.bf16.msra.mxu0 0
    %2848 = vmatprep.subr.bf16.mxu0 0
    %2849 = vmatpush1.bf16.msra.mxu0 0
    %2850 = vmatprep.subr.bf16.mxu0 0
    %2851 = vmatpush1.bf16.msra.mxu0 0
    %2852 = vmatprep.subr.bf16.mxu0 0
    %2853 = vmatpush1.bf16.msra.mxu0 0
    %2854 = vmatprep.mubr.bf16.mxu0 0
    %2855 = vmatmul.mubr.bf16.gmra.mrb[0].mxu0 %v2563
    %v2856 = vpop.f32.mrb[0].mxu0
    %v2857 = vadd.f32 %v2610, %v2856
    %v2858 = vpop.f32.mrb[0].mxu0
    %v2859 = vadd.f32 %v2614, %v2858
    %v2860 = vpop.f32.mrb[0].mxu0
    %v2861 = vadd.f32 %v2610, %v2860
    %v2862 = vpop.f32.mrb[0].mxu0
    %v2863 = vadd.f32 %v2614, %v2862
    %2864 = vdwg.mxu0
    %v2865 = vmul.f32 %v2814, 0.5
    %v2866 = vmul.f32 %v2816, 0.5
    %v2867 = vmul.f32 %v2857, 0.5
    %v2868 = vmul.f32 %v2859, 0.5
    %v2869 = vmul.f32 %v2818, 0.5
    %v2870 = vmul.f32 %v2820, 0.5
    %v2871 = vmul.f32 %v2861, 0.5
    %v2872 = vmul.f32 %v2863, 0.5
    %v2873 = vmul.f32 %v2814, 0.044715
    %v2874 = vmul.f32 %v2816, 0.044715
    %v2875 = vmul.f32 %v2857, 0.044715
    %v2876 = vmul.f32 %v2859, 0.044715
    %v2877 = vmul.f32 %v2818, 0.044715
    %v2878 = vmul.f32 %v2820, 0.044715
    %v2879 = vmul.f32 %v2861, 0.044715
    %v2880 = vmul.f32 %v2863, 0.044715
    %v2881 = vmul.f32 %v2873, %v2814
    %v2882 = vmul.f32 %v2874, %v2816
    %v2883 = vmul.f32 %v2875, %v2857
    %v2884 = vmul.f32 %v2876, %v2859
    %v2885 = vmul.f32 %v2877, %v2818
    %v2886 = vmul.f32 %v2878, %v2820
    %v2887 = vmul.f32 %v2879, %v2861
    %v2888 = vmul.f32 %v2880, %v2863
    %v2889 = vmul.f32 %v2881, %v2814
    %v2890 = vmul.f32 %v2882, %v2816
    %v2891 = vmul.f32 %v2883, %v2857
    %v2892 = vmul.f32 %v2884, %v2859
    %v2893 = vmul.f32 %v2885, %v2818
    %v2894 = vmul.f32 %v2886, %v2820
    %v2895 = vmul.f32 %v2887, %v2861
    %v2896 = vmul.f32 %v2888, %v2863
    %v2897 = vadd.f32 %v2814, %v2889
    %v2898 = vadd.f32 %v2816, %v2890
    %v2899 = vadd.f32 %v2857, %v2891
    %v2900 = vadd.f32 %v2859, %v2892
    %v2901 = vadd.f32 %v2818, %v2893
    %v2902 = vadd.f32 %v2820, %v2894
    %v2903 = vadd.f32 %v2861, %v2895
    %v2904 = vadd.f32 %v2863, %v2896
    %v2905 = vmul.f32 %v2897, 0.7978846
    %v2906 = vmul.f32 %v2898, 0.7978846
    %v2907 = vmul.f32 %v2899, 0.7978846
    %v2908 = vmul.f32 %v2900, 0.7978846
    %v2909 = vmul.f32 %v2901, 0.7978846
    %v2910 = vmul.f32 %v2902, 0.7978846
    %v2911 = vmul.f32 %v2903, 0.7978846
    %v2912 = vmul.f32 %v2904, 0.7978846
    %v2913 = vtanh.pop %v2905
    %v2914 = vtanh.pop %v2906
    %v2915 = vtanh.pop %v2907
    %v2916 = vtanh.pop %v2908
    %v2917 = vtanh.pop %v2909
    %v2918 = vtanh.pop %v2910
    %v2919 = vtanh.pop %v2911
    %v2920 = vtanh.pop %v2912
    %v2921 = vadd.f32 %v2913, 1.0
    %v2922 = vadd.f32 %v2914, 1.0
    %v2923 = vadd.f32 %v2915, 1.0
    %v2924 = vadd.f32 %v2916, 1.0
    %v2925 = vadd.f32 %v2917, 1.0
    %v2926 = vadd.f32 %v2918, 1.0
    %v2927 = vadd.f32 %v2919, 1.0
    %v2928 = vadd.f32 %v2920, 1.0
    %v2929 = vmul.f32 %v2865, %v2921
    %v2930 = vmul.f32 %v2866, %v2922
    %v2931 = vmul.f32 %v2867, %v2923
    %v2932 = vmul.f32 %v2868, %v2924
    %v2933 = vmul.f32 %v2869, %v2925
    %v2934 = vmul.f32 %v2870, %v2926
    %v2935 = vmul.f32 %v2871, %v2927
    %v2936 = vmul.f32 %v2872, %v2928
    %v2937 = vpack.c.bf16 %v2933, %v2929
    %v2938 = vpack.c.bf16 %v2934, %v2930
    %v2939 = vpack.c.bf16 %v2935, %v2931
    %v2940 = vpack.c.bf16 %v2936, %v2932
    %v2941 = vld [vmem:[%s2362 + $0x80] sm:$0xf]
    %v2942 = vld [vmem:[%s2362 + $0x84] sm:$0xf]
    %v2943 = vld [vmem:[%s2362 + $0x88] sm:$0xf]
    %v2944 = vld [vmem:[%s2362 + $0x8c] sm:$0xf]
    %v2945 = vld [vmem:[%s2362 + $0x90] sm:$0xf]
    %v2946 = vld [vmem:[%s2362 + $0x94] sm:$0xf]
    %v2947 = vld [vmem:[%s2362 + $0x98] sm:$0xf]
    %v2948 = vld [vmem:[%s2362 + $0x9c] sm:$0xf]
    %v2949 = vld [vmem:[%s2362 + $0xa0] sm:$0xf]
    %v2950 = vld [vmem:[%s2362 + $0xa4] sm:$0xf]
    %v2951 = vld [vmem:[%s2362 + $0xa8] sm:$0xf]
    %v2952 = vld [vmem:[%s2362 + $0xac] sm:$0xf]
    %v2953 = vld [vmem:[%s2362 + $0xb0] sm:$0xf]
    %v2954 = vld [vmem:[%s2362 + $0xb4] sm:$0xf]
    %v2955 = vld [vmem:[%s2362 + $0xb8] sm:$0xf]
    %v2956 = vld [vmem:[%s2362 + $0xbc] sm:$0xf]
    %v2957 = vld [vmem:[%s2362 + $0xc0] sm:$0xf]
    %v2958 = vld [vmem:[%s2362 + $0xc4] sm:$0xf]
    %v2959 = vld [vmem:[%s2362 + $0xc8] sm:$0xf]
    %v2960 = vld [vmem:[%s2362 + $0xcc] sm:$0xf]
    %v2961 = vld [vmem:[%s2362 + $0xd0] sm:$0xf]
    %v2962 = vld [vmem:[%s2362 + $0xd4] sm:$0xf]
    %v2963 = vld [vmem:[%s2362 + $0xd8] sm:$0xf]
    %v2964 = vld [vmem:[%s2362 + $0xdc] sm:$0xf]
    %v2965 = vld [vmem:[%s2362 + $0xe0] sm:$0xf]
    %v2966 = vld [vmem:[%s2362 + $0xe4] sm:$0xf]
    %v2967 = vld [vmem:[%s2362 + $0xe8] sm:$0xf]
    %v2968 = vld [vmem:[%s2362 + $0xec] sm:$0xf]
    %v2969 = vld [vmem:[%s2362 + $0xf0] sm:$0xf]
    %v2970 = vld [vmem:[%s2362 + $0xf4] sm:$0xf]
    %v2971 = vld [vmem:[%s2362 + $0xf8] sm:$0xf]
    %v2972 = vld [vmem:[%s2362 + $0xfc] sm:$0xf]
    %v2973 = vld [vmem:[%s2362 + $0x100] sm:$0xf]
    %v2974 = vld [vmem:[%s2362 + $0x104] sm:$0xf]
    %v2975 = vld [vmem:[%s2362 + $0x108] sm:$0xf]
    %v2976 = vld [vmem:[%s2362 + $0x10c] sm:$0xf]
    %v2977 = vld [vmem:[%s2362 + $0x110] sm:$0xf]
    %v2978 = vld [vmem:[%s2362 + $0x114] sm:$0xf]
    %v2979 = vld [vmem:[%s2362 + $0x118] sm:$0xf]
    %v2980 = vld [vmem:[%s2362 + $0x11c] sm:$0xf]
    %v2981 = vld [vmem:[%s2362 + $0x120] sm:$0xf]
    %v2982 = vld [vmem:[%s2362 + $0x124] sm:$0xf]
    %v2983 = vld [vmem:[%s2362 + $0x128] sm:$0xf]
    %v2984 = vld [vmem:[%s2362 + $0x12c] sm:$0xf]
    %v2985 = vld [vmem:[%s2362 + $0x130] sm:$0xf]
    %v2986 = vld [vmem:[%s2362 + $0x134] sm:$0xf]
    %v2987 = vld [vmem:[%s2362 + $0x138] sm:$0xf]
    %v2988 = vld [vmem:[%s2362 + $0x13c] sm:$0xf]
    %v2989 = vld [vmem:[%s2362 + $0x140] sm:$0xf]
    %v2990 = vld [vmem:[%s2362 + $0x144] sm:$0xf]
    %v2991 = vld [vmem:[%s2362 + $0x148] sm:$0xf]
    %v2992 = vld [vmem:[%s2362 + $0x14c] sm:$0xf]
    %v2993 = vld [vmem:[%s2362 + $0x150] sm:$0xf]
    %v2994 = vld [vmem:[%s2362 + $0x154] sm:$0xf]
    %v2995 = vld [vmem:[%s2362 + $0x158] sm:$0xf]
    %v2996 = vld [vmem:[%s2362 + $0x15c] sm:$0xf]
    %v2997 = vld [vmem:[%s2362 + $0x160] sm:$0xf]
    %v2998 = vld [vmem:[%s2362 + $0x164] sm:$0xf]
    %v2999 = vld [vmem:[%s2362 + $0x168] sm:$0xf]
    %v3000 = vld [vmem:[%s2362 + $0x16c] sm:$0xf]
    %v3001 = vld [vmem:[%s2362 + $0x170] sm:$0xf]
    %v3002 = vld [vmem:[%s2362 + $0x174] sm:$0xf]
    %v3003 = vld [vmem:[%s2362 + $0x178] sm:$0xf]
    %v3004 = vld [vmem:[%s2362 + $0x17c] sm:$0xf]
    %v3005 = vld [vmem:[%s1800 + $0x5] ss:$0 sm:$0xff]
    %v3070 = vunpack.c.l.b16 %v2941
    %v3071 = vunpack.c.l.b16 %v2942
    %v3072 = vunpack.c.l.b16 %v2943
    %v3073 = vunpack.c.l.b16 %v2944
    %v3074 = vunpack.c.l.b16 %v2945
    %v3075 = vunpack.c.l.b16 %v2946
    %v3076 = vunpack.c.l.b16 %v2947
    %v3077 = vunpack.c.l.b16 %v2948
    %v3078 = vunpack.c.l.b16 %v2949
    %v3079 = vunpack.c.l.b16 %v2950
    %v3080 = vunpack.c.l.b16 %v2951
    %v3081 = vunpack.c.l.b16 %v2952
    %v3082 = vunpack.c.l.b16 %v2953
    %v3083 = vunpack.c.l.b16 %v2954
    %v3084 = vunpack.c.l.b16 %v2955
    %v3085 = vunpack.c.l.b16 %v2956
    %v3086 = vunpack.c.l.b16 %v2957
    %v3087 = vunpack.c.l.b16 %v2958
    %v3088 = vunpack.c.l.b16 %v2959
    %v3089 = vunpack.c.l.b16 %v2960
    %v3090 = vunpack.c.l.b16 %v2961
    %v3091 = vunpack.c.l.b16 %v2962
    %v3092 = vunpack.c.l.b16 %v2963
    %v3093 = vunpack.c.l.b16 %v2964
    %v3094 = vunpack.c.l.b16 %v2965
    %v3095 = vunpack.c.l.b16 %v2966
    %v3096 = vunpack.c.l.b16 %v2967
    %v3097 = vunpack.c.l.b16 %v2968
    %v3098 = vunpack.c.l.b16 %v2969
    %v3099 = vunpack.c.l.b16 %v2970
    %v3100 = vunpack.c.l.b16 %v2971
    %v3101 = vunpack.c.l.b16 %v2972
    %v3102 = vunpack.c.l.b16 %v2973
    %v3103 = vunpack.c.l.b16 %v2974
    %v3104 = vunpack.c.l.b16 %v2975
    %v3105 = vunpack.c.l.b16 %v2976
    %v3106 = vunpack.c.l.b16 %v2977
    %v3107 = vunpack.c.l.b16 %v2978
    %v3108 = vunpack.c.l.b16 %v2979
    %v3109 = vunpack.c.l.b16 %v2980
    %v3110 = vunpack.c.l.b16 %v2981
    %v3111 = vunpack.c.l.b16 %v2982
    %v3112 = vunpack.c.l.b16 %v2983
    %v3113 = vunpack.c.l.b16 %v2984
    %v3114 = vunpack.c.l.b16 %v2985
    %v3115 = vunpack.c.l.b16 %v2986
    %v3116 = vunpack.c.l.b16 %v2987
    %v3117 = vunpack.c.l.b16 %v2988
    %v3118 = vunpack.c.l.b16 %v2989
    %v3119 = vunpack.c.l.b16 %v2990
    %v3120 = vunpack.c.l.b16 %v2991
    %v3121 = vunpack.c.l.b16 %v2992
    %v3122 = vunpack.c.l.b16 %v2993
    %v3123 = vunpack.c.l.b16 %v2994
    %v3124 = vunpack.c.l.b16 %v2995
    %v3125 = vunpack.c.l.b16 %v2996
    %v3126 = vunpack.c.l.b16 %v2997
    %v3127 = vunpack.c.l.b16 %v2998
    %v3128 = vunpack.c.l.b16 %v2999
    %v3129 = vunpack.c.l.b16 %v3000
    %v3130 = vunpack.c.l.b16 %v3001
    %v3131 = vunpack.c.l.b16 %v3002
    %v3132 = vunpack.c.l.b16 %v3003
    %v3133 = vunpack.c.l.b16 %v3004
    %v3134 = vpack.c.b16 %v3071, %v3070
    %v3135 = vpack.c.b16 %v3073, %v3072
    %v3136 = vpack.c.b16 %v3075, %v3074
    %v3137 = vpack.c.b16 %v3077, %v3076
    %v3138 = vpack.c.b16 %v3079, %v3078
    %v3139 = vpack.c.b16 %v3081, %v3080
    %v3140 = vpack.c.b16 %v3083, %v3082
    %v3141 = vpack.c.b16 %v3085, %v3084
    %v3142 = vpack.c.b16 %v3087, %v3086
    %v3143 = vpack.c.b16 %v3089, %v3088
    %v3144 = vpack.c.b16 %v3091, %v3090
    %v3145 = vpack.c.b16 %v3093, %v3092
    %v3146 = vpack.c.b16 %v3095, %v3094
    %v3147 = vpack.c.b16 %v3097, %v3096
    %v3148 = vpack.c.b16 %v3099, %v3098
    %v3149 = vpack.c.b16 %v3101, %v3100
    %v3150 = vpack.c.b16 %v3103, %v3102
    %v3151 = vpack.c.b16 %v3105, %v3104
    %v3152 = vpack.c.b16 %v3107, %v3106
    %v3153 = vpack.c.b16 %v3109, %v3108
    %v3154 = vpack.c.b16 %v3111, %v3110
    %v3155 = vpack.c.b16 %v3113, %v3112
    %v3156 = vpack.c.b16 %v3115, %v3114
    %v3157 = vpack.c.b16 %v3117, %v3116
    %v3158 = vpack.c.b16 %v3119, %v3118
    %v3159 = vpack.c.b16 %v3121, %v3120
    %v3160 = vpack.c.b16 %v3123, %v3122
    %v3161 = vpack.c.b16 %v3125, %v3124
    %v3162 = vpack.c.b16 %v3127, %v3126
    %v3163 = vpack.c.b16 %v3129, %v3128
    %v3164 = vpack.c.b16 %v3131, %v3130
    %v3165 = vpack.c.b16 %v3133, %v3132
    %3198 = vmatprep.subr.bf16.mxu0 0
    %3199 = vmatpush1.bf16.msra.mxu0 %v3134
    %3200 = vmatprep.subr.bf16.mxu0 0
    %3201 = vmatpush1.bf16.msra.mxu0 %v3135
    %3202 = vmatprep.subr.bf16.mxu0 0
    %3203 = vmatpush1.bf16.msra.mxu0 %v3136
    %3204 = vmatprep.subr.bf16.mxu0 0
    %3205 = vmatpush1.bf16.msra.mxu0 %v3137
    %3206 = vmatprep.subr.bf16.mxu0 0
    %3207 = vmatpush1.bf16.msra.mxu0 %v3138
    %3208 = vmatprep.subr.bf16.mxu0 0
    %3209 = vmatpush1.bf16.msra.mxu0 %v3139
    %3210 = vmatprep.subr.bf16.mxu0 0
    %3211 = vmatpush1.bf16.msra.mxu0 %v3140
    %3212 = vmatprep.subr.bf16.mxu0 0
    %3213 = vmatpush1.bf16.msra.mxu0 %v3141
    %3214 = vmatprep.subr.bf16.mxu0 0
    %3215 = vmatpush1.bf16.msra.mxu0 %v3142
    %3216 = vmatprep.subr.bf16.mxu0 0
    %3217 = vmatpush1.bf16.msra.mxu0 %v3143
    %3218 = vmatprep.subr.bf16.mxu0 0
    %3219 = vmatpush1.bf16.msra.mxu0 %v3144
    %3220 = vmatprep.subr.bf16.mxu0 0
    %3221 = vmatpush1.bf16.msra.mxu0 %v3145
    %3222 = vmatprep.subr.bf16.mxu0 0
    %3223 = vmatpush1.bf16.msra.mxu0 %v3146
    %3224 = vmatprep.subr.bf16.mxu0 0
    %3225 = vmatpush1.bf16.msra.mxu0 %v3147
    %3226 = vmatprep.subr.bf16.mxu0 0
    %3227 = vmatpush1.bf16.msra.mxu0 %v3148
    %3228 = vmatprep.subr.bf16.mxu0 0
    %3229 = vmatpush1.bf16.msra.mxu0 %v3149
    %3230 = vmatprep.mubr.bf16.mxu0 %v2938
    %3231 = vmatmul.mubr.bf16.gmra.mrb[0].mxu0 %v2937
    %v3232 = vpop.f32.mrb[0].mxu0
    %v3233 = vadd.f32 %v3005, %v3232
    %v3234 = vpop.f32.mrb[0].mxu0
    %v3235 = vpop.f32.mrb[0].mxu0
    %v3236 = vadd.f32 %v3005, %v3235
    %v3237 = vpop.f32.mrb[0].mxu0
    %3238 = vdwg.mxu0
    %3239 = vmatprep.subr.bf16.mxu0 0
    %3240 = vmatpush1.bf16.msra.mxu0 %v3150
    %3241 = vmatprep.subr.bf16.mxu0 0
    %3242 = vmatpush1.bf16.msra.mxu0 %v3151
    %3243 = vmatprep.subr.bf16.mxu0 0
    %3244 = vmatpush1.bf16.msra.mxu0 %v3152
    %3245 = vmatprep.subr.bf16.mxu0 0
    %3246 = vmatpush1.bf16.msra.mxu0 %v3153
    %3247 = vmatprep.subr.bf16.mxu0 0
    %3248 = vmatpush1.bf16.msra.mxu0 %v3154
    %3249 = vmatprep.subr.bf16.mxu0 0
    %3250 = vmatpush1.bf16.msra.mxu0 %v3155
    %3251 = vmatprep.subr.bf16.mxu0 0
    %3252 = vmatpush1.bf16.msra.mxu0 %v3156
    %3253 = vmatprep.subr.bf16.mxu0 0
    %3254 = vmatpush1.bf16.msra.mxu0 %v3157
    %3255 = vmatprep.subr.bf16.mxu0 0
    %3256 = vmatpush1.bf16.msra.mxu0 %v3158
    %3257 = vmatprep.subr.bf16.mxu0 0
    %3258 = vmatpush1.bf16.msra.mxu0 %v3159
    %3259 = vmatprep.subr.bf16.mxu0 0
    %3260 = vmatpush1.bf16.msra.mxu0 %v3160
    %3261 = vmatprep.subr.bf16.mxu0 0
    %3262 = vmatpush1.bf16.msra.mxu0 %v3161
    %3263 = vmatprep.subr.bf16.mxu0 0
    %3264 = vmatpush1.bf16.msra.mxu0 %v3162
    %3265 = vmatprep.subr.bf16.mxu0 0
    %3266 = vmatpush1.bf16.msra.mxu0 %v3163
    %3267 = vmatprep.subr.bf16.mxu0 0
    %3268 = vmatpush1.bf16.msra.mxu0 %v3164
    %3269 = vmatprep.subr.bf16.mxu0 0
    %3270 = vmatpush1.bf16.msra.mxu0 %v3165
    %3271 = vmatprep.mubr.bf16.mxu0 %v2940
    %3272 = vmatmul.mubr.bf16.gmra.mrb[0].mxu0 %v2939
    %v3273 = vpop.f32.mrb[0].mxu0
    %v3274 = vadd.f32 %v3233, %v3273
    %v3275 = vpop.f32.mrb[0].mxu0
    %v3276 = vpop.f32.mrb[0].mxu0
    %v3277 = vadd.f32 %v3236, %v3276
    %v3278 = vpop.f32.mrb[0].mxu0
    %3279 = vdwg.mxu0
    %v3280 = vadd.f32 %v2561, %v3274
    %v3281 = vadd.f32 %v2562, %v3277
    %v3282 = vld [vmem:[%s1800 + $0x6] ss:$0 sm:$0xff]
    %v3283 = vld [vmem:[%s1800 + $0x7] ss:$0 sm:$0xff]
    %3284 = vadd.xlane.f32.xlu0 %v3280
    %v3285 = vpop.xlane.xlu0 %3284
    %3286 = vadd.xlane.f32.xlu0 %v3281
    %v3287 = vpop.xlane.xlu0 %3286
    %v3288 = vmul.f32 %v3285, %v157
    %v3289 = vmul.f32 %v3287, %v157
    %v3290 = vsub.f32 %v3280, %v3288
    %v3291 = vsub.f32 %v3281, %v3289
    %v3292 = vmul.f32 %v3290, %v3290
    %v3293 = vmul.f32 %v3291, %v3291
    %3294 = vadd.xlane.f32.xlu0 %v3292
    %v3295 = vpop.xlane.xlu0 %3294
    %3296 = vadd.xlane.f32.xlu0 %v3293
    %v3297 = vpop.xlane.xlu0 %3296
    %v3298 = vmul.f32 %v3295, %v157
    %v3299 = vmul.f32 %v3297, %v157
    %v3300 = vadd.f32 %v3298, 1e-12
    %v3301 = vadd.f32 %v3299, 1e-12
    %v3302 = vrsqrt.pop %v3300
    %v3303 = vrsqrt.pop %v3301
    %v3304 = vmul.f32 %v3290, %v3302
    %v3305 = vmul.f32 %v3291, %v3303
    %v3306 = vmul.f32 %v3304, %v3282
    %v3307 = vmul.f32 %v3305, %v3282
    %v3308 = vadd.f32 %v3306, %v3283
    %v3309 = vadd.f32 %v3307, %v3283
    %v3311 = vrot.slane %v3309, 7
    %vm3313 = vcmask 1040384
    %v3314 = vsel %vm3313, %v3308, %v3311
    %3315 = vst [vmem:[#allocation5] sm:$0x3] %v3314
    // Predicated region
    $region30: #{local_encoder_forward.1} parent=1 // pred_check
      _
    $region31: #{local_encoder_forward.1} parent=1 // pred_check_branch
      %3317 = sbr.rel (0) target = $region33
    $region32: #{local_encoder_forward.1} parent=1 // pred_region
      %s3319 = ssub.s32 32, 32
      %3320 = vsyncadd [#allocation4], %s3319
      %s3322 = sshll.u32 [#allocation5], 4
      %s3323 = int_to_ptr.vmem [resolvable:$true] %s3322
      %3325 = dma.vmem_to_hbm [thread:$0]  %s3323, 32, %s6, [#allocation4]
    $region33: #{local_encoder_forward.1} parent=1 // pred_fallthru
      _
    // Predicated region
    $region34: #{local_encoder_forward.1} parent=1 // pred_check
      _
    $region35: #{local_encoder_forward.1} parent=1 // pred_check_branch
      %3327 = sbr.rel (0) target = $region37
    $region36: #{local_encoder_forward.1} parent=1 // pred_region
      %3328 = dma.done [#allocation4], 32
    $region37: #{local_encoder_forward.1} parent=1 // pred_fallthru
      _
    %3329 = vsyncpa [#allocation3], 1
    %3330 = vsyncpa [#allocation4], 1

</llo_original>
